<compile_context>
chip_gen: v7x
topology: tpu7x:2x2x1
jax: 0.10.0
libtpu: 0.0.40
codegen_flags: <defaults>
</compile_context>

<pallas_src>
import jax
import jax.numpy as jnp
from jax.experimental import pallas as pl
from jax.experimental.pallas import tpu as pltpu

# ---- toy heterogeneous metadata (data.metadata() baked in) -------------------------------------
# node types : 'spot', 'user'
# edge types into 'spot' (only these matter, HAN.forward returns lin(out['spot'])):
#   e1 = ('user', 'to',   'spot')     e2 = ('spot', 'near', 'spot')
N_SPOT, N_USER = 16, 8            # multiples of 8 (sublane aligned, no dst-row padding needed)
F_SPOT, F_USER = 8, 6
HIDDEN, HEADS, OUT = 64, 4, 8
D = HIDDEN // HEADS               # 16 per-head channels
NEG_SLOPE = 0.2                   # HANConv default negative_slope

# TPU lane-dense padded sizes
CP, FP, NP, OUTP = 128, 128, 128, 128
WIDTH = 2 * CP                    # fused spot projection: [ h (128) | per-head dst logits (128, mostly pad) ]

AGG_DTYPE = jnp.bfloat16          # bf16 operands for alpha @ h (f32 accumulation)


def _agg_dot(a, b):
    return jnp.dot(a.astype(AGG_DTYPE), b.astype(AGG_DTYPE), preferred_element_type=jnp.float32)


def _f32_dot(a, b):
    return jnp.dot(a, b, preferred_element_type=jnp.float32)


# ------------------------------------ the fused kernel ------------------------------------------
def han_kernel(xs_ref, xsT_ref, xu_ref, xuT_ref,
               adj1_ref, nb1_ref, adj2_ref, nb2_ref,
               wfs_ref, bfs_ref, wfu_ref, bfu_ref,
               asT1_ref, cs1_ref, asT2_ref, cs2_ref,
               wk_ref, bk_ref, q_ref, wl_ref, bl_ref,
               out_ref):
    # Fused projection: one MXU pass yields h_spot AND the per-head dst attention logits.
    fs = _f32_dot(xs_ref[...], wfs_ref[...]) + bfs_ref[...]           # [NP, WIDTH]
    h_spot = fs[:, :CP]                                               # [NP, CP] (cols >= HIDDEN are 0)
    ad_e1 = fs[:N_SPOT, CP:CP + HEADS]                                # [N_SPOT, H]  spot as dst of e1
    ad_e2 = fs[:N_SPOT, CP + HEADS:CP + 2 * HEADS]                    # [N_SPOT, H]  spot as dst of e2
    h_user = _f32_dot(xu_ref[...], wfu_ref[...]) + bfu_ref[...]       # [NP, CP]

    # Source logits produced directly lane-major ([H, NP]) -> no in-kernel transpose needed.
    as_e1 = _f32_dot(asT1_ref[...], xuT_ref[...]) + cs1_ref[...]      # [H, NP]  user as src of e1
    as_e2 = _f32_dot(asT2_ref[...], xsT_ref[...]) + cs2_ref[...]      # [H, NP]  spot as src of e2

    col = jax.lax.broadcasted_iota(jnp.int32, (1, CP), 1)             # head-block column ids

    def metapath(a_dst, a_srcT, adj, nbias, h_src):
        """One HANConv edge type: per-head masked softmax over src nodes + aggregation, then ReLU."""
        acc = jnp.zeros((N_SPOT, CP), jnp.float32)
        for h in range(HEADS):                                        # unrolled (HEADS=4)
            e = a_dst[:, h:h + 1] + a_srcT[h:h + 1, :]                # [N_SPOT, NP]
            e = jnp.where(e > 0, e, NEG_SLOPE * e)                    # LeakyReLU(0.2)
            e = e + nbias                                             # additive -1e30 mask (precomputed)
            m = jnp.max(e, axis=-1, keepdims=True)
            p = jnp.exp(e - m) * adj                                  # adj = edge multiplicity counts
            denom = jnp.maximum(jnp.sum(p, axis=-1, keepdims=True), 1e-16)
            alpha = p / denom                                         # dst rows w/o edges -> exactly 0
            h_head = jnp.where((col >= h * D) & (col < (h + 1) * D), h_src, 0.0)
            acc = acc + _agg_dot(alpha, h_head)                       # [N_SPOT, CP], bf16 MXU / f32 accum
        return jnp.maximum(acc, 0.0)                                  # F.relu per metapath

    o1 = metapath(ad_e1, as_e1, adj1_ref[...], nb1_ref[...], h_user)  # user -> spot
    o2 = metapath(ad_e2, as_e2, adj2_ref[...], nb2_ref[...], h_spot)  # spot -> spot

    # Semantic (metapath-level) attention: score_m = <q, mean_n tanh(k_lin(out_m))>
    def sem_score(o):
        t = jnp.tanh(_f32_dot(o, wk_ref[...]) + bk_ref[...])          # [N_SPOT, CP]
        return jnp.sum(jnp.mean(t, axis=0, keepdims=True) * q_ref[...],
                       axis=-1, keepdims=True)                        # [1, 1]

    s1, s2 = sem_score(o1), sem_score(o2)
    smax = jnp.maximum(s1, s2)
    w1, w2 = jnp.exp(s1 - smax), jnp.exp(s2 - smax)
    denom = w1 + w2
    o_spot = (w1 / denom) * o1 + (w2 / denom) * o2                    # [N_SPOT, CP]

    # Final Linear (hidden -> out), written lane-dense (OUTP = 128 -> unmasked stores).
    out_ref[...] = _f32_dot(o_spot, wl_ref[...]) + bl_ref[...]


# ------------------------------------ wrapper ----------------------------------------------------
def _fold_att(w, b, att):
    """Fold an [H, D] attention vector into the projection so that a = x @ A + c (no in-kernel reduce)."""
    A = jnp.einsum('fhd,hd->fh', w.reshape(w.shape[0], HEADS, D), att)   # [F, H]
    c = jnp.einsum('hd,hd->h', b.reshape(HEADS, D), att)                 # [H]
    return A, c


def _pad2(a, rows, cols):
    return jnp.zeros((rows, cols), jnp.float32).at[:a.shape[0], :a.shape[1]].set(a)


@jax.jit
def han_forward(x_spot, x_user, edge_index_us, edge_index_ss, params):
    """x_spot [B,N_SPOT,F_SPOT], x_user [B,N_USER,F_USER],
       edge_index_* [B, 2, E] with row0 = src index, row1 = dst ('spot') index."""
    B = x_spot.shape[0]
    w_s, b_s = params['w_spot'], params['b_spot']
    w_u, b_u = params['w_user'], params['b_user']

    # --- parameter fusion + zero padding (pure layout plumbing, traced once) ---
    A_d1, c_d1 = _fold_att(w_s, b_s, params['att_dst_e1'])
    A_d2, c_d2 = _fold_att(w_s, b_s, params['att_dst_e2'])
    A_s1, c_s1 = _fold_att(w_u, b_u, params['att_src_e1'])
    A_s2, c_s2 = _fold_att(w_s, b_s, params['att_src_e2'])

    wf_s = jnp.zeros((FP, WIDTH), jnp.float32)
    wf_s = wf_s.at[:F_SPOT, :HIDDEN].set(w_s)
    wf_s = wf_s.at[:F_SPOT, CP:CP + HEADS].set(A_d1)
    wf_s = wf_s.at[:F_SPOT, CP + HEADS:CP + 2 * HEADS].set(A_d2)
    bf_s = jnp.zeros((1, WIDTH), jnp.float32)
    bf_s = bf_s.at[0, :HIDDEN].set(b_s)
    bf_s = bf_s.at[0, CP:CP + HEADS].set(c_d1)
    bf_s = bf_s.at[0, CP + HEADS:CP + 2 * HEADS].set(c_d2)

    wf_u = jnp.zeros((FP, CP), jnp.float32).at[:F_USER, :HIDDEN].set(w_u)
    bf_u = jnp.zeros((1, CP), jnp.float32).at[0, :HIDDEN].set(b_u)

    asT_1 = jnp.zeros((HEADS, FP), jnp.float32).at[:, :F_USER].set(A_s1.T)
    asT_2 = jnp.zeros((HEADS, FP), jnp.float32).at[:, :F_SPOT].set(A_s2.T)
    cs_1, cs_2 = c_s1.reshape(HEADS, 1), c_s2.reshape(HEADS, 1)

    wk_p = _pad2(params['k_w'], CP, CP)
    bk_p = _pad2(params['k_b'][None, :], 1, CP)
    q_p = _pad2(params['q'][None, :], 1, CP)
    wl_p = _pad2(params['lin_w'], CP, OUTP)
    bl_p = _pad2(params['lin_b'][None, :], 1, OUTP)

    # --- per-graph data: zero-pad to lane-dense shapes, build count-adjacency + mask bias ---
    xs = jnp.zeros((B, NP, FP), jnp.float32).at[:, :N_SPOT, :F_SPOT].set(x_spot)
    xu = jnp.zeros((B, NP, FP), jnp.float32).at[:, :N_USER, :F_USER].set(x_user)
    xsT = jnp.swapaxes(xs, 1, 2)
    xuT = jnp.swapaxes(xu, 1, 2)

    def densify(ei):
        # adj[dst, src] = edge multiplicity  ->  dense masked softmax == PyG per-edge softmax (dups exact)
        cnt = jnp.zeros((N_SPOT, NP), jnp.float32).at[ei[1], ei[0]].add(1.0)
        nbias = jnp.where(cnt > 0, 0.0, -1e30).astype(jnp.float32)
        return cnt, nbias

    adj1, nb1 = jax.vmap(densify)(edge_index_us)
    adj2, nb2 = jax.vmap(densify)(edge_index_ss)

    def batched(rows, cols):
        return pl.BlockSpec((None, rows, cols), lambda b: (b, 0, 0))

    def const(shape):
        zero = (0,) * len(shape)
        return pl.BlockSpec(shape, lambda b, _z=zero: _z)

    out = pl.pallas_call(
        han_kernel,
        out_shape=jax.ShapeDtypeStruct((B, N_SPOT, OUTP), jnp.float32),
        grid=(B,),
        in_specs=[
            batched(NP, FP), batched(FP, NP), batched(NP, FP), batched(FP, NP),
            batched(N_SPOT, NP), batched(N_SPOT, NP),
            batched(N_SPOT, NP), batched(N_SPOT, NP),
            const((FP, WIDTH)), const((1, WIDTH)),
            const((FP, CP)), const((1, CP)),
            const((HEADS, FP)), const((HEADS, 1)),
            const((HEADS, FP)), const((HEADS, 1)),
            const((CP, CP)), const((1, CP)), const((1, CP)),
            const((CP, OUTP)), const((1, OUTP)),
        ],
        out_specs=batched(N_SPOT, OUTP),
        compiler_params=pltpu.CompilerParams(dimension_semantics=("parallel",)),
    )(xs, xsT, xu, xuT, adj1, nb1, adj2, nb2,
      wf_s, bf_s, wf_u, bf_u, asT_1, cs_1, asT_2, cs_2,
      wk_p, bk_p, q_p, wl_p, bl_p)

    return out[:, :, :OUT]


# ------------------------------------ pure-JAX reference -----------------------------------------
def _ref_forward_single(x_spot, x_user, ei_us, ei_ss, params):
    """Direct HANConv(heads=4) + Linear, eval mode. Same bf16 aggregation precision as the kernel."""
    hs = (x_spot @ params['w_spot'] + params['b_spot']).reshape(N_SPOT, HEADS, D)
    hu = (x_user @ params['w_user'] + params['b_user']).reshape(N_USER, HEADS, D)

    def metapath(h_src, h_dst, ei, att_src, att_dst, n_src, n_dst):
        a_src = jnp.einsum('nhd,hd->nh', h_src, att_src)
        a_dst = jnp.einsum('nhd,hd->nh', h_dst, att_dst)
        adj = jnp.zeros((n_dst, n_src), jnp.float32).at[ei[1], ei[0]].add(1.0)
        heads_out = []
        for h in range(HEADS):
            e = a_dst[:, h:h + 1] + a_src[:, h][None, :]
            e = jnp.where(e > 0, e, NEG_SLOPE * e)
            e = jnp.where(adj > 0, e, -1e30)
            p = jnp.exp(e - jnp.max(e, axis=-1, keepdims=True)) * adj
            alpha = p / jnp.maximum(jnp.sum(p, axis=-1, keepdims=True), 1e-16)
            heads_out.append(jnp.dot(alpha.astype(AGG_DTYPE), h_src[:, h, :].astype(AGG_DTYPE),
                                     preferred_element_type=jnp.float32))
        return jax.nn.relu(jnp.concatenate(heads_out, axis=-1))

    o1 = metapath(hu, hs, ei_us, params['att_src_e1'], params['att_dst_e1'], N_USER, N_SPOT)
    o2 = metapath(hs, hs, ei_ss, params['att_src_e2'], params['att_dst_e2'], N_SPOT, N_SPOT)

    def score(o):
        t = jnp.tanh(o @ params['k_w'] + params['k_b'])
        return jnp.sum(jnp.mean(t, axis=0) * params['q'])

    beta = jax.nn.softmax(jnp.stack([score(o1), score(o2)]))
    o = beta[0] * o1 + beta[1] * o2
    return o @ params['lin_w'] + params['lin_b']


# ------------------------------------ init + demo ------------------------------------------------
def init_params(key):
    ks = jax.random.split(key, 13)

    def glorot(k, shape):
        s = (6.0 / (shape[0] + shape[-1])) ** 0.5
        return jax.random.uniform(k, shape, jnp.float32, -s, s)

    return {
        'w_spot': glorot(ks[0], (F_SPOT, HIDDEN)),
        'b_spot': 0.1 * jax.random.normal(ks[1], (HIDDEN,), jnp.float32),
        'w_user': glorot(ks[2], (F_USER, HIDDEN)),
        'b_user': 0.1 * jax.random.normal(ks[3], (HIDDEN,), jnp.float32),
        'att_src_e1': glorot(ks[4], (HEADS, D)),
        'att_dst_e1': glorot(ks[5], (HEADS, D)),
        'att_src_e2': glorot(ks[6], (HEADS, D)),
        'att_dst_e2': glorot(ks[7], (HEADS, D)),
        'k_w': glorot(ks[8], (HIDDEN, HIDDEN)),
        'k_b': 0.1 * jax.random.normal(ks[9], (HIDDEN,), jnp.float32),
        'q': glorot(ks[10], (1, HIDDEN))[0],
        'lin_w': glorot(ks[11], (HIDDEN, OUT)),
        'lin_b': 0.1 * jax.random.normal(ks[12], (OUT,), jnp.float32),
    }


if __name__ == '__main__':
    B, E1, E2 = 4, 20, 28
    key = jax.random.PRNGKey(0)
    k1, k2, k3, k4, k5, k6, kp = jax.random.split(key, 7)

    x_spot = jax.random.normal(k1, (B, N_SPOT, F_SPOT), jnp.float32)
    x_user = jax.random.normal(k2, (B, N_USER, F_USER), jnp.float32)
    # duplicate (src, dst) pairs are allowed and handled exactly via multiplicity counts
    ei_us = jnp.stack([jax.random.randint(k3, (B, E1), 0, N_USER, jnp.int32),
                       jax.random.randint(k4, (B, E1), 0, N_SPOT, jnp.int32)], axis=1)  # [B, 2, E1]
    ei_ss = jnp.stack([jax.random.randint(k5, (B, E2), 0, N_SPOT, jnp.int32),
                       jax.random.randint(k6, (B, E2), 0, N_SPOT, jnp.int32)], axis=1)  # [B, 2, E2]
    params = init_params(kp)

    out = jax.block_until_ready(han_forward(x_spot, x_user, ei_us, ei_ss, params))
    assert out.shape == (B, N_SPOT, OUT)
    assert bool(jnp.all(jnp.isfinite(out)))

    ref = jax.vmap(lambda xs, xu, e1, e2: _ref_forward_single(xs, xu, e1, e2, params))(
        x_spot, x_user, ei_us, ei_ss)
    assert jnp.allclose(out, ref, atol=1e-2, rtol=1e-2), float(jnp.max(jnp.abs(out - ref)))
    print("KERNEL_OK")
</pallas_src>

<mosaic_0001>
module attributes {stable_mosaic.version = 11 : i64} {
  func.func private @main(%arg0: i32) attributes {dimension_semantics = [#tpu.dimension_semantics<core_parallel>], iteration_bounds = array<i64: 2>, tpu.core_type = #tpu.core_type<sc_scalar_subcore>, window_params = []} {
    return
  }
}

module attributes {stable_mosaic.version = 11 : i64} {
  func.func private @main(%arg0: i32) attributes {dimension_semantics = [#tpu.dimension_semantics<core_parallel>], iteration_bounds = array<i64: 2>, tpu.core_type = #tpu.core_type<sc_scalar_subcore>, window_params = []} {
    return
  }
}

module attributes {stable_mosaic.version = 11 : i64} {
  func.func @han_kernel(%arg0: i32, %arg1: memref<1x128x128xf32, #tpu.memory_space<vmem>>, %arg2: memref<1x128x128xf32, #tpu.memory_space<vmem>>, %arg3: memref<1x128x128xf32, #tpu.memory_space<vmem>>, %arg4: memref<1x128x128xf32, #tpu.memory_space<vmem>>, %arg5: memref<1x16x128xf32, #tpu.memory_space<vmem>>, %arg6: memref<1x16x128xf32, #tpu.memory_space<vmem>>, %arg7: memref<1x16x128xf32, #tpu.memory_space<vmem>>, %arg8: memref<1x16x128xf32, #tpu.memory_space<vmem>>, %arg9: memref<128x256xf32, #tpu.memory_space<vmem>>, %arg10: memref<1x256xf32, #tpu.memory_space<vmem>>, %arg11: memref<128x128xf32, #tpu.memory_space<vmem>>, %arg12: memref<1x128xf32, #tpu.memory_space<vmem>>, %arg13: memref<4x128xf32, #tpu.memory_space<vmem>>, %arg14: memref<4x1xf32, #tpu.memory_space<vmem>>, %arg15: memref<4x128xf32, #tpu.memory_space<vmem>>, %arg16: memref<4x1xf32, #tpu.memory_space<vmem>>, %arg17: memref<128x128xf32, #tpu.memory_space<vmem>>, %arg18: memref<1x128xf32, #tpu.memory_space<vmem>>, %arg19: memref<1x128xf32, #tpu.memory_space<vmem>>, %arg20: memref<128x128xf32, #tpu.memory_space<vmem>>, %arg21: memref<1x128xf32, #tpu.memory_space<vmem>>, %arg22: memref<1x16x128xf32, #tpu.memory_space<vmem>>) attributes {dimension_semantics = [#tpu.dimension_semantics<parallel>], iteration_bounds = array<i64: 4>, scalar_prefetch = 0 : i64, scratch_operands = 0 : i64, tpu.core_type = #tpu.core_type<tc>, window_params = [{transform_indices = @transform_0, window_bounds = array<i64: 1, 128, 128>}, {transform_indices = @transform_1, window_bounds = array<i64: 1, 128, 128>}, {transform_indices = @transform_2, window_bounds = array<i64: 1, 128, 128>}, {transform_indices = @transform_3, window_bounds = array<i64: 1, 128, 128>}, {transform_indices = @transform_4, window_bounds = array<i64: 1, 16, 128>}, {transform_indices = @transform_5, window_bounds = array<i64: 1, 16, 128>}, {transform_indices = @transform_6, window_bounds = array<i64: 1, 16, 128>}, {transform_indices = @transform_7, window_bounds = array<i64: 1, 16, 128>}, {pipeline_mode = #tpu.pipeline_mode<synchronous>, transform_indices = @transform_8, window_bounds = array<i64: 128, 256>}, {pipeline_mode = #tpu.pipeline_mode<synchronous>, transform_indices = @transform_9, window_bounds = array<i64: 1, 256>}, {pipeline_mode = #tpu.pipeline_mode<synchronous>, transform_indices = @transform_10, window_bounds = array<i64: 128, 128>}, {pipeline_mode = #tpu.pipeline_mode<synchronous>, transform_indices = @transform_11, window_bounds = array<i64: 1, 128>}, {pipeline_mode = #tpu.pipeline_mode<synchronous>, transform_indices = @transform_12, window_bounds = array<i64: 4, 128>}, {pipeline_mode = #tpu.pipeline_mode<synchronous>, transform_indices = @transform_13, window_bounds = array<i64: 4, 1>}, {pipeline_mode = #tpu.pipeline_mode<synchronous>, transform_indices = @transform_14, window_bounds = array<i64: 4, 128>}, {pipeline_mode = #tpu.pipeline_mode<synchronous>, transform_indices = @transform_15, window_bounds = array<i64: 4, 1>}, {pipeline_mode = #tpu.pipeline_mode<synchronous>, transform_indices = @transform_16, window_bounds = array<i64: 128, 128>}, {pipeline_mode = #tpu.pipeline_mode<synchronous>, transform_indices = @transform_17, window_bounds = array<i64: 1, 128>}, {pipeline_mode = #tpu.pipeline_mode<synchronous>, transform_indices = @transform_18, window_bounds = array<i64: 1, 128>}, {pipeline_mode = #tpu.pipeline_mode<synchronous>, transform_indices = @transform_19, window_bounds = array<i64: 128, 128>}, {pipeline_mode = #tpu.pipeline_mode<synchronous>, transform_indices = @transform_20, window_bounds = array<i64: 1, 128>}, {transform_indices = @transform_21, window_bounds = array<i64: 1, 16, 128>}]} {
    %c0 = arith.constant 0 : index
    %c0_0 = arith.constant 0 : index
    %c0_1 = arith.constant 0 : index
    %0 = vector.load %arg1[%c0, %c0_0, %c0_1] : memref<1x128x128xf32, #tpu.memory_space<vmem>>, vector<1x128x128xf32>
    %1 = vector.shape_cast %0 : vector<1x128x128xf32> to vector<128x128xf32>
    %c0_2 = arith.constant 0 : index
    %c0_3 = arith.constant 0 : index
    %2 = vector.load %arg9[%c0_2, %c0_3] : memref<128x256xf32, #tpu.memory_space<vmem>>, vector<128x256xf32>
    %cst = arith.constant dense<0.000000e+00> : vector<128x256xf32>
    %3 = tpu.matmul %1, %2, %cst {dimension_numbers = #tpu.dot_dimension_numbers<[1], [0], [0], [1], [0, 0, 1, 1], [], []>} : vector<128x128xf32>, vector<128x256xf32>, vector<128x256xf32> -> vector<128x256xf32>
    %c0_4 = arith.constant 0 : index
    %c0_5 = arith.constant 0 : index
    %4 = vector.load %arg10[%c0_4, %c0_5] : memref<1x256xf32, #tpu.memory_space<vmem>>, vector<1x256xf32>
    %5 = vector.broadcast %4 : vector<1x256xf32> to vector<128x256xf32>
    %6 = arith.addf %3, %5 : vector<128x256xf32>
    %7 = vector.extract_strided_slice %6 {offsets = [0, 0], sizes = [128, 128], strides = [1, 1]} : vector<128x256xf32> to vector<128x128xf32>
    %8 = vector.extract_strided_slice %6 {offsets = [0, 128], sizes = [16, 4], strides = [1, 1]} : vector<128x256xf32> to vector<16x4xf32>
    %9 = vector.extract_strided_slice %6 {offsets = [0, 132], sizes = [16, 4], strides = [1, 1]} : vector<128x256xf32> to vector<16x4xf32>
    %c0_6 = arith.constant 0 : index
    %c0_7 = arith.constant 0 : index
    %c0_8 = arith.constant 0 : index
    %10 = vector.load %arg3[%c0_6, %c0_7, %c0_8] : memref<1x128x128xf32, #tpu.memory_space<vmem>>, vector<1x128x128xf32>
    %11 = vector.shape_cast %10 : vector<1x128x128xf32> to vector<128x128xf32>
    %c0_9 = arith.constant 0 : index
    %c0_10 = arith.constant 0 : index
    %12 = vector.load %arg11[%c0_9, %c0_10] : memref<128x128xf32, #tpu.memory_space<vmem>>, vector<128x128xf32>
    %cst_11 = arith.constant dense<0.000000e+00> : vector<128x128xf32>
    %13 = tpu.matmul %11, %12, %cst_11 {dimension_numbers = #tpu.dot_dimension_numbers<[1], [0], [0], [1], [0, 0, 1, 1], [], []>} : vector<128x128xf32>, vector<128x128xf32>, vector<128x128xf32> -> vector<128x128xf32>
    %c0_12 = arith.constant 0 : index
    %c0_13 = arith.constant 0 : index
    %14 = vector.load %arg12[%c0_12, %c0_13] : memref<1x128xf32, #tpu.memory_space<vmem>>, vector<1x128xf32>
    %15 = vector.broadcast %14 : vector<1x128xf32> to vector<128x128xf32>
    %16 = arith.addf %13, %15 : vector<128x128xf32>
    %c0_14 = arith.constant 0 : index
    %c0_15 = arith.constant 0 : index
    %17 = vector.load %arg13[%c0_14, %c0_15] : memref<4x128xf32, #tpu.memory_space<vmem>>, vector<4x128xf32>
    %c0_16 = arith.constant 0 : index
    %c0_17 = arith.constant 0 : index
    %c0_18 = arith.constant 0 : index
    %18 = vector.load %arg4[%c0_16, %c0_17, %c0_18] : memref<1x128x128xf32, #tpu.memory_space<vmem>>, vector<1x128x128xf32>
    %19 = vector.shape_cast %18 : vector<1x128x128xf32> to vector<128x128xf32>
    %cst_19 = arith.constant dense<0.000000e+00> : vector<4x128xf32>
    %20 = tpu.matmul %17, %19, %cst_19 {dimension_numbers = #tpu.dot_dimension_numbers<[1], [0], [0], [1], [0, 0, 1, 1], [], []>} : vector<4x128xf32>, vector<128x128xf32>, vector<4x128xf32> -> vector<4x128xf32>
    %c0_20 = arith.constant 0 : index
    %c0_21 = arith.constant 0 : index
    %21 = vector.load %arg14[%c0_20, %c0_21] : memref<4x1xf32, #tpu.memory_space<vmem>>, vector<4x1xf32>
    %22 = vector.broadcast %21 : vector<4x1xf32> to vector<4x128xf32>
    %23 = arith.addf %20, %22 : vector<4x128xf32>
    %c0_22 = arith.constant 0 : index
    %c0_23 = arith.constant 0 : index
    %24 = vector.load %arg15[%c0_22, %c0_23] : memref<4x128xf32, #tpu.memory_space<vmem>>, vector<4x128xf32>
    %c0_24 = arith.constant 0 : index
    %c0_25 = arith.constant 0 : index
    %c0_26 = arith.constant 0 : index
    %25 = vector.load %arg2[%c0_24, %c0_25, %c0_26] : memref<1x128x128xf32, #tpu.memory_space<vmem>>, vector<1x128x128xf32>
    %26 = vector.shape_cast %25 : vector<1x128x128xf32> to vector<128x128xf32>
    %cst_27 = arith.constant dense<0.000000e+00> : vector<4x128xf32>
    %27 = tpu.matmul %24, %26, %cst_27 {dimension_numbers = #tpu.dot_dimension_numbers<[1], [0], [0], [1], [0, 0, 1, 1], [], []>} : vector<4x128xf32>, vector<128x128xf32>, vector<4x128xf32> -> vector<4x128xf32>
    %c0_28 = arith.constant 0 : index
    %c0_29 = arith.constant 0 : index
    %28 = vector.load %arg16[%c0_28, %c0_29] : memref<4x1xf32, #tpu.memory_space<vmem>>, vector<4x1xf32>
    %29 = vector.broadcast %28 : vector<4x1xf32> to vector<4x128xf32>
    %30 = arith.addf %27, %29 : vector<4x128xf32>
    %31 = tpu.iota {dimensions = array<i32: 1>} : vector<1x128xi32>
    %c0_30 = arith.constant 0 : index
    %c0_31 = arith.constant 0 : index
    %c0_32 = arith.constant 0 : index
    %32 = vector.load %arg5[%c0_30, %c0_31, %c0_32] : memref<1x16x128xf32, #tpu.memory_space<vmem>>, vector<1x16x128xf32>
    %33 = vector.shape_cast %32 : vector<1x16x128xf32> to vector<16x128xf32>
    %c0_33 = arith.constant 0 : index
    %c0_34 = arith.constant 0 : index
    %c0_35 = arith.constant 0 : index
    %34 = vector.load %arg6[%c0_33, %c0_34, %c0_35] : memref<1x16x128xf32, #tpu.memory_space<vmem>>, vector<1x16x128xf32>
    %35 = vector.shape_cast %34 : vector<1x16x128xf32> to vector<16x128xf32>
    %cst_36 = arith.constant 0.000000e+00 : f32
    %36 = vector.broadcast %cst_36 : f32 to vector<16x128xf32>
    %37 = vector.extract_strided_slice %8 {offsets = [0, 0], sizes = [16, 1], strides = [1, 1]} : vector<16x4xf32> to vector<16x1xf32>
    %38 = vector.extract_strided_slice %23 {offsets = [0, 0], sizes = [1, 128], strides = [1, 1]} : vector<4x128xf32> to vector<1x128xf32>
    %39 = vector.broadcast %37 : vector<16x1xf32> to vector<16x128xf32>
    %40 = vector.broadcast %38 : vector<1x128xf32> to vector<16x128xf32>
    %41 = arith.addf %39, %40 : vector<16x128xf32>
    %cst_37 = arith.constant 0.000000e+00 : f32
    %42 = vector.broadcast %cst_37 : f32 to vector<16x128xf32>
    %43 = arith.cmpf ogt, %41, %42 : vector<16x128xf32>
    %cst_38 = arith.constant 2.000000e-01 : f32
    %44 = vector.broadcast %cst_38 : f32 to vector<16x128xf32>
    %45 = arith.mulf %44, %41 : vector<16x128xf32>
    %46 = arith.select %43, %41, %45 : vector<16x128xi1>, vector<16x128xf32>
    %47 = arith.addf %46, %35 : vector<16x128xf32>
    %cst_39 = arith.constant dense<0xFF800000> : vector<16xf32>
    %48 = vector.multi_reduction <maximumf>, %47, %cst_39 [1] : vector<16x128xf32> to vector<16xf32>
    %49 = vector.shape_cast %48 : vector<16xf32> to vector<16x1xf32>
    %50 = vector.broadcast %49 : vector<16x1xf32> to vector<16x128xf32>
    %51 = arith.subf %47, %50 : vector<16x128xf32>
    %52 = math.exp %51 : vector<16x128xf32>
    %53 = arith.mulf %52, %33 : vector<16x128xf32>
    %cst_40 = arith.constant dense<0.000000e+00> : vector<16xf32>
    %54 = vector.multi_reduction <add>, %53, %cst_40 [1] : vector<16x128xf32> to vector<16xf32>
    %55 = vector.shape_cast %54 : vector<16xf32> to vector<16x1xf32>
    %cst_41 = arith.constant 1.000000e-16 : f32
    %56 = vector.broadcast %cst_41 : f32 to vector<16x1xf32>
    %57 = arith.maximumf %55, %56 : vector<16x1xf32>
    %58 = vector.broadcast %57 : vector<16x1xf32> to vector<16x128xf32>
    %59 = arith.divf %53, %58 : vector<16x128xf32>
    %c0_i32 = arith.constant 0 : i32
    %60 = vector.broadcast %c0_i32 : i32 to vector<1x128xi32>
    %61 = arith.cmpi sge, %31, %60 : vector<1x128xi32>
    %c16_i32 = arith.constant 16 : i32
    %62 = vector.broadcast %c16_i32 : i32 to vector<1x128xi32>
    %63 = arith.cmpi slt, %31, %62 : vector<1x128xi32>
    %64 = arith.andi %61, %63 : vector<1x128xi1>
    %cst_42 = arith.constant 0.000000e+00 : f32
    %65 = vector.shape_cast %64 : vector<1x128xi1> to vector<1x128xi1>
    %66 = vector.broadcast %65 : vector<1x128xi1> to vector<128x128xi1>
    %67 = vector.broadcast %cst_42 : f32 to vector<128x128xf32>
    %68 = arith.select %66, %16, %67 : vector<128x128xi1>, vector<128x128xf32>
    %69 = arith.truncf %59 : vector<16x128xf32> to vector<16x128xbf16>
    %70 = arith.truncf %68 : vector<128x128xf32> to vector<128x128xbf16>
    %cst_43 = arith.constant dense<0.000000e+00> : vector<16x128xf32>
    %71 = tpu.matmul %69, %70, %cst_43 {dimension_numbers = #tpu.dot_dimension_numbers<[1], [0], [0], [1], [0, 0, 1, 1], [], []>} : vector<16x128xbf16>, vector<128x128xbf16>, vector<16x128xf32> -> vector<16x128xf32>
    %72 = arith.addf %36, %71 : vector<16x128xf32>
    %73 = vector.extract_strided_slice %8 {offsets = [0, 1], sizes = [16, 1], strides = [1, 1]} : vector<16x4xf32> to vector<16x1xf32>
    %74 = vector.extract_strided_slice %23 {offsets = [1, 0], sizes = [1, 128], strides = [1, 1]} : vector<4x128xf32> to vector<1x128xf32>
    %75 = vector.broadcast %73 : vector<16x1xf32> to vector<16x128xf32>
    %76 = vector.broadcast %74 : vector<1x128xf32> to vector<16x128xf32>
    %77 = arith.addf %75, %76 : vector<16x128xf32>
    %cst_44 = arith.constant 0.000000e+00 : f32
    %78 = vector.broadcast %cst_44 : f32 to vector<16x128xf32>
    %79 = arith.cmpf ogt, %77, %78 : vector<16x128xf32>
    %cst_45 = arith.constant 2.000000e-01 : f32
    %80 = vector.broadcast %cst_45 : f32 to vector<16x128xf32>
    %81 = arith.mulf %80, %77 : vector<16x128xf32>
    %82 = arith.select %79, %77, %81 : vector<16x128xi1>, vector<16x128xf32>
    %83 = arith.addf %82, %35 : vector<16x128xf32>
    %cst_46 = arith.constant dense<0xFF800000> : vector<16xf32>
    %84 = vector.multi_reduction <maximumf>, %83, %cst_46 [1] : vector<16x128xf32> to vector<16xf32>
    %85 = vector.shape_cast %84 : vector<16xf32> to vector<16x1xf32>
    %86 = vector.broadcast %85 : vector<16x1xf32> to vector<16x128xf32>
    %87 = arith.subf %83, %86 : vector<16x128xf32>
    %88 = math.exp %87 : vector<16x128xf32>
    %89 = arith.mulf %88, %33 : vector<16x128xf32>
    %cst_47 = arith.constant dense<0.000000e+00> : vector<16xf32>
    %90 = vector.multi_reduction <add>, %89, %cst_47 [1] : vector<16x128xf32> to vector<16xf32>
    %91 = vector.shape_cast %90 : vector<16xf32> to vector<16x1xf32>
    %cst_48 = arith.constant 1.000000e-16 : f32
    %92 = vector.broadcast %cst_48 : f32 to vector<16x1xf32>
    %93 = arith.maximumf %91, %92 : vector<16x1xf32>
    %94 = vector.broadcast %93 : vector<16x1xf32> to vector<16x128xf32>
    %95 = arith.divf %89, %94 : vector<16x128xf32>
    %c16_i32_49 = arith.constant 16 : i32
    %96 = vector.broadcast %c16_i32_49 : i32 to vector<1x128xi32>
    %97 = arith.cmpi sge, %31, %96 : vector<1x128xi32>
    %c32_i32 = arith.constant 32 : i32
    %98 = vector.broadcast %c32_i32 : i32 to vector<1x128xi32>
    %99 = arith.cmpi slt, %31, %98 : vector<1x128xi32>
    %100 = arith.andi %97, %99 : vector<1x128xi1>
    %cst_50 = arith.constant 0.000000e+00 : f32
    %101 = vector.shape_cast %100 : vector<1x128xi1> to vector<1x128xi1>
    %102 = vector.broadcast %101 : vector<1x128xi1> to vector<128x128xi1>
    %103 = vector.broadcast %cst_50 : f32 to vector<128x128xf32>
    %104 = arith.select %102, %16, %103 : vector<128x128xi1>, vector<128x128xf32>
    %105 = arith.truncf %95 : vector<16x128xf32> to vector<16x128xbf16>
    %106 = arith.truncf %104 : vector<128x128xf32> to vector<128x128xbf16>
    %cst_51 = arith.constant dense<0.000000e+00> : vector<16x128xf32>
    %107 = tpu.matmul %105, %106, %cst_51 {dimension_numbers = #tpu.dot_dimension_numbers<[1], [0], [0], [1], [0, 0, 1, 1], [], []>} : vector<16x128xbf16>, vector<128x128xbf16>, vector<16x128xf32> -> vector<16x128xf32>
    %108 = arith.addf %72, %107 : vector<16x128xf32>
    %109 = vector.extract_strided_slice %8 {offsets = [0, 2], sizes = [16, 1], strides = [1, 1]} : vector<16x4xf32> to vector<16x1xf32>
    %110 = vector.extract_strided_slice %23 {offsets = [2, 0], sizes = [1, 128], strides = [1, 1]} : vector<4x128xf32> to vector<1x128xf32>
    %111 = vector.broadcast %109 : vector<16x1xf32> to vector<16x128xf32>
    %112 = vector.broadcast %110 : vector<1x128xf32> to vector<16x128xf32>
    %113 = arith.addf %111, %112 : vector<16x128xf32>
    %cst_52 = arith.constant 0.000000e+00 : f32
    %114 = vector.broadcast %cst_52 : f32 to vector<16x128xf32>
    %115 = arith.cmpf ogt, %113, %114 : vector<16x128xf32>
    %cst_53 = arith.constant 2.000000e-01 : f32
    %116 = vector.broadcast %cst_53 : f32 to vector<16x128xf32>
    %117 = arith.mulf %116, %113 : vector<16x128xf32>
    %118 = arith.select %115, %113, %117 : vector<16x128xi1>, vector<16x128xf32>
    %119 = arith.addf %118, %35 : vector<16x128xf32>
    %cst_54 = arith.constant dense<0xFF800000> : vector<16xf32>
    %120 = vector.multi_reduction <maximumf>, %119, %cst_54 [1] : vector<16x128xf32> to vector<16xf32>
    %121 = vector.shape_cast %120 : vector<16xf32> to vector<16x1xf32>
    %122 = vector.broadcast %121 : vector<16x1xf32> to vector<16x128xf32>
    %123 = arith.subf %119, %122 : vector<16x128xf32>
    %124 = math.exp %123 : vector<16x128xf32>
    %125 = arith.mulf %124, %33 : vector<16x128xf32>
    %cst_55 = arith.constant dense<0.000000e+00> : vector<16xf32>
    %126 = vector.multi_reduction <add>, %125, %cst_55 [1] : vector<16x128xf32> to vector<16xf32>
    %127 = vector.shape_cast %126 : vector<16xf32> to vector<16x1xf32>
    %cst_56 = arith.constant 1.000000e-16 : f32
    %128 = vector.broadcast %cst_56 : f32 to vector<16x1xf32>
    %129 = arith.maximumf %127, %128 : vector<16x1xf32>
    %130 = vector.broadcast %129 : vector<16x1xf32> to vector<16x128xf32>
    %131 = arith.divf %125, %130 : vector<16x128xf32>
    %c32_i32_57 = arith.constant 32 : i32
    %132 = vector.broadcast %c32_i32_57 : i32 to vector<1x128xi32>
    %133 = arith.cmpi sge, %31, %132 : vector<1x128xi32>
    %c48_i32 = arith.constant 48 : i32
    %134 = vector.broadcast %c48_i32 : i32 to vector<1x128xi32>
    %135 = arith.cmpi slt, %31, %134 : vector<1x128xi32>
    %136 = arith.andi %133, %135 : vector<1x128xi1>
    %cst_58 = arith.constant 0.000000e+00 : f32
    %137 = vector.shape_cast %136 : vector<1x128xi1> to vector<1x128xi1>
    %138 = vector.broadcast %137 : vector<1x128xi1> to vector<128x128xi1>
    %139 = vector.broadcast %cst_58 : f32 to vector<128x128xf32>
    %140 = arith.select %138, %16, %139 : vector<128x128xi1>, vector<128x128xf32>
    %141 = arith.truncf %131 : vector<16x128xf32> to vector<16x128xbf16>
    %142 = arith.truncf %140 : vector<128x128xf32> to vector<128x128xbf16>
    %cst_59 = arith.constant dense<0.000000e+00> : vector<16x128xf32>
    %143 = tpu.matmul %141, %142, %cst_59 {dimension_numbers = #tpu.dot_dimension_numbers<[1], [0], [0], [1], [0, 0, 1, 1], [], []>} : vector<16x128xbf16>, vector<128x128xbf16>, vector<16x128xf32> -> vector<16x128xf32>
    %144 = arith.addf %108, %143 : vector<16x128xf32>
    %145 = vector.extract_strided_slice %8 {offsets = [0, 3], sizes = [16, 1], strides = [1, 1]} : vector<16x4xf32> to vector<16x1xf32>
    %146 = vector.extract_strided_slice %23 {offsets = [3, 0], sizes = [1, 128], strides = [1, 1]} : vector<4x128xf32> to vector<1x128xf32>
    %147 = vector.broadcast %145 : vector<16x1xf32> to vector<16x128xf32>
    %148 = vector.broadcast %146 : vector<1x128xf32> to vector<16x128xf32>
    %149 = arith.addf %147, %148 : vector<16x128xf32>
    %cst_60 = arith.constant 0.000000e+00 : f32
    %150 = vector.broadcast %cst_60 : f32 to vector<16x128xf32>
    %151 = arith.cmpf ogt, %149, %150 : vector<16x128xf32>
    %cst_61 = arith.constant 2.000000e-01 : f32
    %152 = vector.broadcast %cst_61 : f32 to vector<16x128xf32>
    %153 = arith.mulf %152, %149 : vector<16x128xf32>
    %154 = arith.select %151, %149, %153 : vector<16x128xi1>, vector<16x128xf32>
    %155 = arith.addf %154, %35 : vector<16x128xf32>
    %cst_62 = arith.constant dense<0xFF800000> : vector<16xf32>
    %156 = vector.multi_reduction <maximumf>, %155, %cst_62 [1] : vector<16x128xf32> to vector<16xf32>
    %157 = vector.shape_cast %156 : vector<16xf32> to vector<16x1xf32>
    %158 = vector.broadcast %157 : vector<16x1xf32> to vector<16x128xf32>
    %159 = arith.subf %155, %158 : vector<16x128xf32>
    %160 = math.exp %159 : vector<16x128xf32>
    %161 = arith.mulf %160, %33 : vector<16x128xf32>
    %cst_63 = arith.constant dense<0.000000e+00> : vector<16xf32>
    %162 = vector.multi_reduction <add>, %161, %cst_63 [1] : vector<16x128xf32> to vector<16xf32>
    %163 = vector.shape_cast %162 : vector<16xf32> to vector<16x1xf32>
    %cst_64 = arith.constant 1.000000e-16 : f32
    %164 = vector.broadcast %cst_64 : f32 to vector<16x1xf32>
    %165 = arith.maximumf %163, %164 : vector<16x1xf32>
    %166 = vector.broadcast %165 : vector<16x1xf32> to vector<16x128xf32>
    %167 = arith.divf %161, %166 : vector<16x128xf32>
    %c48_i32_65 = arith.constant 48 : i32
    %168 = vector.broadcast %c48_i32_65 : i32 to vector<1x128xi32>
    %169 = arith.cmpi sge, %31, %168 : vector<1x128xi32>
    %c64_i32 = arith.constant 64 : i32
    %170 = vector.broadcast %c64_i32 : i32 to vector<1x128xi32>
    %171 = arith.cmpi slt, %31, %170 : vector<1x128xi32>
    %172 = arith.andi %169, %171 : vector<1x128xi1>
    %cst_66 = arith.constant 0.000000e+00 : f32
    %173 = vector.shape_cast %172 : vector<1x128xi1> to vector<1x128xi1>
    %174 = vector.broadcast %173 : vector<1x128xi1> to vector<128x128xi1>
    %175 = vector.broadcast %cst_66 : f32 to vector<128x128xf32>
    %176 = arith.select %174, %16, %175 : vector<128x128xi1>, vector<128x128xf32>
    %177 = arith.truncf %167 : vector<16x128xf32> to vector<16x128xbf16>
    %178 = arith.truncf %176 : vector<128x128xf32> to vector<128x128xbf16>
    %cst_67 = arith.constant dense<0.000000e+00> : vector<16x128xf32>
    %179 = tpu.matmul %177, %178, %cst_67 {dimension_numbers = #tpu.dot_dimension_numbers<[1], [0], [0], [1], [0, 0, 1, 1], [], []>} : vector<16x128xbf16>, vector<128x128xbf16>, vector<16x128xf32> -> vector<16x128xf32>
    %180 = arith.addf %144, %179 : vector<16x128xf32>
    %cst_68 = arith.constant 0.000000e+00 : f32
    %181 = vector.broadcast %cst_68 : f32 to vector<16x128xf32>
    %182 = arith.maximumf %180, %181 : vector<16x128xf32>
    %c0_69 = arith.constant 0 : index
    %c0_70 = arith.constant 0 : index
    %c0_71 = arith.constant 0 : index
    %183 = vector.load %arg7[%c0_69, %c0_70, %c0_71] : memref<1x16x128xf32, #tpu.memory_space<vmem>>, vector<1x16x128xf32>
    %184 = vector.shape_cast %183 : vector<1x16x128xf32> to vector<16x128xf32>
    %c0_72 = arith.constant 0 : index
    %c0_73 = arith.constant 0 : index
    %c0_74 = arith.constant 0 : index
    %185 = vector.load %arg8[%c0_72, %c0_73, %c0_74] : memref<1x16x128xf32, #tpu.memory_space<vmem>>, vector<1x16x128xf32>
    %186 = vector.shape_cast %185 : vector<1x16x128xf32> to vector<16x128xf32>
    %cst_75 = arith.constant 0.000000e+00 : f32
    %187 = vector.broadcast %cst_75 : f32 to vector<16x128xf32>
    %188 = vector.extract_strided_slice %9 {offsets = [0, 0], sizes = [16, 1], strides = [1, 1]} : vector<16x4xf32> to vector<16x1xf32>
    %189 = vector.extract_strided_slice %30 {offsets = [0, 0], sizes = [1, 128], strides = [1, 1]} : vector<4x128xf32> to vector<1x128xf32>
    %190 = vector.broadcast %188 : vector<16x1xf32> to vector<16x128xf32>
    %191 = vector.broadcast %189 : vector<1x128xf32> to vector<16x128xf32>
    %192 = arith.addf %190, %191 : vector<16x128xf32>
    %cst_76 = arith.constant 0.000000e+00 : f32
    %193 = vector.broadcast %cst_76 : f32 to vector<16x128xf32>
    %194 = arith.cmpf ogt, %192, %193 : vector<16x128xf32>
    %cst_77 = arith.constant 2.000000e-01 : f32
    %195 = vector.broadcast %cst_77 : f32 to vector<16x128xf32>
    %196 = arith.mulf %195, %192 : vector<16x128xf32>
    %197 = arith.select %194, %192, %196 : vector<16x128xi1>, vector<16x128xf32>
    %198 = arith.addf %197, %186 : vector<16x128xf32>
    %cst_78 = arith.constant dense<0xFF800000> : vector<16xf32>
    %199 = vector.multi_reduction <maximumf>, %198, %cst_78 [1] : vector<16x128xf32> to vector<16xf32>
    %200 = vector.shape_cast %199 : vector<16xf32> to vector<16x1xf32>
    %201 = vector.broadcast %200 : vector<16x1xf32> to vector<16x128xf32>
    %202 = arith.subf %198, %201 : vector<16x128xf32>
    %203 = math.exp %202 : vector<16x128xf32>
    %204 = arith.mulf %203, %184 : vector<16x128xf32>
    %cst_79 = arith.constant dense<0.000000e+00> : vector<16xf32>
    %205 = vector.multi_reduction <add>, %204, %cst_79 [1] : vector<16x128xf32> to vector<16xf32>
    %206 = vector.shape_cast %205 : vector<16xf32> to vector<16x1xf32>
    %cst_80 = arith.constant 1.000000e-16 : f32
    %207 = vector.broadcast %cst_80 : f32 to vector<16x1xf32>
    %208 = arith.maximumf %206, %207 : vector<16x1xf32>
    %209 = vector.broadcast %208 : vector<16x1xf32> to vector<16x128xf32>
    %210 = arith.divf %204, %209 : vector<16x128xf32>
    %c0_i32_81 = arith.constant 0 : i32
    %211 = vector.broadcast %c0_i32_81 : i32 to vector<1x128xi32>
    %212 = arith.cmpi sge, %31, %211 : vector<1x128xi32>
    %c16_i32_82 = arith.constant 16 : i32
    %213 = vector.broadcast %c16_i32_82 : i32 to vector<1x128xi32>
    %214 = arith.cmpi slt, %31, %213 : vector<1x128xi32>
    %215 = arith.andi %212, %214 : vector<1x128xi1>
    %cst_83 = arith.constant 0.000000e+00 : f32
    %216 = vector.shape_cast %215 : vector<1x128xi1> to vector<1x128xi1>
    %217 = vector.broadcast %216 : vector<1x128xi1> to vector<128x128xi1>
    %218 = vector.broadcast %cst_83 : f32 to vector<128x128xf32>
    %219 = arith.select %217, %7, %218 : vector<128x128xi1>, vector<128x128xf32>
    %220 = arith.truncf %210 : vector<16x128xf32> to vector<16x128xbf16>
    %221 = arith.truncf %219 : vector<128x128xf32> to vector<128x128xbf16>
    %cst_84 = arith.constant dense<0.000000e+00> : vector<16x128xf32>
    %222 = tpu.matmul %220, %221, %cst_84 {dimension_numbers = #tpu.dot_dimension_numbers<[1], [0], [0], [1], [0, 0, 1, 1], [], []>} : vector<16x128xbf16>, vector<128x128xbf16>, vector<16x128xf32> -> vector<16x128xf32>
    %223 = arith.addf %187, %222 : vector<16x128xf32>
    %224 = vector.extract_strided_slice %9 {offsets = [0, 1], sizes = [16, 1], strides = [1, 1]} : vector<16x4xf32> to vector<16x1xf32>
    %225 = vector.extract_strided_slice %30 {offsets = [1, 0], sizes = [1, 128], strides = [1, 1]} : vector<4x128xf32> to vector<1x128xf32>
    %226 = vector.broadcast %224 : vector<16x1xf32> to vector<16x128xf32>
    %227 = vector.broadcast %225 : vector<1x128xf32> to vector<16x128xf32>
    %228 = arith.addf %226, %227 : vector<16x128xf32>
    %cst_85 = arith.constant 0.000000e+00 : f32
    %229 = vector.broadcast %cst_85 : f32 to vector<16x128xf32>
    %230 = arith.cmpf ogt, %228, %229 : vector<16x128xf32>
    %cst_86 = arith.constant 2.000000e-01 : f32
    %231 = vector.broadcast %cst_86 : f32 to vector<16x128xf32>
    %232 = arith.mulf %231, %228 : vector<16x128xf32>
    %233 = arith.select %230, %228, %232 : vector<16x128xi1>, vector<16x128xf32>
    %234 = arith.addf %233, %186 : vector<16x128xf32>
    %cst_87 = arith.constant dense<0xFF800000> : vector<16xf32>
    %235 = vector.multi_reduction <maximumf>, %234, %cst_87 [1] : vector<16x128xf32> to vector<16xf32>
    %236 = vector.shape_cast %235 : vector<16xf32> to vector<16x1xf32>
    %237 = vector.broadcast %236 : vector<16x1xf32> to vector<16x128xf32>
    %238 = arith.subf %234, %237 : vector<16x128xf32>
    %239 = math.exp %238 : vector<16x128xf32>
    %240 = arith.mulf %239, %184 : vector<16x128xf32>
    %cst_88 = arith.constant dense<0.000000e+00> : vector<16xf32>
    %241 = vector.multi_reduction <add>, %240, %cst_88 [1] : vector<16x128xf32> to vector<16xf32>
    %242 = vector.shape_cast %241 : vector<16xf32> to vector<16x1xf32>
    %cst_89 = arith.constant 1.000000e-16 : f32
    %243 = vector.broadcast %cst_89 : f32 to vector<16x1xf32>
    %244 = arith.maximumf %242, %243 : vector<16x1xf32>
    %245 = vector.broadcast %244 : vector<16x1xf32> to vector<16x128xf32>
    %246 = arith.divf %240, %245 : vector<16x128xf32>
    %c16_i32_90 = arith.constant 16 : i32
    %247 = vector.broadcast %c16_i32_90 : i32 to vector<1x128xi32>
    %248 = arith.cmpi sge, %31, %247 : vector<1x128xi32>
    %c32_i32_91 = arith.constant 32 : i32
    %249 = vector.broadcast %c32_i32_91 : i32 to vector<1x128xi32>
    %250 = arith.cmpi slt, %31, %249 : vector<1x128xi32>
    %251 = arith.andi %248, %250 : vector<1x128xi1>
    %cst_92 = arith.constant 0.000000e+00 : f32
    %252 = vector.shape_cast %251 : vector<1x128xi1> to vector<1x128xi1>
    %253 = vector.broadcast %252 : vector<1x128xi1> to vector<128x128xi1>
    %254 = vector.broadcast %cst_92 : f32 to vector<128x128xf32>
    %255 = arith.select %253, %7, %254 : vector<128x128xi1>, vector<128x128xf32>
    %256 = arith.truncf %246 : vector<16x128xf32> to vector<16x128xbf16>
    %257 = arith.truncf %255 : vector<128x128xf32> to vector<128x128xbf16>
    %cst_93 = arith.constant dense<0.000000e+00> : vector<16x128xf32>
    %258 = tpu.matmul %256, %257, %cst_93 {dimension_numbers = #tpu.dot_dimension_numbers<[1], [0], [0], [1], [0, 0, 1, 1], [], []>} : vector<16x128xbf16>, vector<128x128xbf16>, vector<16x128xf32> -> vector<16x128xf32>
    %259 = arith.addf %223, %258 : vector<16x128xf32>
    %260 = vector.extract_strided_slice %9 {offsets = [0, 2], sizes = [16, 1], strides = [1, 1]} : vector<16x4xf32> to vector<16x1xf32>
    %261 = vector.extract_strided_slice %30 {offsets = [2, 0], sizes = [1, 128], strides = [1, 1]} : vector<4x128xf32> to vector<1x128xf32>
    %262 = vector.broadcast %260 : vector<16x1xf32> to vector<16x128xf32>
    %263 = vector.broadcast %261 : vector<1x128xf32> to vector<16x128xf32>
    %264 = arith.addf %262, %263 : vector<16x128xf32>
    %cst_94 = arith.constant 0.000000e+00 : f32
    %265 = vector.broadcast %cst_94 : f32 to vector<16x128xf32>
    %266 = arith.cmpf ogt, %264, %265 : vector<16x128xf32>
    %cst_95 = arith.constant 2.000000e-01 : f32
    %267 = vector.broadcast %cst_95 : f32 to vector<16x128xf32>
    %268 = arith.mulf %267, %264 : vector<16x128xf32>
    %269 = arith.select %266, %264, %268 : vector<16x128xi1>, vector<16x128xf32>
    %270 = arith.addf %269, %186 : vector<16x128xf32>
    %cst_96 = arith.constant dense<0xFF800000> : vector<16xf32>
    %271 = vector.multi_reduction <maximumf>, %270, %cst_96 [1] : vector<16x128xf32> to vector<16xf32>
    %272 = vector.shape_cast %271 : vector<16xf32> to vector<16x1xf32>
    %273 = vector.broadcast %272 : vector<16x1xf32> to vector<16x128xf32>
    %274 = arith.subf %270, %273 : vector<16x128xf32>
    %275 = math.exp %274 : vector<16x128xf32>
    %276 = arith.mulf %275, %184 : vector<16x128xf32>
    %cst_97 = arith.constant dense<0.000000e+00> : vector<16xf32>
    %277 = vector.multi_reduction <add>, %276, %cst_97 [1] : vector<16x128xf32> to vector<16xf32>
    %278 = vector.shape_cast %277 : vector<16xf32> to vector<16x1xf32>
    %cst_98 = arith.constant 1.000000e-16 : f32
    %279 = vector.broadcast %cst_98 : f32 to vector<16x1xf32>
    %280 = arith.maximumf %278, %279 : vector<16x1xf32>
    %281 = vector.broadcast %280 : vector<16x1xf32> to vector<16x128xf32>
    %282 = arith.divf %276, %281 : vector<16x128xf32>
    %c32_i32_99 = arith.constant 32 : i32
    %283 = vector.broadcast %c32_i32_99 : i32 to vector<1x128xi32>
    %284 = arith.cmpi sge, %31, %283 : vector<1x128xi32>
    %c48_i32_100 = arith.constant 48 : i32
    %285 = vector.broadcast %c48_i32_100 : i32 to vector<1x128xi32>
    %286 = arith.cmpi slt, %31, %285 : vector<1x128xi32>
    %287 = arith.andi %284, %286 : vector<1x128xi1>
    %cst_101 = arith.constant 0.000000e+00 : f32
    %288 = vector.shape_cast %287 : vector<1x128xi1> to vector<1x128xi1>
    %289 = vector.broadcast %288 : vector<1x128xi1> to vector<128x128xi1>
    %290 = vector.broadcast %cst_101 : f32 to vector<128x128xf32>
    %291 = arith.select %289, %7, %290 : vector<128x128xi1>, vector<128x128xf32>
    %292 = arith.truncf %282 : vector<16x128xf32> to vector<16x128xbf16>
    %293 = arith.truncf %291 : vector<128x128xf32> to vector<128x128xbf16>
    %cst_102 = arith.constant dense<0.000000e+00> : vector<16x128xf32>
    %294 = tpu.matmul %292, %293, %cst_102 {dimension_numbers = #tpu.dot_dimension_numbers<[1], [0], [0], [1], [0, 0, 1, 1], [], []>} : vector<16x128xbf16>, vector<128x128xbf16>, vector<16x128xf32> -> vector<16x128xf32>
    %295 = arith.addf %259, %294 : vector<16x128xf32>
    %296 = vector.extract_strided_slice %9 {offsets = [0, 3], sizes = [16, 1], strides = [1, 1]} : vector<16x4xf32> to vector<16x1xf32>
    %297 = vector.extract_strided_slice %30 {offsets = [3, 0], sizes = [1, 128], strides = [1, 1]} : vector<4x128xf32> to vector<1x128xf32>
    %298 = vector.broadcast %296 : vector<16x1xf32> to vector<16x128xf32>
    %299 = vector.broadcast %297 : vector<1x128xf32> to vector<16x128xf32>
    %300 = arith.addf %298, %299 : vector<16x128xf32>
    %cst_103 = arith.constant 0.000000e+00 : f32
    %301 = vector.broadcast %cst_103 : f32 to vector<16x128xf32>
    %302 = arith.cmpf ogt, %300, %301 : vector<16x128xf32>
    %cst_104 = arith.constant 2.000000e-01 : f32
    %303 = vector.broadcast %cst_104 : f32 to vector<16x128xf32>
    %304 = arith.mulf %303, %300 : vector<16x128xf32>
    %305 = arith.select %302, %300, %304 : vector<16x128xi1>, vector<16x128xf32>
    %306 = arith.addf %305, %186 : vector<16x128xf32>
    %cst_105 = arith.constant dense<0xFF800000> : vector<16xf32>
    %307 = vector.multi_reduction <maximumf>, %306, %cst_105 [1] : vector<16x128xf32> to vector<16xf32>
    %308 = vector.shape_cast %307 : vector<16xf32> to vector<16x1xf32>
    %309 = vector.broadcast %308 : vector<16x1xf32> to vector<16x128xf32>
    %310 = arith.subf %306, %309 : vector<16x128xf32>
    %311 = math.exp %310 : vector<16x128xf32>
    %312 = arith.mulf %311, %184 : vector<16x128xf32>
    %cst_106 = arith.constant dense<0.000000e+00> : vector<16xf32>
    %313 = vector.multi_reduction <add>, %312, %cst_106 [1] : vector<16x128xf32> to vector<16xf32>
    %314 = vector.shape_cast %313 : vector<16xf32> to vector<16x1xf32>
    %cst_107 = arith.constant 1.000000e-16 : f32
    %315 = vector.broadcast %cst_107 : f32 to vector<16x1xf32>
    %316 = arith.maximumf %314, %315 : vector<16x1xf32>
    %317 = vector.broadcast %316 : vector<16x1xf32> to vector<16x128xf32>
    %318 = arith.divf %312, %317 : vector<16x128xf32>
    %c48_i32_108 = arith.constant 48 : i32
    %319 = vector.broadcast %c48_i32_108 : i32 to vector<1x128xi32>
    %320 = arith.cmpi sge, %31, %319 : vector<1x128xi32>
    %c64_i32_109 = arith.constant 64 : i32
    %321 = vector.broadcast %c64_i32_109 : i32 to vector<1x128xi32>
    %322 = arith.cmpi slt, %31, %321 : vector<1x128xi32>
    %323 = arith.andi %320, %322 : vector<1x128xi1>
    %cst_110 = arith.constant 0.000000e+00 : f32
    %324 = vector.shape_cast %323 : vector<1x128xi1> to vector<1x128xi1>
    %325 = vector.broadcast %324 : vector<1x128xi1> to vector<128x128xi1>
    %326 = vector.broadcast %cst_110 : f32 to vector<128x128xf32>
    %327 = arith.select %325, %7, %326 : vector<128x128xi1>, vector<128x128xf32>
    %328 = arith.truncf %318 : vector<16x128xf32> to vector<16x128xbf16>
    %329 = arith.truncf %327 : vector<128x128xf32> to vector<128x128xbf16>
    %cst_111 = arith.constant dense<0.000000e+00> : vector<16x128xf32>
    %330 = tpu.matmul %328, %329, %cst_111 {dimension_numbers = #tpu.dot_dimension_numbers<[1], [0], [0], [1], [0, 0, 1, 1], [], []>} : vector<16x128xbf16>, vector<128x128xbf16>, vector<16x128xf32> -> vector<16x128xf32>
    %331 = arith.addf %295, %330 : vector<16x128xf32>
    %cst_112 = arith.constant 0.000000e+00 : f32
    %332 = vector.broadcast %cst_112 : f32 to vector<16x128xf32>
    %333 = arith.maximumf %331, %332 : vector<16x128xf32>
    %c0_113 = arith.constant 0 : index
    %c0_114 = arith.constant 0 : index
    %334 = vector.load %arg17[%c0_113, %c0_114] : memref<128x128xf32, #tpu.memory_space<vmem>>, vector<128x128xf32>
    %cst_115 = arith.constant dense<0.000000e+00> : vector<16x128xf32>
    %335 = tpu.matmul %182, %334, %cst_115 {dimension_numbers = #tpu.dot_dimension_numbers<[1], [0], [0], [1], [0, 0, 1, 1], [], []>} : vector<16x128xf32>, vector<128x128xf32>, vector<16x128xf32> -> vector<16x128xf32>
    %c0_116 = arith.constant 0 : index
    %c0_117 = arith.constant 0 : index
    %336 = vector.load %arg18[%c0_116, %c0_117] : memref<1x128xf32, #tpu.memory_space<vmem>>, vector<1x128xf32>
    %337 = vector.broadcast %336 : vector<1x128xf32> to vector<16x128xf32>
    %338 = arith.addf %335, %337 : vector<16x128xf32>
    %339 = math.tanh %338 : vector<16x128xf32>
    %cst_118 = arith.constant dense<0.000000e+00> : vector<128xf32>
    %340 = vector.multi_reduction <add>, %339, %cst_118 [0] : vector<16x128xf32> to vector<128xf32>
    %341 = vector.shape_cast %340 : vector<128xf32> to vector<1x128xf32>
    %cst_119 = arith.constant 1.600000e+01 : f32
    %342 = vector.broadcast %cst_119 : f32 to vector<1x128xf32>
    %343 = arith.divf %341, %342 : vector<1x128xf32>
    %c0_120 = arith.constant 0 : index
    %c0_121 = arith.constant 0 : index
    %344 = vector.load %arg19[%c0_120, %c0_121] : memref<1x128xf32, #tpu.memory_space<vmem>>, vector<1x128xf32>
    %345 = arith.mulf %343, %344 : vector<1x128xf32>
    %cst_122 = arith.constant dense<0.000000e+00> : vector<1xf32>
    %346 = vector.multi_reduction <add>, %345, %cst_122 [1] : vector<1x128xf32> to vector<1xf32>
    %347 = vector.shape_cast %346 : vector<1xf32> to vector<1x1xf32>
    %c0_123 = arith.constant 0 : index
    %c0_124 = arith.constant 0 : index
    %348 = vector.load %arg17[%c0_123, %c0_124] : memref<128x128xf32, #tpu.memory_space<vmem>>, vector<128x128xf32>
    %cst_125 = arith.constant dense<0.000000e+00> : vector<16x128xf32>
    %349 = tpu.matmul %333, %348, %cst_125 {dimension_numbers = #tpu.dot_dimension_numbers<[1], [0], [0], [1], [0, 0, 1, 1], [], []>} : vector<16x128xf32>, vector<128x128xf32>, vector<16x128xf32> -> vector<16x128xf32>
    %c0_126 = arith.constant 0 : index
    %c0_127 = arith.constant 0 : index
    %350 = vector.load %arg18[%c0_126, %c0_127] : memref<1x128xf32, #tpu.memory_space<vmem>>, vector<1x128xf32>
    %351 = vector.broadcast %350 : vector<1x128xf32> to vector<16x128xf32>
    %352 = arith.addf %349, %351 : vector<16x128xf32>
    %353 = math.tanh %352 : vector<16x128xf32>
    %cst_128 = arith.constant dense<0.000000e+00> : vector<128xf32>
    %354 = vector.multi_reduction <add>, %353, %cst_128 [0] : vector<16x128xf32> to vector<128xf32>
    %355 = vector.shape_cast %354 : vector<128xf32> to vector<1x128xf32>
    %cst_129 = arith.constant 1.600000e+01 : f32
    %356 = vector.broadcast %cst_129 : f32 to vector<1x128xf32>
    %357 = arith.divf %355, %356 : vector<1x128xf32>
    %c0_130 = arith.constant 0 : index
    %c0_131 = arith.constant 0 : index
    %358 = vector.load %arg19[%c0_130, %c0_131] : memref<1x128xf32, #tpu.memory_space<vmem>>, vector<1x128xf32>
    %359 = arith.mulf %357, %358 : vector<1x128xf32>
    %cst_132 = arith.constant dense<0.000000e+00> : vector<1xf32>
    %360 = vector.multi_reduction <add>, %359, %cst_132 [1] : vector<1x128xf32> to vector<1xf32>
    %361 = vector.shape_cast %360 : vector<1xf32> to vector<1x1xf32>
    %362 = arith.maximumf %347, %361 : vector<1x1xf32>
    %363 = arith.subf %347, %362 : vector<1x1xf32>
    %364 = math.exp %363 : vector<1x1xf32>
    %365 = arith.subf %361, %362 : vector<1x1xf32>
    %366 = math.exp %365 : vector<1x1xf32>
    %367 = arith.addf %364, %366 : vector<1x1xf32>
    %368 = arith.divf %364, %367 : vector<1x1xf32>
    %369 = vector.broadcast %368 : vector<1x1xf32> to vector<16x128xf32>
    %370 = arith.mulf %369, %182 : vector<16x128xf32>
    %371 = arith.divf %366, %367 : vector<1x1xf32>
    %372 = vector.broadcast %371 : vector<1x1xf32> to vector<16x128xf32>
    %373 = arith.mulf %372, %333 : vector<16x128xf32>
    %374 = arith.addf %370, %373 : vector<16x128xf32>
    %c0_133 = arith.constant 0 : index
    %c0_134 = arith.constant 0 : index
    %375 = vector.load %arg20[%c0_133, %c0_134] : memref<128x128xf32, #tpu.memory_space<vmem>>, vector<128x128xf32>
    %cst_135 = arith.constant dense<0.000000e+00> : vector<16x128xf32>
    %376 = tpu.matmul %374, %375, %cst_135 {dimension_numbers = #tpu.dot_dimension_numbers<[1], [0], [0], [1], [0, 0, 1, 1], [], []>} : vector<16x128xf32>, vector<128x128xf32>, vector<16x128xf32> -> vector<16x128xf32>
    %c0_136 = arith.constant 0 : index
    %c0_137 = arith.constant 0 : index
    %377 = vector.load %arg21[%c0_136, %c0_137] : memref<1x128xf32, #tpu.memory_space<vmem>>, vector<1x128xf32>
    %378 = vector.broadcast %377 : vector<1x128xf32> to vector<16x128xf32>
    %379 = arith.addf %376, %378 : vector<16x128xf32>
    %c0_138 = arith.constant 0 : index
    %c0_139 = arith.constant 0 : index
    %c0_140 = arith.constant 0 : index
    %380 = vector.load %arg22[%c0_138, %c0_139, %c0_140] : memref<1x16x128xf32, #tpu.memory_space<vmem>>, vector<1x16x128xf32>
    %381 = vector.shape_cast %380 : vector<1x16x128xf32> to vector<16x128xf32>
    %382 = vector.shape_cast %379 : vector<16x128xf32> to vector<1x16x128xf32>
    tpu.vector_store %arg22[%c0_138, %c0_139, %c0_140], %382 {strides = array<i32>} : memref<1x16x128xf32, #tpu.memory_space<vmem>>, vector<1x16x128xf32>,
    return
  }
  func.func @transform_0(%arg0: i32) -> (i32, i32, i32) {
    %c0_i32 = arith.constant 0 : i32
    %c0_i32_0 = arith.constant 0 : i32
    %c0_i32_1 = arith.constant 0 : i32
    return %arg0, %c0_i32, %c0_i32_0 : i32, i32, i32
  }
  func.func @transform_1(%arg0: i32) -> (i32, i32, i32) {
    %c0_i32 = arith.constant 0 : i32
    %c0_i32_0 = arith.constant 0 : i32
    %c0_i32_1 = arith.constant 0 : i32
    return %arg0, %c0_i32, %c0_i32_0 : i32, i32, i32
  }
  func.func @transform_2(%arg0: i32) -> (i32, i32, i32) {
    %c0_i32 = arith.constant 0 : i32
    %c0_i32_0 = arith.constant 0 : i32
    %c0_i32_1 = arith.constant 0 : i32
    return %arg0, %c0_i32, %c0_i32_0 : i32, i32, i32
  }
  func.func @transform_3(%arg0: i32) -> (i32, i32, i32) {
    %c0_i32 = arith.constant 0 : i32
    %c0_i32_0 = arith.constant 0 : i32
    %c0_i32_1 = arith.constant 0 : i32
    return %arg0, %c0_i32, %c0_i32_0 : i32, i32, i32
  }
  func.func @transform_4(%arg0: i32) -> (i32, i32, i32) {
    %c0_i32 = arith.constant 0 : i32
    %c0_i32_0 = arith.constant 0 : i32
    %c0_i32_1 = arith.constant 0 : i32
    return %arg0, %c0_i32, %c0_i32_0 : i32, i32, i32
  }
  func.func @transform_5(%arg0: i32) -> (i32, i32, i32) {
    %c0_i32 = arith.constant 0 : i32
    %c0_i32_0 = arith.constant 0 : i32
    %c0_i32_1 = arith.constant 0 : i32
    return %arg0, %c0_i32, %c0_i32_0 : i32, i32, i32
  }
  func.func @transform_6(%arg0: i32) -> (i32, i32, i32) {
    %c0_i32 = arith.constant 0 : i32
    %c0_i32_0 = arith.constant 0 : i32
    %c0_i32_1 = arith.constant 0 : i32
    return %arg0, %c0_i32, %c0_i32_0 : i32, i32, i32
  }
  func.func @transform_7(%arg0: i32) -> (i32, i32, i32) {
    %c0_i32 = arith.constant 0 : i32
    %c0_i32_0 = arith.constant 0 : i32
    %c0_i32_1 = arith.constant 0 : i32
    return %arg0, %c0_i32, %c0_i32_0 : i32, i32, i32
  }
  func.func @transform_8(%arg0: i32) -> (i32, i32) {
    %c0_i32 = arith.constant 0 : i32
    %c0_i32_0 = arith.constant 0 : i32
    %c0_i32_1 = arith.constant 0 : i32
    return %c0_i32, %c0_i32_0 : i32, i32
  }
  func.func @transform_9(%arg0: i32) -> (i32, i32) {
    %c0_i32 = arith.constant 0 : i32
    %c0_i32_0 = arith.constant 0 : i32
    %c0_i32_1 = arith.constant 0 : i32
    return %c0_i32, %c0_i32_0 : i32, i32
  }
  func.func @transform_10(%arg0: i32) -> (i32, i32) {
    %c0_i32 = arith.constant 0 : i32
    %c0_i32_0 = arith.constant 0 : i32
    %c0_i32_1 = arith.constant 0 : i32
    return %c0_i32, %c0_i32_0 : i32, i32
  }
  func.func @transform_11(%arg0: i32) -> (i32, i32) {
    %c0_i32 = arith.constant 0 : i32
    %c0_i32_0 = arith.constant 0 : i32
    %c0_i32_1 = arith.constant 0 : i32
    return %c0_i32, %c0_i32_0 : i32, i32
  }
  func.func @transform_12(%arg0: i32) -> (i32, i32) {
    %c0_i32 = arith.constant 0 : i32
    %c0_i32_0 = arith.constant 0 : i32
    %c0_i32_1 = arith.constant 0 : i32
    return %c0_i32, %c0_i32_0 : i32, i32
  }
  func.func @transform_13(%arg0: i32) -> (i32, i32) {
    %c0_i32 = arith.constant 0 : i32
    %c0_i32_0 = arith.constant 0 : i32
    %c0_i32_1 = arith.constant 0 : i32
    return %c0_i32, %c0_i32_0 : i32, i32
  }
  func.func @transform_14(%arg0: i32) -> (i32, i32) {
    %c0_i32 = arith.constant 0 : i32
    %c0_i32_0 = arith.constant 0 : i32
    %c0_i32_1 = arith.constant 0 : i32
    return %c0_i32, %c0_i32_0 : i32, i32
  }
  func.func @transform_15(%arg0: i32) -> (i32, i32) {
    %c0_i32 = arith.constant 0 : i32
    %c0_i32_0 = arith.constant 0 : i32
    %c0_i32_1 = arith.constant 0 : i32
    return %c0_i32, %c0_i32_0 : i32, i32
  }
  func.func @transform_16(%arg0: i32) -> (i32, i32) {
    %c0_i32 = arith.constant 0 : i32
    %c0_i32_0 = arith.constant 0 : i32
    %c0_i32_1 = arith.constant 0 : i32
    return %c0_i32, %c0_i32_0 : i32, i32
  }
  func.func @transform_17(%arg0: i32) -> (i32, i32) {
    %c0_i32 = arith.constant 0 : i32
    %c0_i32_0 = arith.constant 0 : i32
    %c0_i32_1 = arith.constant 0 : i32
    return %c0_i32, %c0_i32_0 : i32, i32
  }
  func.func @transform_18(%arg0: i32) -> (i32, i32) {
    %c0_i32 = arith.constant 0 : i32
    %c0_i32_0 = arith.constant 0 : i32
    %c0_i32_1 = arith.constant 0 : i32
    return %c0_i32, %c0_i32_0 : i32, i32
  }
  func.func @transform_19(%arg0: i32) -> (i32, i32) {
    %c0_i32 = arith.constant 0 : i32
    %c0_i32_0 = arith.constant 0 : i32
    %c0_i32_1 = arith.constant 0 : i32
    return %c0_i32, %c0_i32_0 : i32, i32
  }
  func.func @transform_20(%arg0: i32) -> (i32, i32) {
    %c0_i32 = arith.constant 0 : i32
    %c0_i32_0 = arith.constant 0 : i32
    %c0_i32_1 = arith.constant 0 : i32
    return %c0_i32, %c0_i32_0 : i32, i32
  }
  func.func @transform_21(%arg0: i32) -> (i32, i32, i32) {
    %c0_i32 = arith.constant 0 : i32
    %c0_i32_0 = arith.constant 0 : i32
    %c0_i32_1 = arith.constant 0 : i32
    return %arg0, %c0_i32, %c0_i32_0 : i32, i32, i32
  }
}

</mosaic_0001>

<llo_original>
// kernel: han_forward.1
$region0: #{han_forward.1}
  #allocation0 [shape = 'u32[]', space=smem, size = 0x4, offset = 0x4, fixed_abs, tag = 'smem constant byte address 0x4 - core index']
  #allocation1 [shape = 'u32[144,128]{1,0:T(1,128)}', space=vmem, size = 0x12000, scoped, tag = 'internal scratch']
  %s0 = inlined_call_operand.vmem [shape: f32[4,128,128], index: 0, kind: input, shape index: {}]
  %s1 = inlined_call_operand.vmem [shape: f32[4,128,128], index: 1, kind: input, shape index: {}]
  %s2 = inlined_call_operand.vmem [shape: f32[4,128,128], index: 2, kind: input, shape index: {}]
  %s3 = inlined_call_operand.vmem [shape: f32[4,128,128], index: 3, kind: input, shape index: {}]
  %s4 = inlined_call_operand.vmem [shape: f32[4,16,128], index: 4, kind: input, shape index: {}]
  %s5 = inlined_call_operand.vmem [shape: f32[4,16,128], index: 5, kind: input, shape index: {}]
  %s6 = inlined_call_operand.vmem [shape: f32[4,16,128], index: 6, kind: input, shape index: {}]
  %s7 = inlined_call_operand.vmem [shape: f32[4,16,128], index: 7, kind: input, shape index: {}]
  %s8 = inlined_call_operand.vmem [shape: f32[128,256], index: 8, kind: input, shape index: {}]
  %s9 = inlined_call_operand.vmem [shape: f32[1,256], index: 9, kind: input, shape index: {}]
  %s10 = inlined_call_operand.vmem [shape: f32[128,128], index: 10, kind: input, shape index: {}]
  %s11 = inlined_call_operand.vmem [shape: f32[1,128], index: 11, kind: input, shape index: {}]
  %s12 = inlined_call_operand.vmem [shape: f32[4,128], index: 12, kind: input, shape index: {}]
  %s13 = inlined_call_operand.vmem [shape: f32[4,1], index: 13, kind: input, shape index: {}]
  %s14 = inlined_call_operand.vmem [shape: f32[4,128], index: 14, kind: input, shape index: {}]
  %s15 = inlined_call_operand.vmem [shape: f32[4,1], index: 15, kind: input, shape index: {}]
  %s16 = inlined_call_operand.vmem [shape: f32[128,128], index: 16, kind: input, shape index: {}]
  %s17 = inlined_call_operand.vmem [shape: f32[1,128], index: 17, kind: input, shape index: {}]
  %s18 = inlined_call_operand.vmem [shape: f32[1,128], index: 18, kind: input, shape index: {}]
  %s19 = inlined_call_operand.vmem [shape: f32[128,128], index: 19, kind: input, shape index: {}]
  %s20 = inlined_call_operand.vmem [shape: f32[1,128], index: 20, kind: input, shape index: {}]
  %s21 = inlined_call_operand.vmem [shape: f32[4,16,128], index: 21, kind: output, shape index: {}]
  %s22 = sld [smem:[#allocation0]]
  $region117: #{han_forward.1} parent=0
    _
  %s24 = ssub.s32 1, %s22
  %s25 = scalar_select 0, %s24, %s22
  loop: start=0, step=1, limit=6
  $region2: #{han_forward.1} parent=0 // loop_pre_header
    _
  $region3: #{han_forward.1} parent=0 // loop_header
    %s27 = sphi 0, %s31
    %p28 = scmp.ge.s32.totalorder %s27, 6
    %s37 = sphi 0, %s39
    %s40 = sphi 0, %s37
    %s41 = sphi 0, %s40
    %s57 = sphi 0, %s41
    %s63 = sphi 0, %s65
    %s66 = sphi 0, %s63
    %s67 = sphi 0, %s66
    %s83 = sphi 0, %s67
    %s89 = sphi 0, %s91
    %s92 = sphi 0, %s89
    %s93 = sphi 0, %s92
    %s109 = sphi 0, %s93
    %s115 = sphi 0, %s117
    %s118 = sphi 0, %s115
    %s119 = sphi 0, %s118
    %s135 = sphi 0, %s119
    %s141 = sphi 0, %s143
    %s144 = sphi 0, %s141
    %s145 = sphi 0, %s144
    %s161 = sphi 0, %s145
    %s167 = sphi 0, %s169
    %s170 = sphi 0, %s167
    %s171 = sphi 0, %s170
    %s187 = sphi 0, %s171
    %s193 = sphi 0, %s195
    %s196 = sphi 0, %s193
    %s197 = sphi 0, %s196
    %s213 = sphi 0, %s197
    %s219 = sphi 0, %s221
    %s222 = sphi 0, %s219
    %s223 = sphi 0, %s222
    %s239 = sphi 0, %s223
    %s243 = sphi 0, %s243
    %s245 = sphi 0, %s243
    %s246 = sphi 0, %s245
    %s260 = sphi 0, %s246
    %s264 = sphi 0, %s264
    %s266 = sphi 0, %s264
    %s267 = sphi 0, %s266
    %s281 = sphi 0, %s267
    %s285 = sphi 0, %s285
    %s287 = sphi 0, %s285
    %s288 = sphi 0, %s287
    %s302 = sphi 0, %s288
    %s306 = sphi 0, %s306
    %s308 = sphi 0, %s306
    %s309 = sphi 0, %s308
    %s323 = sphi 0, %s309
    %s327 = sphi 0, %s327
    %s329 = sphi 0, %s327
    %s330 = sphi 0, %s329
    %s344 = sphi 0, %s330
    %s348 = sphi 0, %s348
    %s350 = sphi 0, %s348
    %s351 = sphi 0, %s350
    %s365 = sphi 0, %s351
    %s369 = sphi 0, %s369
    %s371 = sphi 0, %s369
    %s372 = sphi 0, %s371
    %s386 = sphi 0, %s372
    %s390 = sphi 0, %s390
    %s392 = sphi 0, %s390
    %s393 = sphi 0, %s392
    %s407 = sphi 0, %s393
    %s411 = sphi 0, %s411
    %s413 = sphi 0, %s411
    %s414 = sphi 0, %s413
    %s428 = sphi 0, %s414
    %s432 = sphi 0, %s432
    %s434 = sphi 0, %s432
    %s435 = sphi 0, %s434
    %s449 = sphi 0, %s435
    %s453 = sphi 0, %s453
    %s455 = sphi 0, %s453
    %s456 = sphi 0, %s455
    %s470 = sphi 0, %s456
    %s474 = sphi 0, %s474
    %s476 = sphi 0, %s474
    %s477 = sphi 0, %s476
    %s491 = sphi 0, %s477
    %s495 = sphi 0, %s495
    %s497 = sphi 0, %s495
    %s498 = sphi 0, %s497
    %s512 = sphi 0, %s498
    %s518 = sphi 0, %s520
    %s521 = sphi 0, %s518
    %s522 = sphi 0, %s521
    %s538 = sphi 0, %s522
  $region4: #{han_forward.1} parent=0 // loop_header_branch
    %30 = sbr.rel (%p28) target = $region8
  $region5: #{han_forward.1} parent=0 // loop_body
    %s32 = ssub.s32 %s27, 1
    %s33 = ssub.s32 %s27, 2
    %s34 = sadd.s32 %s27, 1
    %s35 = ssub.s32 %s27, %s34
    %p36 = scmp.eq.s32.totalorder %s35, 0
    %s38 = sadd.s32 %s37, 1
    %s39 = scalar_select %p36, %s37, %s38
    %p42 = pneg %p36
    %p43 = scmp.eq.s32.totalorder %s27, 3
    %p44 = por %p42, %p43
    %p45 = scmp.ne.s32.totalorder %s37, %s40
    %p46 = scmp.eq.s32.totalorder %s27, 0
    %p47 = por %p45, %p46
    %p48 = scmp.ne.s32.totalorder %s37, %s40
    %p49 = scmp.eq.s32.totalorder %s32, 3
    %p50 = por %p48, %p49
    %p51 = scmp.ne.s32.totalorder %s40, %s41
    %p52 = scmp.eq.s32.totalorder %s32, 0
    %p53 = por %p51, %p52
    %p54 = scmp.ne.s32.totalorder %s40, %s41
    %p55 = scmp.eq.s32.totalorder %s33, 3
    %p56 = por %p54, %p55
    %p58 = scmp.ne.s32.totalorder %s41, %s57
    %p59 = scmp.eq.s32.totalorder %s33, 0
    %p60 = por %p58, %p59
    %s61 = ssub.s32 %s27, %s34
    %p62 = scmp.eq.s32.totalorder %s61, 0
    %s64 = sadd.s32 %s63, 1
    %s65 = scalar_select %p62, %s63, %s64
    %p68 = pneg %p62
    %p69 = scmp.eq.s32.totalorder %s27, 3
    %p70 = por %p68, %p69
    %p71 = scmp.ne.s32.totalorder %s63, %s66
    %p72 = scmp.eq.s32.totalorder %s27, 0
    %p73 = por %p71, %p72
    %p74 = scmp.ne.s32.totalorder %s63, %s66
    %p75 = scmp.eq.s32.totalorder %s32, 3
    %p76 = por %p74, %p75
    %p77 = scmp.ne.s32.totalorder %s66, %s67
    %p78 = scmp.eq.s32.totalorder %s32, 0
    %p79 = por %p77, %p78
    %p80 = scmp.ne.s32.totalorder %s66, %s67
    %p81 = scmp.eq.s32.totalorder %s33, 3
    %p82 = por %p80, %p81
    %p84 = scmp.ne.s32.totalorder %s67, %s83
    %p85 = scmp.eq.s32.totalorder %s33, 0
    %p86 = por %p84, %p85
    %s87 = ssub.s32 %s27, %s34
    %p88 = scmp.eq.s32.totalorder %s87, 0
    %s90 = sadd.s32 %s89, 1
    %s91 = scalar_select %p88, %s89, %s90
    %p94 = pneg %p88
    %p95 = scmp.eq.s32.totalorder %s27, 3
    %p96 = por %p94, %p95
    %p97 = scmp.ne.s32.totalorder %s89, %s92
    %p98 = scmp.eq.s32.totalorder %s27, 0
    %p99 = por %p97, %p98
    %p100 = scmp.ne.s32.totalorder %s89, %s92
    %p101 = scmp.eq.s32.totalorder %s32, 3
    %p102 = por %p100, %p101
    %p103 = scmp.ne.s32.totalorder %s92, %s93
    %p104 = scmp.eq.s32.totalorder %s32, 0
    %p105 = por %p103, %p104
    %p106 = scmp.ne.s32.totalorder %s92, %s93
    %p107 = scmp.eq.s32.totalorder %s33, 3
    %p108 = por %p106, %p107
    %p110 = scmp.ne.s32.totalorder %s93, %s109
    %p111 = scmp.eq.s32.totalorder %s33, 0
    %p112 = por %p110, %p111
    %s113 = ssub.s32 %s27, %s34
    %p114 = scmp.eq.s32.totalorder %s113, 0
    %s116 = sadd.s32 %s115, 1
    %s117 = scalar_select %p114, %s115, %s116
    %p120 = pneg %p114
    %p121 = scmp.eq.s32.totalorder %s27, 3
    %p122 = por %p120, %p121
    %p123 = scmp.ne.s32.totalorder %s115, %s118
    %p124 = scmp.eq.s32.totalorder %s27, 0
    %p125 = por %p123, %p124
    %p126 = scmp.ne.s32.totalorder %s115, %s118
    %p127 = scmp.eq.s32.totalorder %s32, 3
    %p128 = por %p126, %p127
    %p129 = scmp.ne.s32.totalorder %s118, %s119
    %p130 = scmp.eq.s32.totalorder %s32, 0
    %p131 = por %p129, %p130
    %p132 = scmp.ne.s32.totalorder %s118, %s119
    %p133 = scmp.eq.s32.totalorder %s33, 3
    %p134 = por %p132, %p133
    %p136 = scmp.ne.s32.totalorder %s119, %s135
    %p137 = scmp.eq.s32.totalorder %s33, 0
    %p138 = por %p136, %p137
    %s139 = ssub.s32 %s27, %s34
    %p140 = scmp.eq.s32.totalorder %s139, 0
    %s142 = sadd.s32 %s141, 1
    %s143 = scalar_select %p140, %s141, %s142
    %p146 = pneg %p140
    %p147 = scmp.eq.s32.totalorder %s27, 3
    %p148 = por %p146, %p147
    %p149 = scmp.ne.s32.totalorder %s141, %s144
    %p150 = scmp.eq.s32.totalorder %s27, 0
    %p151 = por %p149, %p150
    %p152 = scmp.ne.s32.totalorder %s141, %s144
    %p153 = scmp.eq.s32.totalorder %s32, 3
    %p154 = por %p152, %p153
    %p155 = scmp.ne.s32.totalorder %s144, %s145
    %p156 = scmp.eq.s32.totalorder %s32, 0
    %p157 = por %p155, %p156
    %p158 = scmp.ne.s32.totalorder %s144, %s145
    %p159 = scmp.eq.s32.totalorder %s33, 3
    %p160 = por %p158, %p159
    %p162 = scmp.ne.s32.totalorder %s145, %s161
    %p163 = scmp.eq.s32.totalorder %s33, 0
    %p164 = por %p162, %p163
    %s165 = ssub.s32 %s27, %s34
    %p166 = scmp.eq.s32.totalorder %s165, 0
    %s168 = sadd.s32 %s167, 1
    %s169 = scalar_select %p166, %s167, %s168
    %p172 = pneg %p166
    %p173 = scmp.eq.s32.totalorder %s27, 3
    %p174 = por %p172, %p173
    %p175 = scmp.ne.s32.totalorder %s167, %s170
    %p176 = scmp.eq.s32.totalorder %s27, 0
    %p177 = por %p175, %p176
    %p178 = scmp.ne.s32.totalorder %s167, %s170
    %p179 = scmp.eq.s32.totalorder %s32, 3
    %p180 = por %p178, %p179
    %p181 = scmp.ne.s32.totalorder %s170, %s171
    %p182 = scmp.eq.s32.totalorder %s32, 0
    %p183 = por %p181, %p182
    %p184 = scmp.ne.s32.totalorder %s170, %s171
    %p185 = scmp.eq.s32.totalorder %s33, 3
    %p186 = por %p184, %p185
    %p188 = scmp.ne.s32.totalorder %s171, %s187
    %p189 = scmp.eq.s32.totalorder %s33, 0
    %p190 = por %p188, %p189
    %s191 = ssub.s32 %s27, %s34
    %p192 = scmp.eq.s32.totalorder %s191, 0
    %s194 = sadd.s32 %s193, 1
    %s195 = scalar_select %p192, %s193, %s194
    %p198 = pneg %p192
    %p199 = scmp.eq.s32.totalorder %s27, 3
    %p200 = por %p198, %p199
    %p201 = scmp.ne.s32.totalorder %s193, %s196
    %p202 = scmp.eq.s32.totalorder %s27, 0
    %p203 = por %p201, %p202
    %p204 = scmp.ne.s32.totalorder %s193, %s196
    %p205 = scmp.eq.s32.totalorder %s32, 3
    %p206 = por %p204, %p205
    %p207 = scmp.ne.s32.totalorder %s196, %s197
    %p208 = scmp.eq.s32.totalorder %s32, 0
    %p209 = por %p207, %p208
    %p210 = scmp.ne.s32.totalorder %s196, %s197
    %p211 = scmp.eq.s32.totalorder %s33, 3
    %p212 = por %p210, %p211
    %p214 = scmp.ne.s32.totalorder %s197, %s213
    %p215 = scmp.eq.s32.totalorder %s33, 0
    %p216 = por %p214, %p215
    %s217 = ssub.s32 %s27, %s34
    %p218 = scmp.eq.s32.totalorder %s217, 0
    %s220 = sadd.s32 %s219, 1
    %s221 = scalar_select %p218, %s219, %s220
    %p224 = pneg %p218
    %p225 = scmp.eq.s32.totalorder %s27, 3
    %p226 = por %p224, %p225
    %p227 = scmp.ne.s32.totalorder %s219, %s222
    %p228 = scmp.eq.s32.totalorder %s27, 0
    %p229 = por %p227, %p228
    %p230 = scmp.ne.s32.totalorder %s219, %s222
    %p231 = scmp.eq.s32.totalorder %s32, 3
    %p232 = por %p230, %p231
    %p233 = scmp.ne.s32.totalorder %s222, %s223
    %p234 = scmp.eq.s32.totalorder %s32, 0
    %p235 = por %p233, %p234
    %p236 = scmp.ne.s32.totalorder %s222, %s223
    %p237 = scmp.eq.s32.totalorder %s33, 3
    %p238 = por %p236, %p237
    %p240 = scmp.ne.s32.totalorder %s223, %s239
    %p241 = scmp.eq.s32.totalorder %s33, 0
    %p242 = por %p240, %p241
    %s244 = sadd.s32 %s243, 1
    %p247 = scmp.eq.s32.totalorder %s27, 3
    %p248 = scmp.ne.s32.totalorder %s243, %s245
    %p249 = scmp.eq.s32.totalorder %s27, 0
    %p250 = por %p248, %p249
    %p251 = scmp.ne.s32.totalorder %s243, %s245
    %p252 = scmp.eq.s32.totalorder %s32, 3
    %p253 = por %p251, %p252
    %p254 = scmp.ne.s32.totalorder %s245, %s246
    %p255 = scmp.eq.s32.totalorder %s32, 0
    %p256 = por %p254, %p255
    %p257 = scmp.ne.s32.totalorder %s245, %s246
    %p258 = scmp.eq.s32.totalorder %s33, 3
    %p259 = por %p257, %p258
    %p261 = scmp.ne.s32.totalorder %s246, %s260
    %p262 = scmp.eq.s32.totalorder %s33, 0
    %p263 = por %p261, %p262
    %s265 = sadd.s32 %s264, 1
    %p268 = scmp.eq.s32.totalorder %s27, 3
    %p269 = scmp.ne.s32.totalorder %s264, %s266
    %p270 = scmp.eq.s32.totalorder %s27, 0
    %p271 = por %p269, %p270
    %p272 = scmp.ne.s32.totalorder %s264, %s266
    %p273 = scmp.eq.s32.totalorder %s32, 3
    %p274 = por %p272, %p273
    %p275 = scmp.ne.s32.totalorder %s266, %s267
    %p276 = scmp.eq.s32.totalorder %s32, 0
    %p277 = por %p275, %p276
    %p278 = scmp.ne.s32.totalorder %s266, %s267
    %p279 = scmp.eq.s32.totalorder %s33, 3
    %p280 = por %p278, %p279
    %p282 = scmp.ne.s32.totalorder %s267, %s281
    %p283 = scmp.eq.s32.totalorder %s33, 0
    %p284 = por %p282, %p283
    %s286 = sadd.s32 %s285, 1
    %p289 = scmp.eq.s32.totalorder %s27, 3
    %p290 = scmp.ne.s32.totalorder %s285, %s287
    %p291 = scmp.eq.s32.totalorder %s27, 0
    %p292 = por %p290, %p291
    %p293 = scmp.ne.s32.totalorder %s285, %s287
    %p294 = scmp.eq.s32.totalorder %s32, 3
    %p295 = por %p293, %p294
    %p296 = scmp.ne.s32.totalorder %s287, %s288
    %p297 = scmp.eq.s32.totalorder %s32, 0
    %p298 = por %p296, %p297
    %p299 = scmp.ne.s32.totalorder %s287, %s288
    %p300 = scmp.eq.s32.totalorder %s33, 3
    %p301 = por %p299, %p300
    %p303 = scmp.ne.s32.totalorder %s288, %s302
    %p304 = scmp.eq.s32.totalorder %s33, 0
    %p305 = por %p303, %p304
    %s307 = sadd.s32 %s306, 1
    %p310 = scmp.eq.s32.totalorder %s27, 3
    %p311 = scmp.ne.s32.totalorder %s306, %s308
    %p312 = scmp.eq.s32.totalorder %s27, 0
    %p313 = por %p311, %p312
    %p314 = scmp.ne.s32.totalorder %s306, %s308
    %p315 = scmp.eq.s32.totalorder %s32, 3
    %p316 = por %p314, %p315
    %p317 = scmp.ne.s32.totalorder %s308, %s309
    %p318 = scmp.eq.s32.totalorder %s32, 0
    %p319 = por %p317, %p318
    %p320 = scmp.ne.s32.totalorder %s308, %s309
    %p321 = scmp.eq.s32.totalorder %s33, 3
    %p322 = por %p320, %p321
    %p324 = scmp.ne.s32.totalorder %s309, %s323
    %p325 = scmp.eq.s32.totalorder %s33, 0
    %p326 = por %p324, %p325
    %s328 = sadd.s32 %s327, 1
    %p331 = scmp.eq.s32.totalorder %s27, 3
    %p332 = scmp.ne.s32.totalorder %s327, %s329
    %p333 = scmp.eq.s32.totalorder %s27, 0
    %p334 = por %p332, %p333
    %p335 = scmp.ne.s32.totalorder %s327, %s329
    %p336 = scmp.eq.s32.totalorder %s32, 3
    %p337 = por %p335, %p336
    %p338 = scmp.ne.s32.totalorder %s329, %s330
    %p339 = scmp.eq.s32.totalorder %s32, 0
    %p340 = por %p338, %p339
    %p341 = scmp.ne.s32.totalorder %s329, %s330
    %p342 = scmp.eq.s32.totalorder %s33, 3
    %p343 = por %p341, %p342
    %p345 = scmp.ne.s32.totalorder %s330, %s344
    %p346 = scmp.eq.s32.totalorder %s33, 0
    %p347 = por %p345, %p346
    %s349 = sadd.s32 %s348, 1
    %p352 = scmp.eq.s32.totalorder %s27, 3
    %p353 = scmp.ne.s32.totalorder %s348, %s350
    %p354 = scmp.eq.s32.totalorder %s27, 0
    %p355 = por %p353, %p354
    %p356 = scmp.ne.s32.totalorder %s348, %s350
    %p357 = scmp.eq.s32.totalorder %s32, 3
    %p358 = por %p356, %p357
    %p359 = scmp.ne.s32.totalorder %s350, %s351
    %p360 = scmp.eq.s32.totalorder %s32, 0
    %p361 = por %p359, %p360
    %p362 = scmp.ne.s32.totalorder %s350, %s351
    %p363 = scmp.eq.s32.totalorder %s33, 3
    %p364 = por %p362, %p363
    %p366 = scmp.ne.s32.totalorder %s351, %s365
    %p367 = scmp.eq.s32.totalorder %s33, 0
    %p368 = por %p366, %p367
    %s370 = sadd.s32 %s369, 1
    %p373 = scmp.eq.s32.totalorder %s27, 3
    %p374 = scmp.ne.s32.totalorder %s369, %s371
    %p375 = scmp.eq.s32.totalorder %s27, 0
    %p376 = por %p374, %p375
    %p377 = scmp.ne.s32.totalorder %s369, %s371
    %p378 = scmp.eq.s32.totalorder %s32, 3
    %p379 = por %p377, %p378
    %p380 = scmp.ne.s32.totalorder %s371, %s372
    %p381 = scmp.eq.s32.totalorder %s32, 0
    %p382 = por %p380, %p381
    %p383 = scmp.ne.s32.totalorder %s371, %s372
    %p384 = scmp.eq.s32.totalorder %s33, 3
    %p385 = por %p383, %p384
    %p387 = scmp.ne.s32.totalorder %s372, %s386
    %p388 = scmp.eq.s32.totalorder %s33, 0
    %p389 = por %p387, %p388
    %s391 = sadd.s32 %s390, 1
    %p394 = scmp.eq.s32.totalorder %s27, 3
    %p395 = scmp.ne.s32.totalorder %s390, %s392
    %p396 = scmp.eq.s32.totalorder %s27, 0
    %p397 = por %p395, %p396
    %p398 = scmp.ne.s32.totalorder %s390, %s392
    %p399 = scmp.eq.s32.totalorder %s32, 3
    %p400 = por %p398, %p399
    %p401 = scmp.ne.s32.totalorder %s392, %s393
    %p402 = scmp.eq.s32.totalorder %s32, 0
    %p403 = por %p401, %p402
    %p404 = scmp.ne.s32.totalorder %s392, %s393
    %p405 = scmp.eq.s32.totalorder %s33, 3
    %p406 = por %p404, %p405
    %p408 = scmp.ne.s32.totalorder %s393, %s407
    %p409 = scmp.eq.s32.totalorder %s33, 0
    %p410 = por %p408, %p409
    %s412 = sadd.s32 %s411, 1
    %p415 = scmp.eq.s32.totalorder %s27, 3
    %p416 = scmp.ne.s32.totalorder %s411, %s413
    %p417 = scmp.eq.s32.totalorder %s27, 0
    %p418 = por %p416, %p417
    %p419 = scmp.ne.s32.totalorder %s411, %s413
    %p420 = scmp.eq.s32.totalorder %s32, 3
    %p421 = por %p419, %p420
    %p422 = scmp.ne.s32.totalorder %s413, %s414
    %p423 = scmp.eq.s32.totalorder %s32, 0
    %p424 = por %p422, %p423
    %p425 = scmp.ne.s32.totalorder %s413, %s414
    %p426 = scmp.eq.s32.totalorder %s33, 3
    %p427 = por %p425, %p426
    %p429 = scmp.ne.s32.totalorder %s414, %s428
    %p430 = scmp.eq.s32.totalorder %s33, 0
    %p431 = por %p429, %p430
    %s433 = sadd.s32 %s432, 1
    %p436 = scmp.eq.s32.totalorder %s27, 3
    %p437 = scmp.ne.s32.totalorder %s432, %s434
    %p438 = scmp.eq.s32.totalorder %s27, 0
    %p439 = por %p437, %p438
    %p440 = scmp.ne.s32.totalorder %s432, %s434
    %p441 = scmp.eq.s32.totalorder %s32, 3
    %p442 = por %p440, %p441
    %p443 = scmp.ne.s32.totalorder %s434, %s435
    %p444 = scmp.eq.s32.totalorder %s32, 0
    %p445 = por %p443, %p444
    %p446 = scmp.ne.s32.totalorder %s434, %s435
    %p447 = scmp.eq.s32.totalorder %s33, 3
    %p448 = por %p446, %p447
    %p450 = scmp.ne.s32.totalorder %s435, %s449
    %p451 = scmp.eq.s32.totalorder %s33, 0
    %p452 = por %p450, %p451
    %s454 = sadd.s32 %s453, 1
    %p457 = scmp.eq.s32.totalorder %s27, 3
    %p458 = scmp.ne.s32.totalorder %s453, %s455
    %p459 = scmp.eq.s32.totalorder %s27, 0
    %p460 = por %p458, %p459
    %p461 = scmp.ne.s32.totalorder %s453, %s455
    %p462 = scmp.eq.s32.totalorder %s32, 3
    %p463 = por %p461, %p462
    %p464 = scmp.ne.s32.totalorder %s455, %s456
    %p465 = scmp.eq.s32.totalorder %s32, 0
    %p466 = por %p464, %p465
    %p467 = scmp.ne.s32.totalorder %s455, %s456
    %p468 = scmp.eq.s32.totalorder %s33, 3
    %p469 = por %p467, %p468
    %p471 = scmp.ne.s32.totalorder %s456, %s470
    %p472 = scmp.eq.s32.totalorder %s33, 0
    %p473 = por %p471, %p472
    %s475 = sadd.s32 %s474, 1
    %p478 = scmp.eq.s32.totalorder %s27, 3
    %p479 = scmp.ne.s32.totalorder %s474, %s476
    %p480 = scmp.eq.s32.totalorder %s27, 0
    %p481 = por %p479, %p480
    %p482 = scmp.ne.s32.totalorder %s474, %s476
    %p483 = scmp.eq.s32.totalorder %s32, 3
    %p484 = por %p482, %p483
    %p485 = scmp.ne.s32.totalorder %s476, %s477
    %p486 = scmp.eq.s32.totalorder %s32, 0
    %p487 = por %p485, %p486
    %p488 = scmp.ne.s32.totalorder %s476, %s477
    %p489 = scmp.eq.s32.totalorder %s33, 3
    %p490 = por %p488, %p489
    %p492 = scmp.ne.s32.totalorder %s477, %s491
    %p493 = scmp.eq.s32.totalorder %s33, 0
    %p494 = por %p492, %p493
    %s496 = sadd.s32 %s495, 1
    %p499 = scmp.eq.s32.totalorder %s27, 3
    %p500 = scmp.ne.s32.totalorder %s495, %s497
    %p501 = scmp.eq.s32.totalorder %s27, 0
    %p502 = por %p500, %p501
    %p503 = scmp.ne.s32.totalorder %s495, %s497
    %p504 = scmp.eq.s32.totalorder %s32, 3
    %p505 = por %p503, %p504
    %p506 = scmp.ne.s32.totalorder %s497, %s498
    %p507 = scmp.eq.s32.totalorder %s32, 0
    %p508 = por %p506, %p507
    %p509 = scmp.ne.s32.totalorder %s497, %s498
    %p510 = scmp.eq.s32.totalorder %s33, 3
    %p511 = por %p509, %p510
    %p513 = scmp.ne.s32.totalorder %s498, %s512
    %p514 = scmp.eq.s32.totalorder %s33, 0
    %p515 = por %p513, %p514
    %s516 = ssub.s32 %s27, %s34
    %p517 = scmp.eq.s32.totalorder %s516, 0
    %s519 = sadd.s32 %s518, 1
    %s520 = scalar_select %p517, %s518, %s519
    %p523 = pneg %p517
    %p524 = scmp.eq.s32.totalorder %s27, 3
    %p525 = por %p523, %p524
    %p526 = scmp.ne.s32.totalorder %s518, %s521
    %p527 = scmp.eq.s32.totalorder %s27, 0
    %p528 = por %p526, %p527
    %p529 = scmp.ne.s32.totalorder %s518, %s521
    %p530 = scmp.eq.s32.totalorder %s32, 3
    %p531 = por %p529, %p530
    %p532 = scmp.ne.s32.totalorder %s521, %s522
    %p533 = scmp.eq.s32.totalorder %s32, 0
    %p534 = por %p532, %p533
    %p535 = scmp.ne.s32.totalorder %s521, %s522
    %p536 = scmp.eq.s32.totalorder %s33, 3
    %p537 = por %p535, %p536
    %p539 = scmp.ne.s32.totalorder %s522, %s538
    %p540 = scmp.eq.s32.totalorder %s33, 0
    %p541 = por %p539, %p540
    %p542 = scmp.le.s32.totalorder 1, %s27
    %p543 = scmp.lt.s32.totalorder %s27, 5
    %p544 = pnand %p542, %p543
    %p545 = pneg %p544
    // Predicated region
    $region9: #{han_forward.1} parent=5 // pred_check
      _
    $region10: #{han_forward.1} parent=5 // pred_check_branch
      %547 = sbr.rel (%p544) target = $region12
    $region11: #{han_forward.1} parent=5 // pred_region
      %s548 = ssub.s32 %s27, 1
      // Predicated region
      $region13: #{han_forward.1} parent=11 // pred_check
        %p549 = pneg %p256
      $region14: #{han_forward.1} parent=11 // pred_check_branch
        %551 = sbr.rel (%p549) target = $region16
      $region15: #{han_forward.1} parent=11 // pred_region
        _
      $region16: #{han_forward.1} parent=11 // pred_fallthru
        _
      // Predicated region
      $region17: #{han_forward.1} parent=11 // pred_check
        %p552 = pneg %p277
      $region18: #{han_forward.1} parent=11 // pred_check_branch
        %554 = sbr.rel (%p552) target = $region20
      $region19: #{han_forward.1} parent=11 // pred_region
        _
      $region20: #{han_forward.1} parent=11 // pred_fallthru
        _
      // Predicated region
      $region21: #{han_forward.1} parent=11 // pred_check
        %p555 = pneg %p298
      $region22: #{han_forward.1} parent=11 // pred_check_branch
        %557 = sbr.rel (%p555) target = $region24
      $region23: #{han_forward.1} parent=11 // pred_region
        _
      $region24: #{han_forward.1} parent=11 // pred_fallthru
        _
      // Predicated region
      $region25: #{han_forward.1} parent=11 // pred_check
        %p558 = pneg %p319
      $region26: #{han_forward.1} parent=11 // pred_check_branch
        %560 = sbr.rel (%p558) target = $region28
      $region27: #{han_forward.1} parent=11 // pred_region
        _
      $region28: #{han_forward.1} parent=11 // pred_fallthru
        _
      // Predicated region
      $region29: #{han_forward.1} parent=11 // pred_check
        %p561 = pneg %p340
      $region30: #{han_forward.1} parent=11 // pred_check_branch
        %563 = sbr.rel (%p561) target = $region32
      $region31: #{han_forward.1} parent=11 // pred_region
        _
      $region32: #{han_forward.1} parent=11 // pred_fallthru
        _
      // Predicated region
      $region33: #{han_forward.1} parent=11 // pred_check
        %p564 = pneg %p361
      $region34: #{han_forward.1} parent=11 // pred_check_branch
        %566 = sbr.rel (%p564) target = $region36
      $region35: #{han_forward.1} parent=11 // pred_region
        _
      $region36: #{han_forward.1} parent=11 // pred_fallthru
        _
      // Predicated region
      $region37: #{han_forward.1} parent=11 // pred_check
        %p567 = pneg %p382
      $region38: #{han_forward.1} parent=11 // pred_check_branch
        %569 = sbr.rel (%p567) target = $region40
      $region39: #{han_forward.1} parent=11 // pred_region
        _
      $region40: #{han_forward.1} parent=11 // pred_fallthru
        _
      // Predicated region
      $region41: #{han_forward.1} parent=11 // pred_check
        %p570 = pneg %p403
      $region42: #{han_forward.1} parent=11 // pred_check_branch
        %572 = sbr.rel (%p570) target = $region44
      $region43: #{han_forward.1} parent=11 // pred_region
        _
      $region44: #{han_forward.1} parent=11 // pred_fallthru
        _
      // Predicated region
      $region45: #{han_forward.1} parent=11 // pred_check
        %p573 = pneg %p424
      $region46: #{han_forward.1} parent=11 // pred_check_branch
        %575 = sbr.rel (%p573) target = $region48
      $region47: #{han_forward.1} parent=11 // pred_region
        _
      $region48: #{han_forward.1} parent=11 // pred_fallthru
        _
      // Predicated region
      $region49: #{han_forward.1} parent=11 // pred_check
        %p576 = pneg %p445
      $region50: #{han_forward.1} parent=11 // pred_check_branch
        %578 = sbr.rel (%p576) target = $region52
      $region51: #{han_forward.1} parent=11 // pred_region
        _
      $region52: #{han_forward.1} parent=11 // pred_fallthru
        _
      // Predicated region
      $region53: #{han_forward.1} parent=11 // pred_check
        %p579 = pneg %p466
      $region54: #{han_forward.1} parent=11 // pred_check_branch
        %581 = sbr.rel (%p579) target = $region56
      $region55: #{han_forward.1} parent=11 // pred_region
        _
      $region56: #{han_forward.1} parent=11 // pred_fallthru
        _
      // Predicated region
      $region57: #{han_forward.1} parent=11 // pred_check
        %p582 = pneg %p487
      $region58: #{han_forward.1} parent=11 // pred_check_branch
        %584 = sbr.rel (%p582) target = $region60
      $region59: #{han_forward.1} parent=11 // pred_region
        _
      $region60: #{han_forward.1} parent=11 // pred_fallthru
        _
      // Predicated region
      $region61: #{han_forward.1} parent=11 // pred_check
        %p585 = pneg %p508
      $region62: #{han_forward.1} parent=11 // pred_check_branch
        %587 = sbr.rel (%p585) target = $region64
      $region63: #{han_forward.1} parent=11 // pred_region
        _
      $region64: #{han_forward.1} parent=11 // pred_fallthru
        _
    $region12: #{han_forward.1} parent=5 // pred_fallthru
      _
    %p588 = scmp.lt.s32.totalorder %s27, 4
    // Predicated region
    $region65: #{han_forward.1} parent=5 // pred_check
      %p589 = pneg %p588
    $region66: #{han_forward.1} parent=5 // pred_check_branch
      %591 = sbr.rel (%p589) target = $region68
    $region67: #{han_forward.1} parent=5 // pred_region
      // Predicated region
      $region69: #{han_forward.1} parent=67 // pred_check
        %p592 = pneg %p47
      $region70: #{han_forward.1} parent=67 // pred_check_branch
        %594 = sbr.rel (%p592) target = $region72
      $region71: #{han_forward.1} parent=67 // pred_region
        %p595 = scmp.lt.s32.totalorder %s27, 3
        %s596 = scalar_select %p595, %s27, 3
        %s597 = smul.addr %s596, 16
        %s598 = smul.addr %s597, 8
        %s599 = scalar_lea.vmem %s0, %s598
      $region72: #{han_forward.1} parent=67 // pred_fallthru
        _
      // Predicated region
      $region73: #{han_forward.1} parent=67 // pred_check
        %p600 = pneg %p73
      $region74: #{han_forward.1} parent=67 // pred_check_branch
        %602 = sbr.rel (%p600) target = $region76
      $region75: #{han_forward.1} parent=67 // pred_region
        %p603 = scmp.lt.s32.totalorder %s27, 3
        %s604 = scalar_select %p603, %s27, 3
        %s605 = smul.addr %s604, 16
        %s606 = smul.addr %s605, 8
        %s607 = scalar_lea.vmem %s1, %s606
      $region76: #{han_forward.1} parent=67 // pred_fallthru
        _
      // Predicated region
      $region77: #{han_forward.1} parent=67 // pred_check
        %p608 = pneg %p99
      $region78: #{han_forward.1} parent=67 // pred_check_branch
        %610 = sbr.rel (%p608) target = $region80
      $region79: #{han_forward.1} parent=67 // pred_region
        %p611 = scmp.lt.s32.totalorder %s27, 3
        %s612 = scalar_select %p611, %s27, 3
        %s613 = smul.addr %s612, 16
        %s614 = smul.addr %s613, 8
        %s615 = scalar_lea.vmem %s2, %s614
      $region80: #{han_forward.1} parent=67 // pred_fallthru
        _
      // Predicated region
      $region81: #{han_forward.1} parent=67 // pred_check
        %p616 = pneg %p125
      $region82: #{han_forward.1} parent=67 // pred_check_branch
        %618 = sbr.rel (%p616) target = $region84
      $region83: #{han_forward.1} parent=67 // pred_region
        %p619 = scmp.lt.s32.totalorder %s27, 3
        %s620 = scalar_select %p619, %s27, 3
        %s621 = smul.addr %s620, 16
        %s622 = smul.addr %s621, 8
        %s623 = scalar_lea.vmem %s3, %s622
      $region84: #{han_forward.1} parent=67 // pred_fallthru
        _
      // Predicated region
      $region85: #{han_forward.1} parent=67 // pred_check
        %p624 = pneg %p151
      $region86: #{han_forward.1} parent=67 // pred_check_branch
        %626 = sbr.rel (%p624) target = $region88
      $region87: #{han_forward.1} parent=67 // pred_region
        %p627 = scmp.lt.s32.totalorder %s27, 3
        %s628 = scalar_select %p627, %s27, 3
        %s629 = smul.addr %s628, 2
        %s630 = smul.addr %s629, 8
        %s631 = scalar_lea.vmem %s4, %s630
      $region88: #{han_forward.1} parent=67 // pred_fallthru
        _
      // Predicated region
      $region89: #{han_forward.1} parent=67 // pred_check
        %p632 = pneg %p177
      $region90: #{han_forward.1} parent=67 // pred_check_branch
        %634 = sbr.rel (%p632) target = $region92
      $region91: #{han_forward.1} parent=67 // pred_region
        %p635 = scmp.lt.s32.totalorder %s27, 3
        %s636 = scalar_select %p635, %s27, 3
        %s637 = smul.addr %s636, 2
        %s638 = smul.addr %s637, 8
        %s639 = scalar_lea.vmem %s5, %s638
      $region92: #{han_forward.1} parent=67 // pred_fallthru
        _
      // Predicated region
      $region93: #{han_forward.1} parent=67 // pred_check
        %p640 = pneg %p203
      $region94: #{han_forward.1} parent=67 // pred_check_branch
        %642 = sbr.rel (%p640) target = $region96
      $region95: #{han_forward.1} parent=67 // pred_region
        %p643 = scmp.lt.s32.totalorder %s27, 3
        %s644 = scalar_select %p643, %s27, 3
        %s645 = smul.addr %s644, 2
        %s646 = smul.addr %s645, 8
        %s647 = scalar_lea.vmem %s6, %s646
      $region96: #{han_forward.1} parent=67 // pred_fallthru
        _
      // Predicated region
      $region97: #{han_forward.1} parent=67 // pred_check
        %p648 = pneg %p229
      $region98: #{han_forward.1} parent=67 // pred_check_branch
        %650 = sbr.rel (%p648) target = $region100
      $region99: #{han_forward.1} parent=67 // pred_region
        %p651 = scmp.lt.s32.totalorder %s27, 3
        %s652 = scalar_select %p651, %s27, 3
        %s653 = smul.addr %s652, 2
        %s654 = smul.addr %s653, 8
        %s655 = scalar_lea.vmem %s7, %s654
      $region100: #{han_forward.1} parent=67 // pred_fallthru
        _
    $region68: #{han_forward.1} parent=5 // pred_fallthru
      _
    %p656 = scmp.le.s32.totalorder 1, %s27
    %p657 = scmp.lt.s32.totalorder %s27, 5
    %p658 = pnand %p656, %p657
    %p659 = pneg %p658
    // Predicated region
    $region101: #{han_forward.1} parent=5 // pred_check
      _
    $region102: #{han_forward.1} parent=5 // pred_check_branch
      %661 = sbr.rel (%p658) target = $region104
    $region103: #{han_forward.1} parent=5 // pred_region
      %s662 = ssub.s32 %s27, 1
      %p663 = scmp.lt.s32.totalorder %s32, 3
      %s664 = scalar_select %p663, %s32, 3
      %s665 = smul.addr %s664, 16
      %s666 = smul.addr %s665, 8
      %s667 = scalar_lea.vmem %s0, %s666
      %p668 = pneg %p53
      %p669 = pneg %p50
      %p670 = scmp.lt.s32.totalorder %s32, 3
      %s671 = scalar_select %p670, %s32, 3
      %s672 = smul.addr %s671, 16
      %s673 = smul.addr %s672, 8
      %s674 = scalar_lea.vmem %s1, %s673
      %p675 = pneg %p79
      %p676 = pneg %p76
      %p677 = scmp.lt.s32.totalorder %s32, 3
      %s678 = scalar_select %p677, %s32, 3
      %s679 = smul.addr %s678, 16
      %s680 = smul.addr %s679, 8
      %s681 = scalar_lea.vmem %s2, %s680
      %p682 = pneg %p105
      %p683 = pneg %p102
      %p684 = scmp.lt.s32.totalorder %s32, 3
      %s685 = scalar_select %p684, %s32, 3
      %s686 = smul.addr %s685, 16
      %s687 = smul.addr %s686, 8
      %s688 = scalar_lea.vmem %s3, %s687
      %p689 = pneg %p131
      %p690 = pneg %p128
      %p691 = scmp.lt.s32.totalorder %s32, 3
      %s692 = scalar_select %p691, %s32, 3
      %s693 = smul.addr %s692, 2
      %s694 = smul.addr %s693, 8
      %s695 = scalar_lea.vmem %s4, %s694
      %p696 = pneg %p157
      %p697 = pneg %p154
      %p698 = scmp.lt.s32.totalorder %s32, 3
      %s699 = scalar_select %p698, %s32, 3
      %s700 = smul.addr %s699, 2
      %s701 = smul.addr %s700, 8
      %s702 = scalar_lea.vmem %s5, %s701
      %p703 = pneg %p183
      %p704 = pneg %p180
      %p705 = scmp.lt.s32.totalorder %s32, 3
      %s706 = scalar_select %p705, %s32, 3
      %s707 = smul.addr %s706, 2
      %s708 = smul.addr %s707, 8
      %s709 = scalar_lea.vmem %s6, %s708
      %p710 = pneg %p209
      %p711 = pneg %p206
      %p712 = scmp.lt.s32.totalorder %s32, 3
      %s713 = scalar_select %p712, %s32, 3
      %s714 = smul.addr %s713, 2
      %s715 = smul.addr %s714, 8
      %s716 = scalar_lea.vmem %s7, %s715
      %p717 = pneg %p235
      %p718 = pneg %p232
      %p719 = pneg %p256
      %p720 = pneg %p253
      %p721 = pneg %p277
      %p722 = pneg %p274
      %p723 = pneg %p298
      %p724 = pneg %p295
      %p725 = pneg %p319
      %p726 = pneg %p316
      %p727 = pneg %p340
      %p728 = pneg %p337
      %p729 = pneg %p361
      %p730 = pneg %p358
      %p731 = pneg %p382
      %p732 = pneg %p379
      %p733 = pneg %p403
      %p734 = pneg %p400
      %p735 = pneg %p424
      %p736 = pneg %p421
      %p737 = pneg %p445
      %p738 = pneg %p442
      %p739 = pneg %p466
      %p740 = pneg %p463
      %p741 = pneg %p487
      %p742 = pneg %p484
      %p743 = pneg %p508
      %p744 = pneg %p505
      %p745 = pneg %p534
      %p746 = pneg %p531
      %p747 = scmp.lt.s32.totalorder %s32, 3
      %s748 = scalar_select %p747, %s32, 3
      %s749 = smul.addr %s748, 2
      %s750 = smul.addr %s749, 8
      %s751 = scalar_lea.vmem %s21, %s750
      %p752 = scmp.lt.s32.totalorder %s32, 3
      %s753 = scalar_select %p752, %s32, 3
      %s754 = smul.addr %s753, 16
      %s755 = smul.addr %s754, 8
      %s756 = scalar_lea.vmem %s0, %s755
      %p757 = scmp.lt.s32.totalorder %s32, 3
      %s758 = scalar_select %p757, %s32, 3
      %s759 = smul.addr %s758, 16
      %s760 = smul.addr %s759, 8
      %s761 = scalar_lea.vmem %s1, %s760
      %p762 = scmp.lt.s32.totalorder %s32, 3
      %s763 = scalar_select %p762, %s32, 3
      %s764 = smul.addr %s763, 16
      %s765 = smul.addr %s764, 8
      %s766 = scalar_lea.vmem %s2, %s765
      %p767 = scmp.lt.s32.totalorder %s32, 3
      %s768 = scalar_select %p767, %s32, 3
      %s769 = smul.addr %s768, 16
      %s770 = smul.addr %s769, 8
      %s771 = scalar_lea.vmem %s3, %s770
      %p772 = scmp.lt.s32.totalorder %s32, 3
      %s773 = scalar_select %p772, %s32, 3
      %s774 = smul.addr %s773, 2
      %s775 = smul.addr %s774, 8
      %s776 = scalar_lea.vmem %s4, %s775
      %p777 = scmp.lt.s32.totalorder %s32, 3
      %s778 = scalar_select %p777, %s32, 3
      %s779 = smul.addr %s778, 2
      %s780 = smul.addr %s779, 8
      %s781 = scalar_lea.vmem %s5, %s780
      %p782 = scmp.lt.s32.totalorder %s32, 3
      %s783 = scalar_select %p782, %s32, 3
      %s784 = smul.addr %s783, 2
      %s785 = smul.addr %s784, 8
      %s786 = scalar_lea.vmem %s6, %s785
      %p787 = scmp.lt.s32.totalorder %s32, 3
      %s788 = scalar_select %p787, %s32, 3
      %s789 = smul.addr %s788, 2
      %s790 = smul.addr %s789, 8
      %s791 = scalar_lea.vmem %s7, %s790
      %p792 = scmp.lt.s32.totalorder %s32, 3
      %s793 = scalar_select %p792, %s32, 3
      %s794 = smul.addr %s793, 2
      %s795 = smul.addr %s794, 8
      %s796 = scalar_lea.vmem %s21, %s795
      %v798 = vld [vmem:[%s756] sm:$0xff]
      %v799 = vld [vmem:[%s756 + $0x8] sm:$0xff]
      %v800 = vld [vmem:[%s756 + $0x10] sm:$0xff]
      %v801 = vld [vmem:[%s756 + $0x18] sm:$0xff]
      %v802 = vld [vmem:[%s756 + $0x20] sm:$0xff]
      %v803 = vld [vmem:[%s756 + $0x28] sm:$0xff]
      %v804 = vld [vmem:[%s756 + $0x30] sm:$0xff]
      %v805 = vld [vmem:[%s756 + $0x38] sm:$0xff]
      %v806 = vld [vmem:[%s756 + $0x40] sm:$0xff]
      %v807 = vld [vmem:[%s756 + $0x48] sm:$0xff]
      %v808 = vld [vmem:[%s756 + $0x50] sm:$0xff]
      %v809 = vld [vmem:[%s756 + $0x58] sm:$0xff]
      %v810 = vld [vmem:[%s756 + $0x60] sm:$0xff]
      %v811 = vld [vmem:[%s756 + $0x68] sm:$0xff]
      %v812 = vld [vmem:[%s756 + $0x70] sm:$0xff]
      %v813 = vld [vmem:[%s756 + $0x78] sm:$0xff]
      %v814 = vld [vmem:[%s8] sm:$0xff]
      %v815 = vld [vmem:[%s8 + $0x8] sm:$0xff]
      %v816 = vld [vmem:[%s8 + $0x10] sm:$0xff]
      %v817 = vld [vmem:[%s8 + $0x18] sm:$0xff]
      %v818 = vld [vmem:[%s8 + $0x20] sm:$0xff]
      %v819 = vld [vmem:[%s8 + $0x28] sm:$0xff]
      %v820 = vld [vmem:[%s8 + $0x30] sm:$0xff]
      %v821 = vld [vmem:[%s8 + $0x38] sm:$0xff]
      %v822 = vld [vmem:[%s8 + $0x40] sm:$0xff]
      %v823 = vld [vmem:[%s8 + $0x48] sm:$0xff]
      %v824 = vld [vmem:[%s8 + $0x50] sm:$0xff]
      %v825 = vld [vmem:[%s8 + $0x58] sm:$0xff]
      %v826 = vld [vmem:[%s8 + $0x60] sm:$0xff]
      %v827 = vld [vmem:[%s8 + $0x68] sm:$0xff]
      %v828 = vld [vmem:[%s8 + $0x70] sm:$0xff]
      %v829 = vld [vmem:[%s8 + $0x78] sm:$0xff]
      %v830 = vld [vmem:[%s8 + $0x80] sm:$0xff]
      %v831 = vld [vmem:[%s8 + $0x88] sm:$0xff]
      %v832 = vld [vmem:[%s8 + $0x90] sm:$0xff]
      %v833 = vld [vmem:[%s8 + $0x98] sm:$0xff]
      %v834 = vld [vmem:[%s8 + $0xa0] sm:$0xff]
      %v835 = vld [vmem:[%s8 + $0xa8] sm:$0xff]
      %v836 = vld [vmem:[%s8 + $0xb0] sm:$0xff]
      %v837 = vld [vmem:[%s8 + $0xb8] sm:$0xff]
      %v838 = vld [vmem:[%s8 + $0xc0] sm:$0xff]
      %v839 = vld [vmem:[%s8 + $0xc8] sm:$0xff]
      %v840 = vld [vmem:[%s8 + $0xd0] sm:$0xff]
      %v841 = vld [vmem:[%s8 + $0xd8] sm:$0xff]
      %v842 = vld [vmem:[%s8 + $0xe0] sm:$0xff]
      %v843 = vld [vmem:[%s8 + $0xe8] sm:$0xff]
      %v844 = vld [vmem:[%s8 + $0xf0] sm:$0xff]
      %v845 = vld [vmem:[%s8 + $0xf8] sm:$0xff]
      %v846 = vld [vmem:[%s9] sm:$0x3]
      %v848 = vlaneseq
      %v849 = vshrl.u32 %v848, 7
      %v850 = vsub.s32 0, %v849
      %v851 = vrot.slane %v846, %v850
      %v852 = vlaneseq
      %v853 = vshrl.u32 %v852, 7
      %v854 = vsub.s32 1, %v853
      %v855 = vrot.slane %v846, %v854
      %858 = vmatprep.subr.mxu0 %v815
      %859 = vmatpush1.msra.mxu0 %v814
      %860 = vmatprep.subr.mxu0 %v817
      %861 = vmatpush1.msra.mxu0 %v816
      %862 = vmatprep.subr.mxu0 %v819
      %863 = vmatpush1.msra.mxu0 %v818
      %864 = vmatprep.subr.mxu0 %v821
      %865 = vmatpush1.msra.mxu0 %v820
      %866 = vmatprep.subr.mxu0 %v823
      %867 = vmatpush1.msra.mxu0 %v822
      %868 = vmatprep.subr.mxu0 %v825
      %869 = vmatpush1.msra.mxu0 %v824
      %870 = vmatprep.subr.mxu0 %v827
      %871 = vmatpush1.msra.mxu0 %v826
      %872 = vmatprep.subr.mxu0 %v829
      %873 = vmatpush1.msra.mxu0 %v828
      %874 = vmatprep.subr.mxu0 %v831
      %875 = vmatpush1.msra.mxu0 %v830
      %876 = vmatprep.subr.mxu0 %v833
      %877 = vmatpush1.msra.mxu0 %v832
      %878 = vmatprep.subr.mxu0 %v835
      %879 = vmatpush1.msra.mxu0 %v834
      %880 = vmatprep.subr.mxu0 %v837
      %881 = vmatpush1.msra.mxu0 %v836
      %882 = vmatprep.subr.mxu0 %v839
      %883 = vmatpush1.msra.mxu0 %v838
      %884 = vmatprep.subr.mxu0 %v841
      %885 = vmatpush1.msra.mxu0 %v840
      %886 = vmatprep.subr.mxu0 %v843
      %887 = vmatpush1.msra.mxu0 %v842
      %888 = vmatprep.subr.mxu0 %v845
      %889 = vmatpush1.msra.mxu0 %v844
      %890 = vmatprep.subr.mxu0 0.0
      %891 = vmatpush1.msra.mxu0 0.0
      %892 = vmatprep.subr.mxu0 0.0
      %893 = vmatpush1.msra.mxu0 0.0
      %894 = vmatprep.subr.mxu0 0.0
      %895 = vmatpush1.msra.mxu0 0.0
      %896 = vmatprep.subr.mxu0 0.0
      %897 = vmatpush1.msra.mxu0 0.0
      %898 = vmatprep.subr.mxu0 0.0
      %899 = vmatpush1.msra.mxu0 0.0
      %900 = vmatprep.subr.mxu0 0.0
      %901 = vmatpush1.msra.mxu0 0.0
      %902 = vmatprep.subr.mxu0 0.0
      %903 = vmatpush1.msra.mxu0 0.0
      %904 = vmatprep.subr.mxu0 0.0
      %905 = vmatpush1.msra.mxu0 0.0
      %906 = vmatprep.subr.mxu0 0.0
      %907 = vmatpush1.msra.mxu0 0.0
      %908 = vmatprep.subr.mxu0 0.0
      %909 = vmatpush1.msra.mxu0 0.0
      %910 = vmatprep.subr.mxu0 0.0
      %911 = vmatpush1.msra.mxu0 0.0
      %912 = vmatprep.subr.mxu0 0.0
      %913 = vmatpush1.msra.mxu0 0.0
      %914 = vmatprep.subr.mxu0 0.0
      %915 = vmatpush1.msra.mxu0 0.0
      %916 = vmatprep.subr.mxu0 0.0
      %917 = vmatpush1.msra.mxu0 0.0
      %918 = vmatprep.subr.mxu0 0.0
      %919 = vmatpush1.msra.mxu0 0.0
      %920 = vmatprep.subr.mxu0 0.0
      %921 = vmatpush1.msra.mxu0 0.0
      %922 = vmatprep.mubr.f32.mxu0 0.0
      %923 = vmatmul.mubr.f32.gmra.mrb[0].mxu0 %v798
      %v924 = vpop.f32.mrb[0].mxu0
      %v925 = vadd.f32 %v851, %v924
      %v926 = vpop.f32.mrb[0].mxu0
      %v927 = vadd.f32 %v855, %v926
      %928 = vmatprep.mubr.f32.mxu0 0.0
      %929 = vmatmul.mubr.f32.gmra.mrb[0].mxu0 %v799
      %v930 = vpop.f32.mrb[0].mxu0
      %v931 = vadd.f32 %v851, %v930
      %v932 = vpop.f32.mrb[0].mxu0
      %v933 = vadd.f32 %v855, %v932
      %934 = vmatprep.mubr.f32.mxu0 0.0
      %935 = vmatmul.mubr.f32.gmra.mrb[0].mxu0 %v800
      %v936 = vpop.f32.mrb[0].mxu0
      %v937 = vadd.f32 %v851, %v936
      %v938 = vpop.f32.mrb[0].mxu0
      %939 = vmatprep.mubr.f32.mxu0 0.0
      %940 = vmatmul.mubr.f32.gmra.mrb[0].mxu0 %v801
      %v941 = vpop.f32.mrb[0].mxu0
      %v942 = vadd.f32 %v851, %v941
      %v943 = vpop.f32.mrb[0].mxu0
      %944 = vmatprep.mubr.f32.mxu0 0.0
      %945 = vmatmul.mubr.f32.gmra.mrb[0].mxu0 %v802
      %v946 = vpop.f32.mrb[0].mxu0
      %v947 = vadd.f32 %v851, %v946
      %v948 = vpop.f32.mrb[0].mxu0
      %949 = vmatprep.mubr.f32.mxu0 0.0
      %950 = vmatmul.mubr.f32.gmra.mrb[0].mxu0 %v803
      %v951 = vpop.f32.mrb[0].mxu0
      %v952 = vadd.f32 %v851, %v951
      %v953 = vpop.f32.mrb[0].mxu0
      %954 = vmatprep.mubr.f32.mxu0 0.0
      %955 = vmatmul.mubr.f32.gmra.mrb[0].mxu0 %v804
      %v956 = vpop.f32.mrb[0].mxu0
      %v957 = vadd.f32 %v851, %v956
      %v958 = vpop.f32.mrb[0].mxu0
      %959 = vmatprep.mubr.f32.mxu0 0.0
      %960 = vmatmul.mubr.f32.gmra.mrb[0].mxu0 %v805
      %v961 = vpop.f32.mrb[0].mxu0
      %v962 = vadd.f32 %v851, %v961
      %v963 = vpop.f32.mrb[0].mxu0
      %964 = vmatprep.mubr.f32.mxu0 0.0
      %965 = vmatmul.mubr.f32.gmra.mrb[0].mxu0 %v806
      %v966 = vpop.f32.mrb[0].mxu0
      %v967 = vadd.f32 %v851, %v966
      %v968 = vpop.f32.mrb[0].mxu0
      %969 = vmatprep.mubr.f32.mxu0 0.0
      %970 = vmatmul.mubr.f32.gmra.mrb[0].mxu0 %v807
      %v971 = vpop.f32.mrb[0].mxu0
      %v972 = vadd.f32 %v851, %v971
      %v973 = vpop.f32.mrb[0].mxu0
      %974 = vmatprep.mubr.f32.mxu0 0.0
      %975 = vmatmul.mubr.f32.gmra.mrb[0].mxu0 %v808
      %v976 = vpop.f32.mrb[0].mxu0
      %v977 = vadd.f32 %v851, %v976
      %v978 = vpop.f32.mrb[0].mxu0
      %979 = vmatprep.mubr.f32.mxu0 0.0
      %980 = vmatmul.mubr.f32.gmra.mrb[0].mxu0 %v809
      %v981 = vpop.f32.mrb[0].mxu0
      %v982 = vadd.f32 %v851, %v981
      %v983 = vpop.f32.mrb[0].mxu0
      %984 = vmatprep.mubr.f32.mxu0 0.0
      %985 = vmatmul.mubr.f32.gmra.mrb[0].mxu0 %v810
      %v986 = vpop.f32.mrb[0].mxu0
      %v987 = vadd.f32 %v851, %v986
      %v988 = vpop.f32.mrb[0].mxu0
      %989 = vmatprep.mubr.f32.mxu0 0.0
      %990 = vmatmul.mubr.f32.gmra.mrb[0].mxu0 %v811
      %v991 = vpop.f32.mrb[0].mxu0
      %v992 = vadd.f32 %v851, %v991
      %v993 = vpop.f32.mrb[0].mxu0
      %994 = vmatprep.mubr.f32.mxu0 0.0
      %995 = vmatmul.mubr.f32.gmra.mrb[0].mxu0 %v812
      %v996 = vpop.f32.mrb[0].mxu0
      %v997 = vadd.f32 %v851, %v996
      %v998 = vpop.f32.mrb[0].mxu0
      %999 = vmatprep.mubr.f32.mxu0 0.0
      %1000 = vmatmul.mubr.f32.gmra.mrb[0].mxu0 %v813
      %v1001 = vpop.f32.mrb[0].mxu0
      %v1002 = vadd.f32 %v851, %v1001
      %v1003 = vpop.f32.mrb[0].mxu0
      %1004 = vdwg.mxu0
      %v1005 = vld [vmem:[%s766] sm:$0xff]
      %v1006 = vld [vmem:[%s766 + $0x8] sm:$0xff]
      %v1007 = vld [vmem:[%s766 + $0x10] sm:$0xff]
      %v1008 = vld [vmem:[%s766 + $0x18] sm:$0xff]
      %v1009 = vld [vmem:[%s766 + $0x20] sm:$0xff]
      %v1010 = vld [vmem:[%s766 + $0x28] sm:$0xff]
      %v1011 = vld [vmem:[%s766 + $0x30] sm:$0xff]
      %v1012 = vld [vmem:[%s766 + $0x38] sm:$0xff]
      %v1013 = vld [vmem:[%s766 + $0x40] sm:$0xff]
      %v1014 = vld [vmem:[%s766 + $0x48] sm:$0xff]
      %v1015 = vld [vmem:[%s766 + $0x50] sm:$0xff]
      %v1016 = vld [vmem:[%s766 + $0x58] sm:$0xff]
      %v1017 = vld [vmem:[%s766 + $0x60] sm:$0xff]
      %v1018 = vld [vmem:[%s766 + $0x68] sm:$0xff]
      %v1019 = vld [vmem:[%s766 + $0x70] sm:$0xff]
      %v1020 = vld [vmem:[%s766 + $0x78] sm:$0xff]
      %v1021 = vld [vmem:[%s10] sm:$0xff]
      %v1022 = vld [vmem:[%s10 + $0x8] sm:$0xff]
      %v1023 = vld [vmem:[%s10 + $0x10] sm:$0xff]
      %v1024 = vld [vmem:[%s10 + $0x18] sm:$0xff]
      %v1025 = vld [vmem:[%s10 + $0x20] sm:$0xff]
      %v1026 = vld [vmem:[%s10 + $0x28] sm:$0xff]
      %v1027 = vld [vmem:[%s10 + $0x30] sm:$0xff]
      %v1028 = vld [vmem:[%s10 + $0x38] sm:$0xff]
      %v1029 = vld [vmem:[%s10 + $0x40] sm:$0xff]
      %v1030 = vld [vmem:[%s10 + $0x48] sm:$0xff]
      %v1031 = vld [vmem:[%s10 + $0x50] sm:$0xff]
      %v1032 = vld [vmem:[%s10 + $0x58] sm:$0xff]
      %v1033 = vld [vmem:[%s10 + $0x60] sm:$0xff]
      %v1034 = vld [vmem:[%s10 + $0x68] sm:$0xff]
      %v1035 = vld [vmem:[%s10 + $0x70] sm:$0xff]
      %v1036 = vld [vmem:[%s10 + $0x78] sm:$0xff]
      %v1037 = vld [vmem:[%s11] sm:$0x1]
      %v1039 = vlaneseq
      %v1040 = vshrl.u32 %v1039, 7
      %v1041 = vsub.s32 0, %v1040
      %v1042 = vrot.slane %v1037, %v1041
      %1044 = vmatprep.subr.mxu0 0.0
      %1045 = vmatpush1.msra.mxu0 %v1021
      %1046 = vmatprep.subr.mxu0 0.0
      %1047 = vmatpush1.msra.mxu0 %v1022
      %1048 = vmatprep.subr.mxu0 0.0
      %1049 = vmatpush1.msra.mxu0 %v1023
      %1050 = vmatprep.subr.mxu0 0.0
      %1051 = vmatpush1.msra.mxu0 %v1024
      %1052 = vmatprep.subr.mxu0 0.0
      %1053 = vmatpush1.msra.mxu0 %v1025
      %1054 = vmatprep.subr.mxu0 0.0
      %1055 = vmatpush1.msra.mxu0 %v1026
      %1056 = vmatprep.subr.mxu0 0.0
      %1057 = vmatpush1.msra.mxu0 %v1027
      %1058 = vmatprep.subr.mxu0 0.0
      %1059 = vmatpush1.msra.mxu0 %v1028
      %1060 = vmatprep.subr.mxu0 0.0
      %1061 = vmatpush1.msra.mxu0 %v1029
      %1062 = vmatprep.subr.mxu0 0.0
      %1063 = vmatpush1.msra.mxu0 %v1030
      %1064 = vmatprep.subr.mxu0 0.0
      %1065 = vmatpush1.msra.mxu0 %v1031
      %1066 = vmatprep.subr.mxu0 0.0
      %1067 = vmatpush1.msra.mxu0 %v1032
      %1068 = vmatprep.subr.mxu0 0.0
      %1069 = vmatpush1.msra.mxu0 %v1033
      %1070 = vmatprep.subr.mxu0 0.0
      %1071 = vmatpush1.msra.mxu0 %v1034
      %1072 = vmatprep.subr.mxu0 0.0
      %1073 = vmatpush1.msra.mxu0 %v1035
      %1074 = vmatprep.subr.mxu0 0.0
      %1075 = vmatpush1.msra.mxu0 %v1036
      %1076 = vmatprep.subr.mxu0 0.0
      %1077 = vmatpush1.msra.mxu0 0.0
      %1078 = vmatprep.subr.mxu0 0.0
      %1079 = vmatpush1.msra.mxu0 0.0
      %1080 = vmatprep.subr.mxu0 0.0
      %1081 = vmatpush1.msra.mxu0 0.0
      %1082 = vmatprep.subr.mxu0 0.0
      %1083 = vmatpush1.msra.mxu0 0.0
      %1084 = vmatprep.subr.mxu0 0.0
      %1085 = vmatpush1.msra.mxu0 0.0
      %1086 = vmatprep.subr.mxu0 0.0
      %1087 = vmatpush1.msra.mxu0 0.0
      %1088 = vmatprep.subr.mxu0 0.0
      %1089 = vmatpush1.msra.mxu0 0.0
      %1090 = vmatprep.subr.mxu0 0.0
      %1091 = vmatpush1.msra.mxu0 0.0
      %1092 = vmatprep.subr.mxu0 0.0
      %1093 = vmatpush1.msra.mxu0 0.0
      %1094 = vmatprep.subr.mxu0 0.0
      %1095 = vmatpush1.msra.mxu0 0.0
      %1096 = vmatprep.subr.mxu0 0.0
      %1097 = vmatpush1.msra.mxu0 0.0
      %1098 = vmatprep.subr.mxu0 0.0
      %1099 = vmatpush1.msra.mxu0 0.0
      %1100 = vmatprep.subr.mxu0 0.0
      %1101 = vmatpush1.msra.mxu0 0.0
      %1102 = vmatprep.subr.mxu0 0.0
      %1103 = vmatpush1.msra.mxu0 0.0
      %1104 = vmatprep.subr.mxu0 0.0
      %1105 = vmatpush1.msra.mxu0 0.0
      %1106 = vmatprep.subr.mxu0 0.0
      %1107 = vmatpush1.msra.mxu0 0.0
      %1108 = vmatprep.mubr.f32.mxu0 0.0
      %1109 = vmatmul.mubr.f32.gmra.mrb[0].mxu0 %v1005
      %v1110 = vpop.f32.mrb[0].mxu0
      %v1111 = vadd.f32 %v1042, %v1110
      %v1112 = vpop.f32.mrb[0].mxu0
      %1113 = vmatprep.mubr.f32.mxu0 0.0
      %1114 = vmatmul.mubr.f32.gmra.mrb[0].mxu0 %v1006
      %v1115 = vpop.f32.mrb[0].mxu0
      %v1116 = vadd.f32 %v1042, %v1115
      %v1117 = vpop.f32.mrb[0].mxu0
      %1118 = vmatprep.mubr.f32.mxu0 0.0
      %1119 = vmatmul.mubr.f32.gmra.mrb[0].mxu0 %v1007
      %v1120 = vpop.f32.mrb[0].mxu0
      %v1121 = vadd.f32 %v1042, %v1120
      %v1122 = vpop.f32.mrb[0].mxu0
      %1123 = vmatprep.mubr.f32.mxu0 0.0
      %1124 = vmatmul.mubr.f32.gmra.mrb[0].mxu0 %v1008
      %v1125 = vpop.f32.mrb[0].mxu0
      %v1126 = vadd.f32 %v1042, %v1125
      %v1127 = vpop.f32.mrb[0].mxu0
      %1128 = vmatprep.mubr.f32.mxu0 0.0
      %1129 = vmatmul.mubr.f32.gmra.mrb[0].mxu0 %v1009
      %v1130 = vpop.f32.mrb[0].mxu0
      %v1131 = vadd.f32 %v1042, %v1130
      %v1132 = vpop.f32.mrb[0].mxu0
      %1133 = vmatprep.mubr.f32.mxu0 0.0
      %1134 = vmatmul.mubr.f32.gmra.mrb[0].mxu0 %v1010
      %v1135 = vpop.f32.mrb[0].mxu0
      %v1136 = vadd.f32 %v1042, %v1135
      %v1137 = vpop.f32.mrb[0].mxu0
      %1138 = vmatprep.mubr.f32.mxu0 0.0
      %1139 = vmatmul.mubr.f32.gmra.mrb[0].mxu0 %v1011
      %v1140 = vpop.f32.mrb[0].mxu0
      %v1141 = vadd.f32 %v1042, %v1140
      %v1142 = vpop.f32.mrb[0].mxu0
      %1143 = vmatprep.mubr.f32.mxu0 0.0
      %1144 = vmatmul.mubr.f32.gmra.mrb[0].mxu0 %v1012
      %v1145 = vpop.f32.mrb[0].mxu0
      %v1146 = vadd.f32 %v1042, %v1145
      %v1147 = vpop.f32.mrb[0].mxu0
      %1148 = vmatprep.mubr.f32.mxu0 0.0
      %1149 = vmatmul.mubr.f32.gmra.mrb[0].mxu0 %v1013
      %v1150 = vpop.f32.mrb[0].mxu0
      %v1151 = vadd.f32 %v1042, %v1150
      %v1152 = vpop.f32.mrb[0].mxu0
      %1153 = vmatprep.mubr.f32.mxu0 0.0
      %1154 = vmatmul.mubr.f32.gmra.mrb[0].mxu0 %v1014
      %v1155 = vpop.f32.mrb[0].mxu0
      %v1156 = vadd.f32 %v1042, %v1155
      %v1157 = vpop.f32.mrb[0].mxu0
      %1158 = vmatprep.mubr.f32.mxu0 0.0
      %1159 = vmatmul.mubr.f32.gmra.mrb[0].mxu0 %v1015
      %v1160 = vpop.f32.mrb[0].mxu0
      %v1161 = vadd.f32 %v1042, %v1160
      %v1162 = vpop.f32.mrb[0].mxu0
      %1163 = vmatprep.mubr.f32.mxu0 0.0
      %1164 = vmatmul.mubr.f32.gmra.mrb[0].mxu0 %v1016
      %v1165 = vpop.f32.mrb[0].mxu0
      %v1166 = vadd.f32 %v1042, %v1165
      %v1167 = vpop.f32.mrb[0].mxu0
      %1168 = vmatprep.mubr.f32.mxu0 0.0
      %1169 = vmatmul.mubr.f32.gmra.mrb[0].mxu0 %v1017
      %v1170 = vpop.f32.mrb[0].mxu0
      %v1171 = vadd.f32 %v1042, %v1170
      %v1172 = vpop.f32.mrb[0].mxu0
      %1173 = vmatprep.mubr.f32.mxu0 0.0
      %1174 = vmatmul.mubr.f32.gmra.mrb[0].mxu0 %v1018
      %v1175 = vpop.f32.mrb[0].mxu0
      %v1176 = vadd.f32 %v1042, %v1175
      %v1177 = vpop.f32.mrb[0].mxu0
      %1178 = vmatprep.mubr.f32.mxu0 0.0
      %1179 = vmatmul.mubr.f32.gmra.mrb[0].mxu0 %v1019
      %v1180 = vpop.f32.mrb[0].mxu0
      %v1181 = vadd.f32 %v1042, %v1180
      %v1182 = vpop.f32.mrb[0].mxu0
      %1183 = vmatprep.mubr.f32.mxu0 0.0
      %1184 = vmatmul.mubr.f32.gmra.mrb[0].mxu0 %v1020
      %v1185 = vpop.f32.mrb[0].mxu0
      %v1186 = vadd.f32 %v1042, %v1185
      %v1187 = vpop.f32.mrb[0].mxu0
      %1188 = vdwg.mxu0
      %v1189 = vld [vmem:[%s12] sm:$0xf]
      %v1190 = vld [vmem:[%s771] sm:$0xff]
      %v1191 = vld [vmem:[%s771 + $0x8] sm:$0xff]
      %v1192 = vld [vmem:[%s771 + $0x10] sm:$0xff]
      %v1193 = vld [vmem:[%s771 + $0x18] sm:$0xff]
      %v1194 = vld [vmem:[%s771 + $0x20] sm:$0xff]
      %v1195 = vld [vmem:[%s771 + $0x28] sm:$0xff]
      %v1196 = vld [vmem:[%s771 + $0x30] sm:$0xff]
      %v1197 = vld [vmem:[%s771 + $0x38] sm:$0xff]
      %v1198 = vld [vmem:[%s771 + $0x40] sm:$0xff]
      %v1199 = vld [vmem:[%s771 + $0x48] sm:$0xff]
      %v1200 = vld [vmem:[%s771 + $0x50] sm:$0xff]
      %v1201 = vld [vmem:[%s771 + $0x58] sm:$0xff]
      %v1202 = vld [vmem:[%s771 + $0x60] sm:$0xff]
      %v1203 = vld [vmem:[%s771 + $0x68] sm:$0xff]
      %v1204 = vld [vmem:[%s771 + $0x70] sm:$0xff]
      %v1205 = vld [vmem:[%s771 + $0x78] sm:$0xff]
      %v1206 = vld [vmem:[%s13] sm:$0xf]
      %1208 = vset.pattern.permute.xlu0 0
      %1209 = vperm.xlu0 %1208, %v1206
      %v1210 = vpop.permute.xlu0 %1209
      %1212 = vmatprep.subr.mxu0 0.0
      %1213 = vmatpush1.msra.mxu0 %v1190
      %1214 = vmatprep.subr.mxu0 0.0
      %1215 = vmatpush1.msra.mxu0 %v1191
      %1216 = vmatprep.subr.mxu0 0.0
      %1217 = vmatpush1.msra.mxu0 %v1192
      %1218 = vmatprep.subr.mxu0 0.0
      %1219 = vmatpush1.msra.mxu0 %v1193
      %1220 = vmatprep.subr.mxu0 0.0
      %1221 = vmatpush1.msra.mxu0 %v1194
      %1222 = vmatprep.subr.mxu0 0.0
      %1223 = vmatpush1.msra.mxu0 %v1195
      %1224 = vmatprep.subr.mxu0 0.0
      %1225 = vmatpush1.msra.mxu0 %v1196
      %1226 = vmatprep.subr.mxu0 0.0
      %1227 = vmatpush1.msra.mxu0 %v1197
      %1228 = vmatprep.subr.mxu0 0.0
      %1229 = vmatpush1.msra.mxu0 %v1198
      %1230 = vmatprep.subr.mxu0 0.0
      %1231 = vmatpush1.msra.mxu0 %v1199
      %1232 = vmatprep.subr.mxu0 0.0
      %1233 = vmatpush1.msra.mxu0 %v1200
      %1234 = vmatprep.subr.mxu0 0.0
      %1235 = vmatpush1.msra.mxu0 %v1201
      %1236 = vmatprep.subr.mxu0 0.0
      %1237 = vmatpush1.msra.mxu0 %v1202
      %1238 = vmatprep.subr.mxu0 0.0
      %1239 = vmatpush1.msra.mxu0 %v1203
      %1240 = vmatprep.subr.mxu0 0.0
      %1241 = vmatpush1.msra.mxu0 %v1204
      %1242 = vmatprep.subr.mxu0 0.0
      %1243 = vmatpush1.msra.mxu0 %v1205
      %1244 = vmatprep.subr.mxu0 0.0
      %1245 = vmatpush1.msra.mxu0 0.0
      %1246 = vmatprep.subr.mxu0 0.0
      %1247 = vmatpush1.msra.mxu0 0.0
      %1248 = vmatprep.subr.mxu0 0.0
      %1249 = vmatpush1.msra.mxu0 0.0
      %1250 = vmatprep.subr.mxu0 0.0
      %1251 = vmatpush1.msra.mxu0 0.0
      %1252 = vmatprep.subr.mxu0 0.0
      %1253 = vmatpush1.msra.mxu0 0.0
      %1254 = vmatprep.subr.mxu0 0.0
      %1255 = vmatpush1.msra.mxu0 0.0
      %1256 = vmatprep.subr.mxu0 0.0
      %1257 = vmatpush1.msra.mxu0 0.0
      %1258 = vmatprep.subr.mxu0 0.0
      %1259 = vmatpush1.msra.mxu0 0.0
      %1260 = vmatprep.subr.mxu0 0.0
      %1261 = vmatpush1.msra.mxu0 0.0
      %1262 = vmatprep.subr.mxu0 0.0
      %1263 = vmatpush1.msra.mxu0 0.0
      %1264 = vmatprep.subr.mxu0 0.0
      %1265 = vmatpush1.msra.mxu0 0.0
      %1266 = vmatprep.subr.mxu0 0.0
      %1267 = vmatpush1.msra.mxu0 0.0
      %1268 = vmatprep.subr.mxu0 0.0
      %1269 = vmatpush1.msra.mxu0 0.0
      %1270 = vmatprep.subr.mxu0 0.0
      %1271 = vmatpush1.msra.mxu0 0.0
      %1272 = vmatprep.subr.mxu0 0.0
      %1273 = vmatpush1.msra.mxu0 0.0
      %1274 = vmatprep.subr.mxu0 0.0
      %1275 = vmatpush1.msra.mxu0 0.0
      %1276 = vmatprep.mubr.f32.mxu0 0.0
      %1277 = vmatmul.mubr.f32.gmra.mrb[0].mxu0 %v1189
      %v1278 = vpop.f32.mrb[0].mxu0
      %v1279 = vadd.f32 %v1210, %v1278
      %v1280 = vpop.f32.mrb[0].mxu0
      %1281 = vdwg.mxu0
      %v1282 = vld [vmem:[%s14] sm:$0xf]
      %v1283 = vld [vmem:[%s761] sm:$0xff]
      %v1284 = vld [vmem:[%s761 + $0x8] sm:$0xff]
      %v1285 = vld [vmem:[%s761 + $0x10] sm:$0xff]
      %v1286 = vld [vmem:[%s761 + $0x18] sm:$0xff]
      %v1287 = vld [vmem:[%s761 + $0x20] sm:$0xff]
      %v1288 = vld [vmem:[%s761 + $0x28] sm:$0xff]
      %v1289 = vld [vmem:[%s761 + $0x30] sm:$0xff]
      %v1290 = vld [vmem:[%s761 + $0x38] sm:$0xff]
      %v1291 = vld [vmem:[%s761 + $0x40] sm:$0xff]
      %v1292 = vld [vmem:[%s761 + $0x48] sm:$0xff]
      %v1293 = vld [vmem:[%s761 + $0x50] sm:$0xff]
      %v1294 = vld [vmem:[%s761 + $0x58] sm:$0xff]
      %v1295 = vld [vmem:[%s761 + $0x60] sm:$0xff]
      %v1296 = vld [vmem:[%s761 + $0x68] sm:$0xff]
      %v1297 = vld [vmem:[%s761 + $0x70] sm:$0xff]
      %v1298 = vld [vmem:[%s761 + $0x78] sm:$0xff]
      %v1299 = vld [vmem:[%s15] sm:$0xf]
      %1301 = vset.pattern.permute.xlu0 0
      %1302 = vperm.xlu0 %1301, %v1299
      %v1303 = vpop.permute.xlu0 %1302
      %1305 = vmatprep.subr.mxu0 0.0
      %1306 = vmatpush1.msra.mxu0 %v1283
      %1307 = vmatprep.subr.mxu0 0.0
      %1308 = vmatpush1.msra.mxu0 %v1284
      %1309 = vmatprep.subr.mxu0 0.0
      %1310 = vmatpush1.msra.mxu0 %v1285
      %1311 = vmatprep.subr.mxu0 0.0
      %1312 = vmatpush1.msra.mxu0 %v1286
      %1313 = vmatprep.subr.mxu0 0.0
      %1314 = vmatpush1.msra.mxu0 %v1287
      %1315 = vmatprep.subr.mxu0 0.0
      %1316 = vmatpush1.msra.mxu0 %v1288
      %1317 = vmatprep.subr.mxu0 0.0
      %1318 = vmatpush1.msra.mxu0 %v1289
      %1319 = vmatprep.subr.mxu0 0.0
      %1320 = vmatpush1.msra.mxu0 %v1290
      %1321 = vmatprep.subr.mxu0 0.0
      %1322 = vmatpush1.msra.mxu0 %v1291
      %1323 = vmatprep.subr.mxu0 0.0
      %1324 = vmatpush1.msra.mxu0 %v1292
      %1325 = vmatprep.subr.mxu0 0.0
      %1326 = vmatpush1.msra.mxu0 %v1293
      %1327 = vmatprep.subr.mxu0 0.0
      %1328 = vmatpush1.msra.mxu0 %v1294
      %1329 = vmatprep.subr.mxu0 0.0
      %1330 = vmatpush1.msra.mxu0 %v1295
      %1331 = vmatprep.subr.mxu0 0.0
      %1332 = vmatpush1.msra.mxu0 %v1296
      %1333 = vmatprep.subr.mxu0 0.0
      %1334 = vmatpush1.msra.mxu0 %v1297
      %1335 = vmatprep.subr.mxu0 0.0
      %1336 = vmatpush1.msra.mxu0 %v1298
      %1337 = vmatprep.subr.mxu0 0.0
      %1338 = vmatpush1.msra.mxu0 0.0
      %1339 = vmatprep.subr.mxu0 0.0
      %1340 = vmatpush1.msra.mxu0 0.0
      %1341 = vmatprep.subr.mxu0 0.0
      %1342 = vmatpush1.msra.mxu0 0.0
      %1343 = vmatprep.subr.mxu0 0.0
      %1344 = vmatpush1.msra.mxu0 0.0
      %1345 = vmatprep.subr.mxu0 0.0
      %1346 = vmatpush1.msra.mxu0 0.0
      %1347 = vmatprep.subr.mxu0 0.0
      %1348 = vmatpush1.msra.mxu0 0.0
      %1349 = vmatprep.subr.mxu0 0.0
      %1350 = vmatpush1.msra.mxu0 0.0
      %1351 = vmatprep.subr.mxu0 0.0
      %1352 = vmatpush1.msra.mxu0 0.0
      %1353 = vmatprep.subr.mxu0 0.0
      %1354 = vmatpush1.msra.mxu0 0.0
      %1355 = vmatprep.subr.mxu0 0.0
      %1356 = vmatpush1.msra.mxu0 0.0
      %1357 = vmatprep.subr.mxu0 0.0
      %1358 = vmatpush1.msra.mxu0 0.0
      %1359 = vmatprep.subr.mxu0 0.0
      %1360 = vmatpush1.msra.mxu0 0.0
      %1361 = vmatprep.subr.mxu0 0.0
      %1362 = vmatpush1.msra.mxu0 0.0
      %1363 = vmatprep.subr.mxu0 0.0
      %1364 = vmatpush1.msra.mxu0 0.0
      %1365 = vmatprep.subr.mxu0 0.0
      %1366 = vmatpush1.msra.mxu0 0.0
      %1367 = vmatprep.subr.mxu0 0.0
      %1368 = vmatpush1.msra.mxu0 0.0
      %1369 = vmatprep.mubr.f32.mxu0 0.0
      %1370 = vmatmul.mubr.f32.gmra.mrb[0].mxu0 %v1282
      %v1371 = vpop.f32.mrb[0].mxu0
      %v1372 = vadd.f32 %v1303, %v1371
      %v1373 = vpop.f32.mrb[0].mxu0
      %1374 = vdwg.mxu0
      %v1375 = vlaneseq
      %v1376 = vand.u32 %v1375, 127
      %v1377 = vld [vmem:[%s776] sm:$0xff]
      %v1378 = vld [vmem:[%s776 + $0x8] sm:$0xff]
      %v1379 = vld [vmem:[%s781] sm:$0xff]
      %v1380 = vld [vmem:[%s781 + $0x8] sm:$0xff]
      %1382 = vset.pattern.permute.xlu0 0
      %1383 = vperm.xlu0 %1382, %v927
      %v1384 = vpop.permute.xlu0 %1383
      %1387 = vset.pattern.permute.xlu0 0
      %1388 = vperm.xlu0 %1387, %v933
      %v1389 = vpop.permute.xlu0 %1388
      %v1391 = vlaneseq
      %v1392 = vshrl.u32 %v1391, 7
      %v1393 = vsub.s32 0, %v1392
      %v1394 = vrot.slane %v1279, %v1393
      %v1395 = vadd.f32 %v1384, %v1394
      %v1396 = vadd.f32 %v1389, %v1394
      %vm1397 = vcmp.gt.f32.partialorder %v1395, 0.0
      %vm1398 = vcmp.gt.f32.partialorder %v1396, 0.0
      %v1399 = vmul.f32 %v1395, 0.2
      %v1400 = vmul.f32 %v1396, 0.2
      %v1401 = vsel %vm1397, %v1395, %v1399
      %v1402 = vsel %vm1398, %v1396, %v1400
      %v1403 = vadd.f32 %v1401, %v1379
      %v1404 = vadd.f32 %v1402, %v1380
      %1405 = vmax.xlane.f32.xlu0 %v1403
      %v1406 = vpop.xlane.xlu0 %1405
      %1407 = vmax.xlane.f32.xlu0 %v1404
      %v1408 = vpop.xlane.xlu0 %1407
      %v1409 = vsub.f32 %v1403, %v1406
      %v1410 = vsub.f32 %v1404, %v1408
      %v1411 = vmul.f32 %v1409, 1.442695
      %v1412 = vpow.pop %v1411
      %v1413 = vmul.f32 %v1410, 1.442695
      %v1414 = vpow.pop %v1413
      %v1415 = vmul.f32 %v1412, %v1377
      %v1416 = vmul.f32 %v1414, %v1378
      %1417 = vadd.xlane.f32.xlu0 %v1415
      %v1418 = vpop.xlane.xlu0 %1417
      %1419 = vadd.xlane.f32.xlu0 %v1416
      %v1420 = vpop.xlane.xlu0 %1419
      %v1421 = vmax.f32 %v1418, 1e-16
      %v1422 = vmax.f32 %v1420, 1e-16
      %v1423 = vrcp.pop %v1421
      %v1424 = vmul.f32 %v1415, %v1423
      %v1425 = vrcp.pop %v1422
      %v1426 = vmul.f32 %v1416, %v1425
      %vm1427 = vcmp.ge.s32.totalorder %v1376, 0
      %vm1428 = vcmp.lt.s32.totalorder %v1376, 16
      %vm1429 = vmand %vm1427, %vm1428
      %v1430 = vsel %vm1429, 1, 0
      %vm1431 = vcmp.eq.s32.totalorder %v1430, 1
      %v1432 = vsel %vm1431, %v1111, 0.0
      %v1433 = vsel %vm1431, %v1116, 0.0
      %v1434 = vsel %vm1431, %v1121, 0.0
      %v1435 = vsel %vm1431, %v1126, 0.0
      %v1436 = vsel %vm1431, %v1131, 0.0
      %v1437 = vsel %vm1431, %v1136, 0.0
      %v1438 = vsel %vm1431, %v1141, 0.0
      %v1439 = vsel %vm1431, %v1146, 0.0
      %v1440 = vsel %vm1431, %v1151, 0.0
      %v1441 = vsel %vm1431, %v1156, 0.0
      %v1442 = vsel %vm1431, %v1161, 0.0
      %v1443 = vsel %vm1431, %v1166, 0.0
      %v1444 = vsel %vm1431, %v1171, 0.0
      %v1445 = vsel %vm1431, %v1176, 0.0
      %v1446 = vsel %vm1431, %v1181, 0.0
      %v1447 = vsel %vm1431, %v1186, 0.0
      %v1448 = vpack.c.bf16 %v1426, %v1424
      %v1449 = vpack.c.bf16 %v1433, %v1432
      %v1450 = vpack.c.bf16 %v1435, %v1434
      %v1451 = vpack.c.bf16 %v1437, %v1436
      %v1452 = vpack.c.bf16 %v1439, %v1438
      %v1453 = vpack.c.bf16 %v1441, %v1440
      %v1454 = vpack.c.bf16 %v1443, %v1442
      %v1455 = vpack.c.bf16 %v1445, %v1444
      %v1456 = vpack.c.bf16 %v1447, %v1446
      %1457 = vset.pattern.permute.xlu0 1
      %1458 = vperm.xlu0 %1457, %v927
      %v1459 = vpop.permute.xlu0 %1458
      %1461 = vset.pattern.permute.xlu0 1
      %1462 = vperm.xlu0 %1461, %v933
      %v1463 = vpop.permute.xlu0 %1462
      %v1465 = vlaneseq
      %v1466 = vshrl.u32 %v1465, 7
      %v1467 = vsub.s32 1, %v1466
      %v1468 = vrot.slane %v1279, %v1467
      %v1469 = vadd.f32 %v1459, %v1468
      %v1470 = vadd.f32 %v1463, %v1468
      %vm1471 = vcmp.gt.f32.partialorder %v1469, 0.0
      %vm1472 = vcmp.gt.f32.partialorder %v1470, 0.0
      %v1473 = vmul.f32 %v1469, 0.2
      %v1474 = vmul.f32 %v1470, 0.2
      %v1475 = vsel %vm1471, %v1469, %v1473
      %v1476 = vsel %vm1472, %v1470, %v1474
      %v1477 = vadd.f32 %v1475, %v1379
      %v1478 = vadd.f32 %v1476, %v1380
      %1479 = vmax.xlane.f32.xlu0 %v1477
      %v1480 = vpop.xlane.xlu0 %1479
      %1481 = vmax.xlane.f32.xlu0 %v1478
      %v1482 = vpop.xlane.xlu0 %1481
      %v1483 = vsub.f32 %v1477, %v1480
      %v1484 = vsub.f32 %v1478, %v1482
      %v1485 = vmul.f32 %v1483, 1.442695
      %v1486 = vpow.pop %v1485
      %v1487 = vmul.f32 %v1484, 1.442695
      %v1488 = vpow.pop %v1487
      %v1489 = vmul.f32 %v1486, %v1377
      %v1490 = vmul.f32 %v1488, %v1378
      %1491 = vadd.xlane.f32.xlu0 %v1489
      %v1492 = vpop.xlane.xlu0 %1491
      %1493 = vadd.xlane.f32.xlu0 %v1490
      %v1494 = vpop.xlane.xlu0 %1493
      %v1495 = vmax.f32 %v1492, 1e-16
      %v1496 = vmax.f32 %v1494, 1e-16
      %v1497 = vrcp.pop %v1495
      %v1498 = vmul.f32 %v1489, %v1497
      %v1499 = vrcp.pop %v1496
      %v1500 = vmul.f32 %v1490, %v1499
      %vm1501 = vcmp.ge.s32.totalorder %v1376, 16
      %vm1502 = vcmp.lt.s32.totalorder %v1376, 32
      %vm1503 = vmand %vm1501, %vm1502
      %v1504 = vsel %vm1503, 1, 0
      %vm1505 = vcmp.eq.s32.totalorder %v1504, 1
      %v1506 = vsel %vm1505, %v1111, 0.0
      %v1507 = vsel %vm1505, %v1116, 0.0
      %v1508 = vsel %vm1505, %v1121, 0.0
      %v1509 = vsel %vm1505, %v1126, 0.0
      %v1510 = vsel %vm1505, %v1131, 0.0
      %v1511 = vsel %vm1505, %v1136, 0.0
      %v1512 = vsel %vm1505, %v1141, 0.0
      %v1513 = vsel %vm1505, %v1146, 0.0
      %v1514 = vsel %vm1505, %v1151, 0.0
      %v1515 = vsel %vm1505, %v1156, 0.0
      %v1516 = vsel %vm1505, %v1161, 0.0
      %v1517 = vsel %vm1505, %v1166, 0.0
      %v1518 = vsel %vm1505, %v1171, 0.0
      %v1519 = vsel %vm1505, %v1176, 0.0
      %v1520 = vsel %vm1505, %v1181, 0.0
      %v1521 = vsel %vm1505, %v1186, 0.0
      %v1522 = vpack.c.bf16 %v1500, %v1498
      %v1523 = vpack.c.bf16 %v1507, %v1506
      %v1524 = vpack.c.bf16 %v1509, %v1508
      %v1525 = vpack.c.bf16 %v1511, %v1510
      %v1526 = vpack.c.bf16 %v1513, %v1512
      %v1527 = vpack.c.bf16 %v1515, %v1514
      %v1528 = vpack.c.bf16 %v1517, %v1516
      %v1529 = vpack.c.bf16 %v1519, %v1518
      %v1530 = vpack.c.bf16 %v1521, %v1520
      %1531 = vmatprep.subr.bf16.mxu0 0
      %1532 = vmatpush1.bf16.msra.mxu0 %v1523
      %1533 = vmatprep.subr.bf16.mxu0 0
      %1534 = vmatpush1.bf16.msra.mxu0 %v1524
      %1535 = vmatprep.subr.bf16.mxu0 0
      %1536 = vmatpush1.bf16.msra.mxu0 %v1525
      %1537 = vmatprep.subr.bf16.mxu0 0
      %1538 = vmatpush1.bf16.msra.mxu0 %v1526
      %1539 = vmatprep.subr.bf16.mxu0 0
      %1540 = vmatpush1.bf16.msra.mxu0 %v1527
      %1541 = vmatprep.subr.bf16.mxu0 0
      %1542 = vmatpush1.bf16.msra.mxu0 %v1528
      %1543 = vmatprep.subr.bf16.mxu0 0
      %1544 = vmatpush1.bf16.msra.mxu0 %v1529
      %1545 = vmatprep.subr.bf16.mxu0 0
      %1546 = vmatpush1.bf16.msra.mxu0 %v1530
      %1547 = vmatprep.subr.bf16.mxu0 0
      %1548 = vmatpush1.bf16.msra.mxu0 0
      %1549 = vmatprep.subr.bf16.mxu0 0
      %1550 = vmatpush1.bf16.msra.mxu0 0
      %1551 = vmatprep.subr.bf16.mxu0 0
      %1552 = vmatpush1.bf16.msra.mxu0 0
      %1553 = vmatprep.subr.bf16.mxu0 0
      %1554 = vmatpush1.bf16.msra.mxu0 0
      %1555 = vmatprep.subr.bf16.mxu0 0
      %1556 = vmatpush1.bf16.msra.mxu0 0
      %1557 = vmatprep.subr.bf16.mxu0 0
      %1558 = vmatpush1.bf16.msra.mxu0 0
      %1559 = vmatprep.subr.bf16.mxu0 0
      %1560 = vmatpush1.bf16.msra.mxu0 0
      %1561 = vmatprep.subr.bf16.mxu0 0
      %1562 = vmatpush1.bf16.msra.mxu0 0
      %1563 = vmatprep.mubr.bf16.mxu0 0
      %1564 = vmatmul.mubr.bf16.gmra.mrb[0].mxu0 %v1522
      %v1565 = vpop.f32.mrb[0].mxu0
      %v1566 = vadd.f32 0.0, %v1565
      %v1567 = vpop.f32.mrb[0].mxu0
      %v1568 = vpop.f32.mrb[0].mxu0
      %v1569 = vadd.f32 0.0, %v1568
      %v1570 = vpop.f32.mrb[0].mxu0
      %1571 = vdwg.mxu0
      %1572 = vmatprep.subr.bf16.mxu0 0
      %1573 = vmatpush1.bf16.msra.mxu0 %v1449
      %1574 = vmatprep.subr.bf16.mxu0 0
      %1575 = vmatpush1.bf16.msra.mxu0 %v1450
      %1576 = vmatprep.subr.bf16.mxu0 0
      %1577 = vmatpush1.bf16.msra.mxu0 %v1451
      %1578 = vmatprep.subr.bf16.mxu0 0
      %1579 = vmatpush1.bf16.msra.mxu0 %v1452
      %1580 = vmatprep.subr.bf16.mxu0 0
      %1581 = vmatpush1.bf16.msra.mxu0 %v1453
      %1582 = vmatprep.subr.bf16.mxu0 0
      %1583 = vmatpush1.bf16.msra.mxu0 %v1454
      %1584 = vmatprep.subr.bf16.mxu0 0
      %1585 = vmatpush1.bf16.msra.mxu0 %v1455
      %1586 = vmatprep.subr.bf16.mxu0 0
      %1587 = vmatpush1.bf16.msra.mxu0 %v1456
      %1588 = vmatprep.subr.bf16.mxu0 0
      %1589 = vmatpush1.bf16.msra.mxu0 0
      %1590 = vmatprep.subr.bf16.mxu0 0
      %1591 = vmatpush1.bf16.msra.mxu0 0
      %1592 = vmatprep.subr.bf16.mxu0 0
      %1593 = vmatpush1.bf16.msra.mxu0 0
      %1594 = vmatprep.subr.bf16.mxu0 0
      %1595 = vmatpush1.bf16.msra.mxu0 0
      %1596 = vmatprep.subr.bf16.mxu0 0
      %1597 = vmatpush1.bf16.msra.mxu0 0
      %1598 = vmatprep.subr.bf16.mxu0 0
      %1599 = vmatpush1.bf16.msra.mxu0 0
      %1600 = vmatprep.subr.bf16.mxu0 0
      %1601 = vmatpush1.bf16.msra.mxu0 0
      %1602 = vmatprep.subr.bf16.mxu0 0
      %1603 = vmatpush1.bf16.msra.mxu0 0
      %1604 = vmatprep.mubr.bf16.mxu0 0
      %1605 = vmatmul.mubr.bf16.gmra.mrb[0].mxu0 %v1448
      %v1606 = vpop.f32.mrb[0].mxu0
      %v1607 = vadd.f32 %v1566, %v1606
      %v1608 = vpop.f32.mrb[0].mxu0
      %v1609 = vpop.f32.mrb[0].mxu0
      %v1610 = vadd.f32 %v1569, %v1609
      %v1611 = vpop.f32.mrb[0].mxu0
      %1612 = vdwg.mxu0
      %1613 = vset.pattern.permute.xlu0 2
      %1614 = vperm.xlu0 %1613, %v927
      %v1615 = vpop.permute.xlu0 %1614
      %1617 = vset.pattern.permute.xlu0 2
      %1618 = vperm.xlu0 %1617, %v933
      %v1619 = vpop.permute.xlu0 %1618
      %v1621 = vlaneseq
      %v1622 = vshrl.u32 %v1621, 7
      %v1623 = vsub.s32 2, %v1622
      %v1624 = vrot.slane %v1279, %v1623
      %v1625 = vadd.f32 %v1615, %v1624
      %v1626 = vadd.f32 %v1619, %v1624
      %vm1627 = vcmp.gt.f32.partialorder %v1625, 0.0
      %vm1628 = vcmp.gt.f32.partialorder %v1626, 0.0
      %v1629 = vmul.f32 %v1625, 0.2
      %v1630 = vmul.f32 %v1626, 0.2
      %v1631 = vsel %vm1627, %v1625, %v1629
      %v1632 = vsel %vm1628, %v1626, %v1630
      %v1633 = vadd.f32 %v1631, %v1379
      %v1634 = vadd.f32 %v1632, %v1380
      %1635 = vmax.xlane.f32.xlu0 %v1633
      %v1636 = vpop.xlane.xlu0 %1635
      %1637 = vmax.xlane.f32.xlu0 %v1634
      %v1638 = vpop.xlane.xlu0 %1637
      %v1639 = vsub.f32 %v1633, %v1636
      %v1640 = vsub.f32 %v1634, %v1638
      %v1641 = vmul.f32 %v1639, 1.442695
      %v1642 = vpow.pop %v1641
      %v1643 = vmul.f32 %v1640, 1.442695
      %v1644 = vpow.pop %v1643
      %v1645 = vmul.f32 %v1642, %v1377
      %v1646 = vmul.f32 %v1644, %v1378
      %1647 = vadd.xlane.f32.xlu0 %v1645
      %v1648 = vpop.xlane.xlu0 %1647
      %1649 = vadd.xlane.f32.xlu0 %v1646
      %v1650 = vpop.xlane.xlu0 %1649
      %v1651 = vmax.f32 %v1648, 1e-16
      %v1652 = vmax.f32 %v1650, 1e-16
      %v1653 = vrcp.pop %v1651
      %v1654 = vmul.f32 %v1645, %v1653
      %v1655 = vrcp.pop %v1652
      %v1656 = vmul.f32 %v1646, %v1655
      %vm1657 = vcmp.ge.s32.totalorder %v1376, 32
      %vm1658 = vcmp.lt.s32.totalorder %v1376, 48
      %vm1659 = vmand %vm1657, %vm1658
      %v1660 = vsel %vm1659, 1, 0
      %vm1661 = vcmp.eq.s32.totalorder %v1660, 1
      %v1662 = vsel %vm1661, %v1111, 0.0
      %v1663 = vsel %vm1661, %v1116, 0.0
      %v1664 = vsel %vm1661, %v1121, 0.0
      %v1665 = vsel %vm1661, %v1126, 0.0
      %v1666 = vsel %vm1661, %v1131, 0.0
      %v1667 = vsel %vm1661, %v1136, 0.0
      %v1668 = vsel %vm1661, %v1141, 0.0
      %v1669 = vsel %vm1661, %v1146, 0.0
      %v1670 = vsel %vm1661, %v1151, 0.0
      %v1671 = vsel %vm1661, %v1156, 0.0
      %v1672 = vsel %vm1661, %v1161, 0.0
      %v1673 = vsel %vm1661, %v1166, 0.0
      %v1674 = vsel %vm1661, %v1171, 0.0
      %v1675 = vsel %vm1661, %v1176, 0.0
      %v1676 = vsel %vm1661, %v1181, 0.0
      %v1677 = vsel %vm1661, %v1186, 0.0
      %v1678 = vpack.c.bf16 %v1656, %v1654
      %v1679 = vpack.c.bf16 %v1663, %v1662
      %v1680 = vpack.c.bf16 %v1665, %v1664
      %v1681 = vpack.c.bf16 %v1667, %v1666
      %v1682 = vpack.c.bf16 %v1669, %v1668
      %v1683 = vpack.c.bf16 %v1671, %v1670
      %v1684 = vpack.c.bf16 %v1673, %v1672
      %v1685 = vpack.c.bf16 %v1675, %v1674
      %v1686 = vpack.c.bf16 %v1677, %v1676
      %1687 = vmatprep.subr.bf16.mxu0 0
      %1688 = vmatpush1.bf16.msra.mxu0 %v1679
      %1689 = vmatprep.subr.bf16.mxu0 0
      %1690 = vmatpush1.bf16.msra.mxu0 %v1680
      %1691 = vmatprep.subr.bf16.mxu0 0
      %1692 = vmatpush1.bf16.msra.mxu0 %v1681
      %1693 = vmatprep.subr.bf16.mxu0 0
      %1694 = vmatpush1.bf16.msra.mxu0 %v1682
      %1695 = vmatprep.subr.bf16.mxu0 0
      %1696 = vmatpush1.bf16.msra.mxu0 %v1683
      %1697 = vmatprep.subr.bf16.mxu0 0
      %1698 = vmatpush1.bf16.msra.mxu0 %v1684
      %1699 = vmatprep.subr.bf16.mxu0 0
      %1700 = vmatpush1.bf16.msra.mxu0 %v1685
      %1701 = vmatprep.subr.bf16.mxu0 0
      %1702 = vmatpush1.bf16.msra.mxu0 %v1686
      %1703 = vmatprep.subr.bf16.mxu0 0
      %1704 = vmatpush1.bf16.msra.mxu0 0
      %1705 = vmatprep.subr.bf16.mxu0 0
      %1706 = vmatpush1.bf16.msra.mxu0 0
      %1707 = vmatprep.subr.bf16.mxu0 0
      %1708 = vmatpush1.bf16.msra.mxu0 0
      %1709 = vmatprep.subr.bf16.mxu0 0
      %1710 = vmatpush1.bf16.msra.mxu0 0
      %1711 = vmatprep.subr.bf16.mxu0 0
      %1712 = vmatpush1.bf16.msra.mxu0 0
      %1713 = vmatprep.subr.bf16.mxu0 0
      %1714 = vmatpush1.bf16.msra.mxu0 0
      %1715 = vmatprep.subr.bf16.mxu0 0
      %1716 = vmatpush1.bf16.msra.mxu0 0
      %1717 = vmatprep.subr.bf16.mxu0 0
      %1718 = vmatpush1.bf16.msra.mxu0 0
      %1719 = vmatprep.mubr.bf16.mxu0 0
      %1720 = vmatmul.mubr.bf16.gmra.mrb[0].mxu0 %v1678
      %v1721 = vpop.f32.mrb[0].mxu0
      %v1722 = vadd.f32 0.0, %v1721
      %v1723 = vpop.f32.mrb[0].mxu0
      %v1724 = vpop.f32.mrb[0].mxu0
      %v1725 = vadd.f32 0.0, %v1724
      %v1726 = vpop.f32.mrb[0].mxu0
      %1727 = vdwg.mxu0
      %v1728 = vadd.f32 %v1607, %v1722
      %v1729 = vadd.f32 %v1610, %v1725
      %1730 = vset.pattern.permute.xlu0 3
      %1731 = vperm.xlu0 %1730, %v927
      %v1732 = vpop.permute.xlu0 %1731
      %1734 = vset.pattern.permute.xlu0 3
      %1735 = vperm.xlu0 %1734, %v933
      %v1736 = vpop.permute.xlu0 %1735
      %v1738 = vlaneseq
      %v1739 = vshrl.u32 %v1738, 7
      %v1740 = vsub.s32 3, %v1739
      %v1741 = vrot.slane %v1279, %v1740
      %v1742 = vadd.f32 %v1732, %v1741
      %v1743 = vadd.f32 %v1736, %v1741
      %vm1744 = vcmp.gt.f32.partialorder %v1742, 0.0
      %vm1745 = vcmp.gt.f32.partialorder %v1743, 0.0
      %v1746 = vmul.f32 %v1742, 0.2
      %v1747 = vmul.f32 %v1743, 0.2
      %v1748 = vsel %vm1744, %v1742, %v1746
      %v1749 = vsel %vm1745, %v1743, %v1747
      %v1750 = vadd.f32 %v1748, %v1379
      %v1751 = vadd.f32 %v1749, %v1380
      %1752 = vmax.xlane.f32.xlu0 %v1750
      %v1753 = vpop.xlane.xlu0 %1752
      %1754 = vmax.xlane.f32.xlu0 %v1751
      %v1755 = vpop.xlane.xlu0 %1754
      %v1756 = vsub.f32 %v1750, %v1753
      %v1757 = vsub.f32 %v1751, %v1755
      %v1758 = vmul.f32 %v1756, 1.442695
      %v1759 = vpow.pop %v1758
      %v1760 = vmul.f32 %v1757, 1.442695
      %v1761 = vpow.pop %v1760
      %v1762 = vmul.f32 %v1759, %v1377
      %v1763 = vmul.f32 %v1761, %v1378
      %1764 = vadd.xlane.f32.xlu0 %v1762
      %v1765 = vpop.xlane.xlu0 %1764
      %1766 = vadd.xlane.f32.xlu0 %v1763
      %v1767 = vpop.xlane.xlu0 %1766
      %v1768 = vmax.f32 %v1765, 1e-16
      %v1769 = vmax.f32 %v1767, 1e-16
      %v1770 = vrcp.pop %v1768
      %v1771 = vmul.f32 %v1762, %v1770
      %v1772 = vrcp.pop %v1769
      %v1773 = vmul.f32 %v1763, %v1772
      %vm1774 = vcmp.ge.s32.totalorder %v1376, 48
      %vm1775 = vcmp.lt.s32.totalorder %v1376, 64
      %vm1776 = vmand %vm1774, %vm1775
      %v1777 = vsel %vm1776, 1, 0
      %vm1778 = vcmp.eq.s32.totalorder %v1777, 1
      %v1779 = vsel %vm1778, %v1111, 0.0
      %v1780 = vsel %vm1778, %v1116, 0.0
      %v1781 = vsel %vm1778, %v1121, 0.0
      %v1782 = vsel %vm1778, %v1126, 0.0
      %v1783 = vsel %vm1778, %v1131, 0.0
      %v1784 = vsel %vm1778, %v1136, 0.0
      %v1785 = vsel %vm1778, %v1141, 0.0
      %v1786 = vsel %vm1778, %v1146, 0.0
      %v1787 = vsel %vm1778, %v1151, 0.0
      %v1788 = vsel %vm1778, %v1156, 0.0
      %v1789 = vsel %vm1778, %v1161, 0.0
      %v1790 = vsel %vm1778, %v1166, 0.0
      %v1791 = vsel %vm1778, %v1171, 0.0
      %v1792 = vsel %vm1778, %v1176, 0.0
      %v1793 = vsel %vm1778, %v1181, 0.0
      %v1794 = vsel %vm1778, %v1186, 0.0
      %v1795 = vpack.c.bf16 %v1773, %v1771
      %v1796 = vpack.c.bf16 %v1780, %v1779
      %v1797 = vpack.c.bf16 %v1782, %v1781
      %v1798 = vpack.c.bf16 %v1784, %v1783
      %v1799 = vpack.c.bf16 %v1786, %v1785
      %v1800 = vpack.c.bf16 %v1788, %v1787
      %v1801 = vpack.c.bf16 %v1790, %v1789
      %v1802 = vpack.c.bf16 %v1792, %v1791
      %v1803 = vpack.c.bf16 %v1794, %v1793
      %1804 = vmatprep.subr.bf16.mxu0 0
      %1805 = vmatpush1.bf16.msra.mxu0 %v1796
      %1806 = vmatprep.subr.bf16.mxu0 0
      %1807 = vmatpush1.bf16.msra.mxu0 %v1797
      %1808 = vmatprep.subr.bf16.mxu0 0
      %1809 = vmatpush1.bf16.msra.mxu0 %v1798
      %1810 = vmatprep.subr.bf16.mxu0 0
      %1811 = vmatpush1.bf16.msra.mxu0 %v1799
      %1812 = vmatprep.subr.bf16.mxu0 0
      %1813 = vmatpush1.bf16.msra.mxu0 %v1800
      %1814 = vmatprep.subr.bf16.mxu0 0
      %1815 = vmatpush1.bf16.msra.mxu0 %v1801
      %1816 = vmatprep.subr.bf16.mxu0 0
      %1817 = vmatpush1.bf16.msra.mxu0 %v1802
      %1818 = vmatprep.subr.bf16.mxu0 0
      %1819 = vmatpush1.bf16.msra.mxu0 %v1803
      %1820 = vmatprep.subr.bf16.mxu0 0
      %1821 = vmatpush1.bf16.msra.mxu0 0
      %1822 = vmatprep.subr.bf16.mxu0 0
      %1823 = vmatpush1.bf16.msra.mxu0 0
      %1824 = vmatprep.subr.bf16.mxu0 0
      %1825 = vmatpush1.bf16.msra.mxu0 0
      %1826 = vmatprep.subr.bf16.mxu0 0
      %1827 = vmatpush1.bf16.msra.mxu0 0
      %1828 = vmatprep.subr.bf16.mxu0 0
      %1829 = vmatpush1.bf16.msra.mxu0 0
      %1830 = vmatprep.subr.bf16.mxu0 0
      %1831 = vmatpush1.bf16.msra.mxu0 0
      %1832 = vmatprep.subr.bf16.mxu0 0
      %1833 = vmatpush1.bf16.msra.mxu0 0
      %1834 = vmatprep.subr.bf16.mxu0 0
      %1835 = vmatpush1.bf16.msra.mxu0 0
      %1836 = vmatprep.mubr.bf16.mxu0 0
      %1837 = vmatmul.mubr.bf16.gmra.mrb[0].mxu0 %v1795
      %v1838 = vpop.f32.mrb[0].mxu0
      %v1839 = vadd.f32 0.0, %v1838
      %v1840 = vpop.f32.mrb[0].mxu0
      %v1841 = vpop.f32.mrb[0].mxu0
      %v1842 = vadd.f32 0.0, %v1841
      %v1843 = vpop.f32.mrb[0].mxu0
      %1844 = vdwg.mxu0
      %v1845 = vadd.f32 %v1728, %v1839
      %v1846 = vadd.f32 %v1729, %v1842
      %v1847 = vmax.f32 %v1845, 0.0
      %v1848 = vmax.f32 %v1846, 0.0
      %v1849 = vld [vmem:[%s786] sm:$0xff]
      %v1850 = vld [vmem:[%s786 + $0x8] sm:$0xff]
      %v1851 = vld [vmem:[%s791] sm:$0xff]
      %v1852 = vld [vmem:[%s791 + $0x8] sm:$0xff]
      %1853 = vset.pattern.permute.xlu0 4
      %1854 = vperm.xlu0 %1853, %v927
      %v1855 = vpop.permute.xlu0 %1854
      %1857 = vset.pattern.permute.xlu0 4
      %1858 = vperm.xlu0 %1857, %v933
      %v1859 = vpop.permute.xlu0 %1858
      %v1861 = vlaneseq
      %v1862 = vshrl.u32 %v1861, 7
      %v1863 = vsub.s32 0, %v1862
      %v1864 = vrot.slane %v1372, %v1863
      %v1865 = vadd.f32 %v1855, %v1864
      %v1866 = vadd.f32 %v1859, %v1864
      %vm1867 = vcmp.gt.f32.partialorder %v1865, 0.0
      %vm1868 = vcmp.gt.f32.partialorder %v1866, 0.0
      %v1869 = vmul.f32 %v1865, 0.2
      %v1870 = vmul.f32 %v1866, 0.2
      %v1871 = vsel %vm1867, %v1865, %v1869
      %v1872 = vsel %vm1868, %v1866, %v1870
      %v1873 = vadd.f32 %v1871, %v1851
      %v1874 = vadd.f32 %v1872, %v1852
      %1875 = vmax.xlane.f32.xlu0 %v1873
      %v1876 = vpop.xlane.xlu0 %1875
      %1877 = vmax.xlane.f32.xlu0 %v1874
      %v1878 = vpop.xlane.xlu0 %1877
      %v1879 = vsub.f32 %v1873, %v1876
      %v1880 = vsub.f32 %v1874, %v1878
      %v1881 = vmul.f32 %v1879, 1.442695
      %v1882 = vpow.pop %v1881
      %v1883 = vmul.f32 %v1880, 1.442695
      %v1884 = vpow.pop %v1883
      %v1885 = vmul.f32 %v1882, %v1849
      %v1886 = vmul.f32 %v1884, %v1850
      %1887 = vadd.xlane.f32.xlu0 %v1885
      %v1888 = vpop.xlane.xlu0 %1887
      %1889 = vadd.xlane.f32.xlu0 %v1886
      %v1890 = vpop.xlane.xlu0 %1889
      %v1891 = vmax.f32 %v1888, 1e-16
      %v1892 = vmax.f32 %v1890, 1e-16
      %v1893 = vrcp.pop %v1891
      %v1894 = vmul.f32 %v1885, %v1893
      %v1895 = vrcp.pop %v1892
      %v1896 = vmul.f32 %v1886, %v1895
      %v1897 = vsel %vm1431, %v925, 0.0
      %v1898 = vsel %vm1431, %v931, 0.0
      %v1899 = vsel %vm1431, %v937, 0.0
      %v1900 = vsel %vm1431, %v942, 0.0
      %v1901 = vsel %vm1431, %v947, 0.0
      %v1902 = vsel %vm1431, %v952, 0.0
      %v1903 = vsel %vm1431, %v957, 0.0
      %v1904 = vsel %vm1431, %v962, 0.0
      %v1905 = vsel %vm1431, %v967, 0.0
      %v1906 = vsel %vm1431, %v972, 0.0
      %v1907 = vsel %vm1431, %v977, 0.0
      %v1908 = vsel %vm1431, %v982, 0.0
      %v1909 = vsel %vm1431, %v987, 0.0
      %v1910 = vsel %vm1431, %v992, 0.0
      %v1911 = vsel %vm1431, %v997, 0.0
      %v1912 = vsel %vm1431, %v1002, 0.0
      %v1913 = vpack.c.bf16 %v1896, %v1894
      %v1914 = vpack.c.bf16 %v1898, %v1897
      %v1915 = vpack.c.bf16 %v1900, %v1899
      %v1916 = vpack.c.bf16 %v1902, %v1901
      %v1917 = vpack.c.bf16 %v1904, %v1903
      %v1918 = vpack.c.bf16 %v1906, %v1905
      %v1919 = vpack.c.bf16 %v1908, %v1907
      %v1920 = vpack.c.bf16 %v1910, %v1909
      %v1921 = vpack.c.bf16 %v1912, %v1911
      %1922 = vset.pattern.permute.xlu0 5
      %1923 = vperm.xlu0 %1922, %v927
      %v1924 = vpop.permute.xlu0 %1923
      %1926 = vset.pattern.permute.xlu0 5
      %1927 = vperm.xlu0 %1926, %v933
      %v1928 = vpop.permute.xlu0 %1927
      %v1930 = vlaneseq
      %v1931 = vshrl.u32 %v1930, 7
      %v1932 = vsub.s32 1, %v1931
      %v1933 = vrot.slane %v1372, %v1932
      %v1934 = vadd.f32 %v1924, %v1933
      %v1935 = vadd.f32 %v1928, %v1933
      %vm1936 = vcmp.gt.f32.partialorder %v1934, 0.0
      %vm1937 = vcmp.gt.f32.partialorder %v1935, 0.0
      %v1938 = vmul.f32 %v1934, 0.2
      %v1939 = vmul.f32 %v1935, 0.2
      %v1940 = vsel %vm1936, %v1934, %v1938
      %v1941 = vsel %vm1937, %v1935, %v1939
      %v1942 = vadd.f32 %v1940, %v1851
      %v1943 = vadd.f32 %v1941, %v1852
      %1944 = vmax.xlane.f32.xlu0 %v1942
      %v1945 = vpop.xlane.xlu0 %1944
      %1946 = vmax.xlane.f32.xlu0 %v1943
      %v1947 = vpop.xlane.xlu0 %1946
      %v1948 = vsub.f32 %v1942, %v1945
      %v1949 = vsub.f32 %v1943, %v1947
      %v1950 = vmul.f32 %v1948, 1.442695
      %v1951 = vpow.pop %v1950
      %v1952 = vmul.f32 %v1949, 1.442695
      %v1953 = vpow.pop %v1952
      %v1954 = vmul.f32 %v1951, %v1849
      %v1955 = vmul.f32 %v1953, %v1850
      %1956 = vadd.xlane.f32.xlu0 %v1954
      %v1957 = vpop.xlane.xlu0 %1956
      %1958 = vadd.xlane.f32.xlu0 %v1955
      %v1959 = vpop.xlane.xlu0 %1958
      %v1960 = vmax.f32 %v1957, 1e-16
      %v1961 = vmax.f32 %v1959, 1e-16
      %v1962 = vrcp.pop %v1960
      %v1963 = vmul.f32 %v1954, %v1962
      %v1964 = vrcp.pop %v1961
      %v1965 = vmul.f32 %v1955, %v1964
      %v1966 = vsel %vm1505, %v925, 0.0
      %v1967 = vsel %vm1505, %v931, 0.0
      %v1968 = vsel %vm1505, %v937, 0.0
      %v1969 = vsel %vm1505, %v942, 0.0
      %v1970 = vsel %vm1505, %v947, 0.0
      %v1971 = vsel %vm1505, %v952, 0.0
      %v1972 = vsel %vm1505, %v957, 0.0
      %v1973 = vsel %vm1505, %v962, 0.0
      %v1974 = vsel %vm1505, %v967, 0.0
      %v1975 = vsel %vm1505, %v972, 0.0
      %v1976 = vsel %vm1505, %v977, 0.0
      %v1977 = vsel %vm1505, %v982, 0.0
      %v1978 = vsel %vm1505, %v987, 0.0
      %v1979 = vsel %vm1505, %v992, 0.0
      %v1980 = vsel %vm1505, %v997, 0.0
      %v1981 = vsel %vm1505, %v1002, 0.0
      %v1982 = vpack.c.bf16 %v1965, %v1963
      %v1983 = vpack.c.bf16 %v1967, %v1966
      %v1984 = vpack.c.bf16 %v1969, %v1968
      %v1985 = vpack.c.bf16 %v1971, %v1970
      %v1986 = vpack.c.bf16 %v1973, %v1972
      %v1987 = vpack.c.bf16 %v1975, %v1974
      %v1988 = vpack.c.bf16 %v1977, %v1976
      %v1989 = vpack.c.bf16 %v1979, %v1978
      %v1990 = vpack.c.bf16 %v1981, %v1980
      %1991 = vmatprep.subr.bf16.mxu0 0
      %1992 = vmatpush1.bf16.msra.mxu0 %v1983
      %1993 = vmatprep.subr.bf16.mxu0 0
      %1994 = vmatpush1.bf16.msra.mxu0 %v1984
      %1995 = vmatprep.subr.bf16.mxu0 0
      %1996 = vmatpush1.bf16.msra.mxu0 %v1985
      %1997 = vmatprep.subr.bf16.mxu0 0
      %1998 = vmatpush1.bf16.msra.mxu0 %v1986
      %1999 = vmatprep.subr.bf16.mxu0 0
      %2000 = vmatpush1.bf16.msra.mxu0 %v1987
      %2001 = vmatprep.subr.bf16.mxu0 0
      %2002 = vmatpush1.bf16.msra.mxu0 %v1988
      %2003 = vmatprep.subr.bf16.mxu0 0
      %2004 = vmatpush1.bf16.msra.mxu0 %v1989
      %2005 = vmatprep.subr.bf16.mxu0 0
      %2006 = vmatpush1.bf16.msra.mxu0 %v1990
      %2007 = vmatprep.subr.bf16.mxu0 0
      %2008 = vmatpush1.bf16.msra.mxu0 0
      %2009 = vmatprep.subr.bf16.mxu0 0
      %2010 = vmatpush1.bf16.msra.mxu0 0
      %2011 = vmatprep.subr.bf16.mxu0 0
      %2012 = vmatpush1.bf16.msra.mxu0 0
      %2013 = vmatprep.subr.bf16.mxu0 0
      %2014 = vmatpush1.bf16.msra.mxu0 0
      %2015 = vmatprep.subr.bf16.mxu0 0
      %2016 = vmatpush1.bf16.msra.mxu0 0
      %2017 = vmatprep.subr.bf16.mxu0 0
      %2018 = vmatpush1.bf16.msra.mxu0 0
      %2019 = vmatprep.subr.bf16.mxu0 0
      %2020 = vmatpush1.bf16.msra.mxu0 0
      %2021 = vmatprep.subr.bf16.mxu0 0
      %2022 = vmatpush1.bf16.msra.mxu0 0
      %2023 = vmatprep.mubr.bf16.mxu0 0
      %2024 = vmatmul.mubr.bf16.gmra.mrb[0].mxu0 %v1982
      %v2025 = vpop.f32.mrb[0].mxu0
      %v2026 = vadd.f32 0.0, %v2025
      %v2027 = vpop.f32.mrb[0].mxu0
      %v2028 = vpop.f32.mrb[0].mxu0
      %v2029 = vadd.f32 0.0, %v2028
      %v2030 = vpop.f32.mrb[0].mxu0
      %2031 = vdwg.mxu0
      %2032 = vmatprep.subr.bf16.mxu0 0
      %2033 = vmatpush1.bf16.msra.mxu0 %v1914
      %2034 = vmatprep.subr.bf16.mxu0 0
      %2035 = vmatpush1.bf16.msra.mxu0 %v1915
      %2036 = vmatprep.subr.bf16.mxu0 0
      %2037 = vmatpush1.bf16.msra.mxu0 %v1916
      %2038 = vmatprep.subr.bf16.mxu0 0
      %2039 = vmatpush1.bf16.msra.mxu0 %v1917
      %2040 = vmatprep.subr.bf16.mxu0 0
      %2041 = vmatpush1.bf16.msra.mxu0 %v1918
      %2042 = vmatprep.subr.bf16.mxu0 0
      %2043 = vmatpush1.bf16.msra.mxu0 %v1919
      %2044 = vmatprep.subr.bf16.mxu0 0
      %2045 = vmatpush1.bf16.msra.mxu0 %v1920
      %2046 = vmatprep.subr.bf16.mxu0 0
      %2047 = vmatpush1.bf16.msra.mxu0 %v1921
      %2048 = vmatprep.subr.bf16.mxu0 0
      %2049 = vmatpush1.bf16.msra.mxu0 0
      %2050 = vmatprep.subr.bf16.mxu0 0
      %2051 = vmatpush1.bf16.msra.mxu0 0
      %2052 = vmatprep.subr.bf16.mxu0 0
      %2053 = vmatpush1.bf16.msra.mxu0 0
      %2054 = vmatprep.subr.bf16.mxu0 0
      %2055 = vmatpush1.bf16.msra.mxu0 0
      %2056 = vmatprep.subr.bf16.mxu0 0
      %2057 = vmatpush1.bf16.msra.mxu0 0
      %2058 = vmatprep.subr.bf16.mxu0 0
      %2059 = vmatpush1.bf16.msra.mxu0 0
      %2060 = vmatprep.subr.bf16.mxu0 0
      %2061 = vmatpush1.bf16.msra.mxu0 0
      %2062 = vmatprep.subr.bf16.mxu0 0
      %2063 = vmatpush1.bf16.msra.mxu0 0
      %2064 = vmatprep.mubr.bf16.mxu0 0
      %2065 = vmatmul.mubr.bf16.gmra.mrb[0].mxu0 %v1913
      %v2066 = vpop.f32.mrb[0].mxu0
      %v2067 = vadd.f32 %v2026, %v2066
      %v2068 = vpop.f32.mrb[0].mxu0
      %v2069 = vpop.f32.mrb[0].mxu0
      %v2070 = vadd.f32 %v2029, %v2069
      %v2071 = vpop.f32.mrb[0].mxu0
      %2072 = vdwg.mxu0
      %2073 = vset.pattern.permute.xlu0 6
      %2074 = vperm.xlu0 %2073, %v927
      %v2075 = vpop.permute.xlu0 %2074
      %2077 = vset.pattern.permute.xlu0 6
      %2078 = vperm.xlu0 %2077, %v933
      %v2079 = vpop.permute.xlu0 %2078
      %v2081 = vlaneseq
      %v2082 = vshrl.u32 %v2081, 7
      %v2083 = vsub.s32 2, %v2082
      %v2084 = vrot.slane %v1372, %v2083
      %v2085 = vadd.f32 %v2075, %v2084
      %v2086 = vadd.f32 %v2079, %v2084
      %vm2087 = vcmp.gt.f32.partialorder %v2085, 0.0
      %vm2088 = vcmp.gt.f32.partialorder %v2086, 0.0
      %v2089 = vmul.f32 %v2085, 0.2
      %v2090 = vmul.f32 %v2086, 0.2
      %v2091 = vsel %vm2087, %v2085, %v2089
      %v2092 = vsel %vm2088, %v2086, %v2090
      %v2093 = vadd.f32 %v2091, %v1851
      %v2094 = vadd.f32 %v2092, %v1852
      %2095 = vmax.xlane.f32.xlu0 %v2093
      %v2096 = vpop.xlane.xlu0 %2095
      %2097 = vmax.xlane.f32.xlu0 %v2094
      %v2098 = vpop.xlane.xlu0 %2097
      %v2099 = vsub.f32 %v2093, %v2096
      %v2100 = vsub.f32 %v2094, %v2098
      %v2101 = vmul.f32 %v2099, 1.442695
      %v2102 = vpow.pop %v2101
      %v2103 = vmul.f32 %v2100, 1.442695
      %v2104 = vpow.pop %v2103
      %v2105 = vmul.f32 %v2102, %v1849
      %v2106 = vmul.f32 %v2104, %v1850
      %2107 = vadd.xlane.f32.xlu0 %v2105
      %v2108 = vpop.xlane.xlu0 %2107
      %2109 = vadd.xlane.f32.xlu0 %v2106
      %v2110 = vpop.xlane.xlu0 %2109
      %v2111 = vmax.f32 %v2108, 1e-16
      %v2112 = vmax.f32 %v2110, 1e-16
      %v2113 = vrcp.pop %v2111
      %v2114 = vmul.f32 %v2105, %v2113
      %v2115 = vrcp.pop %v2112
      %v2116 = vmul.f32 %v2106, %v2115
      %v2117 = vsel %vm1661, %v925, 0.0
      %v2118 = vsel %vm1661, %v931, 0.0
      %v2119 = vsel %vm1661, %v937, 0.0
      %v2120 = vsel %vm1661, %v942, 0.0
      %v2121 = vsel %vm1661, %v947, 0.0
      %v2122 = vsel %vm1661, %v952, 0.0
      %v2123 = vsel %vm1661, %v957, 0.0
      %v2124 = vsel %vm1661, %v962, 0.0
      %v2125 = vsel %vm1661, %v967, 0.0
      %v2126 = vsel %vm1661, %v972, 0.0
      %v2127 = vsel %vm1661, %v977, 0.0
      %v2128 = vsel %vm1661, %v982, 0.0
      %v2129 = vsel %vm1661, %v987, 0.0
      %v2130 = vsel %vm1661, %v992, 0.0
      %v2131 = vsel %vm1661, %v997, 0.0
      %v2132 = vsel %vm1661, %v1002, 0.0
      %v2133 = vpack.c.bf16 %v2116, %v2114
      %v2134 = vpack.c.bf16 %v2118, %v2117
      %v2135 = vpack.c.bf16 %v2120, %v2119
      %v2136 = vpack.c.bf16 %v2122, %v2121
      %v2137 = vpack.c.bf16 %v2124, %v2123
      %v2138 = vpack.c.bf16 %v2126, %v2125
      %v2139 = vpack.c.bf16 %v2128, %v2127
      %v2140 = vpack.c.bf16 %v2130, %v2129
      %v2141 = vpack.c.bf16 %v2132, %v2131
      %2142 = vmatprep.subr.bf16.mxu0 0
      %2143 = vmatpush1.bf16.msra.mxu0 %v2134
      %2144 = vmatprep.subr.bf16.mxu0 0
      %2145 = vmatpush1.bf16.msra.mxu0 %v2135
      %2146 = vmatprep.subr.bf16.mxu0 0
      %2147 = vmatpush1.bf16.msra.mxu0 %v2136
      %2148 = vmatprep.subr.bf16.mxu0 0
      %2149 = vmatpush1.bf16.msra.mxu0 %v2137
      %2150 = vmatprep.subr.bf16.mxu0 0
      %2151 = vmatpush1.bf16.msra.mxu0 %v2138
      %2152 = vmatprep.subr.bf16.mxu0 0
      %2153 = vmatpush1.bf16.msra.mxu0 %v2139
      %2154 = vmatprep.subr.bf16.mxu0 0
      %2155 = vmatpush1.bf16.msra.mxu0 %v2140
      %2156 = vmatprep.subr.bf16.mxu0 0
      %2157 = vmatpush1.bf16.msra.mxu0 %v2141
      %2158 = vmatprep.subr.bf16.mxu0 0
      %2159 = vmatpush1.bf16.msra.mxu0 0
      %2160 = vmatprep.subr.bf16.mxu0 0
      %2161 = vmatpush1.bf16.msra.mxu0 0
      %2162 = vmatprep.subr.bf16.mxu0 0
      %2163 = vmatpush1.bf16.msra.mxu0 0
      %2164 = vmatprep.subr.bf16.mxu0 0
      %2165 = vmatpush1.bf16.msra.mxu0 0
      %2166 = vmatprep.subr.bf16.mxu0 0
      %2167 = vmatpush1.bf16.msra.mxu0 0
      %2168 = vmatprep.subr.bf16.mxu0 0
      %2169 = vmatpush1.bf16.msra.mxu0 0
      %2170 = vmatprep.subr.bf16.mxu0 0
      %2171 = vmatpush1.bf16.msra.mxu0 0
      %2172 = vmatprep.subr.bf16.mxu0 0
      %2173 = vmatpush1.bf16.msra.mxu0 0
      %2174 = vmatprep.mubr.bf16.mxu0 0
      %2175 = vmatmul.mubr.bf16.gmra.mrb[0].mxu0 %v2133
      %v2176 = vpop.f32.mrb[0].mxu0
      %v2177 = vadd.f32 0.0, %v2176
      %v2178 = vpop.f32.mrb[0].mxu0
      %v2179 = vpop.f32.mrb[0].mxu0
      %v2180 = vadd.f32 0.0, %v2179
      %v2181 = vpop.f32.mrb[0].mxu0
      %2182 = vdwg.mxu0
      %v2183 = vadd.f32 %v2067, %v2177
      %v2184 = vadd.f32 %v2070, %v2180
      %2185 = vset.pattern.permute.xlu0 7
      %2186 = vperm.xlu0 %2185, %v927
      %v2187 = vpop.permute.xlu0 %2186
      %2189 = vset.pattern.permute.xlu0 7
      %2190 = vperm.xlu0 %2189, %v933
      %v2191 = vpop.permute.xlu0 %2190
      %v2193 = vlaneseq
      %v2194 = vshrl.u32 %v2193, 7
      %v2195 = vsub.s32 3, %v2194
      %v2196 = vrot.slane %v1372, %v2195
      %v2197 = vadd.f32 %v2187, %v2196
      %v2198 = vadd.f32 %v2191, %v2196
      %vm2199 = vcmp.gt.f32.partialorder %v2197, 0.0
      %vm2200 = vcmp.gt.f32.partialorder %v2198, 0.0
      %v2201 = vmul.f32 %v2197, 0.2
      %v2202 = vmul.f32 %v2198, 0.2
      %v2203 = vsel %vm2199, %v2197, %v2201
      %v2204 = vsel %vm2200, %v2198, %v2202
      %v2205 = vadd.f32 %v2203, %v1851
      %v2206 = vadd.f32 %v2204, %v1852
      %2207 = vmax.xlane.f32.xlu0 %v2205
      %v2208 = vpop.xlane.xlu0 %2207
      %2209 = vmax.xlane.f32.xlu0 %v2206
      %v2210 = vpop.xlane.xlu0 %2209
      %v2211 = vsub.f32 %v2205, %v2208
      %v2212 = vsub.f32 %v2206, %v2210
      %v2213 = vmul.f32 %v2211, 1.442695
      %v2214 = vpow.pop %v2213
      %v2215 = vmul.f32 %v2212, 1.442695
      %v2216 = vpow.pop %v2215
      %v2217 = vmul.f32 %v2214, %v1849
      %v2218 = vmul.f32 %v2216, %v1850
      %2219 = vadd.xlane.f32.xlu0 %v2217
      %v2220 = vpop.xlane.xlu0 %2219
      %2221 = vadd.xlane.f32.xlu0 %v2218
      %v2222 = vpop.xlane.xlu0 %2221
      %v2223 = vmax.f32 %v2220, 1e-16
      %v2224 = vmax.f32 %v2222, 1e-16
      %v2225 = vrcp.pop %v2223
      %v2226 = vmul.f32 %v2217, %v2225
      %v2227 = vrcp.pop %v2224
      %v2228 = vmul.f32 %v2218, %v2227
      %v2229 = vsel %vm1778, %v925, 0.0
      %v2230 = vsel %vm1778, %v931, 0.0
      %v2231 = vsel %vm1778, %v937, 0.0
      %v2232 = vsel %vm1778, %v942, 0.0
      %v2233 = vsel %vm1778, %v947, 0.0
      %v2234 = vsel %vm1778, %v952, 0.0
      %v2235 = vsel %vm1778, %v957, 0.0
      %v2236 = vsel %vm1778, %v962, 0.0
      %v2237 = vsel %vm1778, %v967, 0.0
      %v2238 = vsel %vm1778, %v972, 0.0
      %v2239 = vsel %vm1778, %v977, 0.0
      %v2240 = vsel %vm1778, %v982, 0.0
      %v2241 = vsel %vm1778, %v987, 0.0
      %v2242 = vsel %vm1778, %v992, 0.0
      %v2243 = vsel %vm1778, %v997, 0.0
      %v2244 = vsel %vm1778, %v1002, 0.0
      %v2245 = vpack.c.bf16 %v2228, %v2226
      %v2246 = vpack.c.bf16 %v2230, %v2229
      %v2247 = vpack.c.bf16 %v2232, %v2231
      %v2248 = vpack.c.bf16 %v2234, %v2233
      %v2249 = vpack.c.bf16 %v2236, %v2235
      %v2250 = vpack.c.bf16 %v2238, %v2237
      %v2251 = vpack.c.bf16 %v2240, %v2239
      %v2252 = vpack.c.bf16 %v2242, %v2241
      %v2253 = vpack.c.bf16 %v2244, %v2243
      %2254 = vmatprep.subr.bf16.mxu0 0
      %2255 = vmatpush1.bf16.msra.mxu0 %v2246
      %2256 = vmatprep.subr.bf16.mxu0 0
      %2257 = vmatpush1.bf16.msra.mxu0 %v2247
      %2258 = vmatprep.subr.bf16.mxu0 0
      %2259 = vmatpush1.bf16.msra.mxu0 %v2248
      %2260 = vmatprep.subr.bf16.mxu0 0
      %2261 = vmatpush1.bf16.msra.mxu0 %v2249
      %2262 = vmatprep.subr.bf16.mxu0 0
      %2263 = vmatpush1.bf16.msra.mxu0 %v2250
      %2264 = vmatprep.subr.bf16.mxu0 0
      %2265 = vmatpush1.bf16.msra.mxu0 %v2251
      %2266 = vmatprep.subr.bf16.mxu0 0
      %2267 = vmatpush1.bf16.msra.mxu0 %v2252
      %2268 = vmatprep.subr.bf16.mxu0 0
      %2269 = vmatpush1.bf16.msra.mxu0 %v2253
      %2270 = vmatprep.subr.bf16.mxu0 0
      %2271 = vmatpush1.bf16.msra.mxu0 0
      %2272 = vmatprep.subr.bf16.mxu0 0
      %2273 = vmatpush1.bf16.msra.mxu0 0
      %2274 = vmatprep.subr.bf16.mxu0 0
      %2275 = vmatpush1.bf16.msra.mxu0 0
      %2276 = vmatprep.subr.bf16.mxu0 0
      %2277 = vmatpush1.bf16.msra.mxu0 0
      %2278 = vmatprep.subr.bf16.mxu0 0
      %2279 = vmatpush1.bf16.msra.mxu0 0
      %2280 = vmatprep.subr.bf16.mxu0 0
      %2281 = vmatpush1.bf16.msra.mxu0 0
      %2282 = vmatprep.subr.bf16.mxu0 0
      %2283 = vmatpush1.bf16.msra.mxu0 0
      %2284 = vmatprep.subr.bf16.mxu0 0
      %2285 = vmatpush1.bf16.msra.mxu0 0
      %2286 = vmatprep.mubr.bf16.mxu0 0
      %2287 = vmatmul.mubr.bf16.gmra.mrb[0].mxu0 %v2245
      %v2288 = vpop.f32.mrb[0].mxu0
      %v2289 = vadd.f32 0.0, %v2288
      %v2290 = vpop.f32.mrb[0].mxu0
      %v2291 = vpop.f32.mrb[0].mxu0
      %v2292 = vadd.f32 0.0, %v2291
      %v2293 = vpop.f32.mrb[0].mxu0
      %2294 = vdwg.mxu0
      %v2295 = vadd.f32 %v2183, %v2289
      %v2296 = vadd.f32 %v2184, %v2292
      %v2297 = vmax.f32 %v2295, 0.0
      %v2298 = vmax.f32 %v2296, 0.0
      %v2299 = vld [vmem:[%s16] sm:$0xff]
      %v2300 = vld [vmem:[%s16 + $0x8] sm:$0xff]
      %v2301 = vld [vmem:[%s16 + $0x10] sm:$0xff]
      %v2302 = vld [vmem:[%s16 + $0x18] sm:$0xff]
      %v2303 = vld [vmem:[%s16 + $0x20] sm:$0xff]
      %v2304 = vld [vmem:[%s16 + $0x28] sm:$0xff]
      %v2305 = vld [vmem:[%s16 + $0x30] sm:$0xff]
      %v2306 = vld [vmem:[%s16 + $0x38] sm:$0xff]
      %v2307 = vld [vmem:[%s16 + $0x40] sm:$0xff]
      %v2308 = vld [vmem:[%s16 + $0x48] sm:$0xff]
      %v2309 = vld [vmem:[%s16 + $0x50] sm:$0xff]
      %v2310 = vld [vmem:[%s16 + $0x58] sm:$0xff]
      %v2311 = vld [vmem:[%s16 + $0x60] sm:$0xff]
      %v2312 = vld [vmem:[%s16 + $0x68] sm:$0xff]
      %v2313 = vld [vmem:[%s16 + $0x70] sm:$0xff]
      %v2314 = vld [vmem:[%s16 + $0x78] sm:$0xff]
      %v2315 = vld [vmem:[%s17] sm:$0x1]
      %v2317 = vlaneseq
      %v2318 = vshrl.u32 %v2317, 7
      %v2319 = vsub.s32 0, %v2318
      %v2320 = vrot.slane %v2315, %v2319
      %2322 = vmatprep.subr.mxu0 0.0
      %2323 = vmatpush1.msra.mxu0 %v2299
      %2324 = vmatprep.subr.mxu0 0.0
      %2325 = vmatpush1.msra.mxu0 %v2300
      %2326 = vmatprep.subr.mxu0 0.0
      %2327 = vmatpush1.msra.mxu0 %v2301
      %2328 = vmatprep.subr.mxu0 0.0
      %2329 = vmatpush1.msra.mxu0 %v2302
      %2330 = vmatprep.subr.mxu0 0.0
      %2331 = vmatpush1.msra.mxu0 %v2303
      %2332 = vmatprep.subr.mxu0 0.0
      %2333 = vmatpush1.msra.mxu0 %v2304
      %2334 = vmatprep.subr.mxu0 0.0
      %2335 = vmatpush1.msra.mxu0 %v2305
      %2336 = vmatprep.subr.mxu0 0.0
      %2337 = vmatpush1.msra.mxu0 %v2306
      %2338 = vmatprep.subr.mxu0 0.0
      %2339 = vmatpush1.msra.mxu0 %v2307
      %2340 = vmatprep.subr.mxu0 0.0
      %2341 = vmatpush1.msra.mxu0 %v2308
      %2342 = vmatprep.subr.mxu0 0.0
      %2343 = vmatpush1.msra.mxu0 %v2309
      %2344 = vmatprep.subr.mxu0 0.0
      %2345 = vmatpush1.msra.mxu0 %v2310
      %2346 = vmatprep.subr.mxu0 0.0
      %2347 = vmatpush1.msra.mxu0 %v2311
      %2348 = vmatprep.subr.mxu0 0.0
      %2349 = vmatpush1.msra.mxu0 %v2312
      %2350 = vmatprep.subr.mxu0 0.0
      %2351 = vmatpush1.msra.mxu0 %v2313
      %2352 = vmatprep.subr.mxu0 0.0
      %2353 = vmatpush1.msra.mxu0 %v2314
      %2354 = vmatprep.subr.mxu0 0.0
      %2355 = vmatpush1.msra.mxu0 0.0
      %2356 = vmatprep.subr.mxu0 0.0
      %2357 = vmatpush1.msra.mxu0 0.0
      %2358 = vmatprep.subr.mxu0 0.0
      %2359 = vmatpush1.msra.mxu0 0.0
      %2360 = vmatprep.subr.mxu0 0.0
      %2361 = vmatpush1.msra.mxu0 0.0
      %2362 = vmatprep.subr.mxu0 0.0
      %2363 = vmatpush1.msra.mxu0 0.0
      %2364 = vmatprep.subr.mxu0 0.0
      %2365 = vmatpush1.msra.mxu0 0.0
      %2366 = vmatprep.subr.mxu0 0.0
      %2367 = vmatpush1.msra.mxu0 0.0
      %2368 = vmatprep.subr.mxu0 0.0
      %2369 = vmatpush1.msra.mxu0 0.0
      %2370 = vmatprep.subr.mxu0 0.0
      %2371 = vmatpush1.msra.mxu0 0.0
      %2372 = vmatprep.subr.mxu0 0.0
      %2373 = vmatpush1.msra.mxu0 0.0
      %2374 = vmatprep.subr.mxu0 0.0
      %2375 = vmatpush1.msra.mxu0 0.0
      %2376 = vmatprep.subr.mxu0 0.0
      %2377 = vmatpush1.msra.mxu0 0.0
      %2378 = vmatprep.subr.mxu0 0.0
      %2379 = vmatpush1.msra.mxu0 0.0
      %2380 = vmatprep.subr.mxu0 0.0
      %2381 = vmatpush1.msra.mxu0 0.0
      %2382 = vmatprep.subr.mxu0 0.0
      %2383 = vmatpush1.msra.mxu0 0.0
      %2384 = vmatprep.subr.mxu0 0.0
      %2385 = vmatpush1.msra.mxu0 0.0
      %2386 = vmatprep.mubr.f32.mxu0 0.0
      %2387 = vmatmul.mubr.f32.gmra.mrb[0].mxu0 %v1847
      %v2388 = vpop.f32.mrb[0].mxu0
      %v2389 = vadd.f32 %v2320, %v2388
      %v2390 = vpop.f32.mrb[0].mxu0
      %2391 = vmatprep.mubr.f32.mxu0 0.0
      %2392 = vmatmul.mubr.f32.gmra.mrb[0].mxu0 %v1848
      %v2393 = vpop.f32.mrb[0].mxu0
      %v2394 = vadd.f32 %v2320, %v2393
      %v2395 = vpop.f32.mrb[0].mxu0
      %2396 = vdwg.mxu0
      %v2397 = vtanh.pop %v2389
      %v2398 = vtanh.pop %v2394
      %v2399 = vadd.f32 %v2397, %v2398
      %v2400 = vrot.slane %v2399, 4
      %v2401 = vadd.f32 %v2399, %v2400
      %v2402 = vrot.slane %v2401, 2
      %v2403 = vadd.f32 %v2401, %v2402
      %v2404 = vrot.slane %v2403, 1
      %v2405 = vadd.f32 %v2403, %v2404
      %v2406 = vrcp.pop 16.0
      %v2407 = vmul.f32 %v2405, %v2406
      %v2408 = vld [vmem:[%s18] sm:$0x1]
      %v2409 = vmul.f32 %v2407, %v2408
      %vm2410 = vcmask 1040384
      %v2411 = vsel %vm2410, %v2409, 0.0
      %2412 = vadd.xlane.f32.xlu0 %v2411
      %v2413 = vpop.xlane.xlu0 %2412
      %2414 = vmatprep.subr.mxu0 0.0
      %2415 = vmatpush1.msra.mxu0 %v2299
      %2416 = vmatprep.subr.mxu0 0.0
      %2417 = vmatpush1.msra.mxu0 %v2300
      %2418 = vmatprep.subr.mxu0 0.0
      %2419 = vmatpush1.msra.mxu0 %v2301
      %2420 = vmatprep.subr.mxu0 0.0
      %2421 = vmatpush1.msra.mxu0 %v2302
      %2422 = vmatprep.subr.mxu0 0.0
      %2423 = vmatpush1.msra.mxu0 %v2303
      %2424 = vmatprep.subr.mxu0 0.0
      %2425 = vmatpush1.msra.mxu0 %v2304
      %2426 = vmatprep.subr.mxu0 0.0
      %2427 = vmatpush1.msra.mxu0 %v2305
      %2428 = vmatprep.subr.mxu0 0.0
      %2429 = vmatpush1.msra.mxu0 %v2306
      %2430 = vmatprep.subr.mxu0 0.0
      %2431 = vmatpush1.msra.mxu0 %v2307
      %2432 = vmatprep.subr.mxu0 0.0
      %2433 = vmatpush1.msra.mxu0 %v2308
      %2434 = vmatprep.subr.mxu0 0.0
      %2435 = vmatpush1.msra.mxu0 %v2309
      %2436 = vmatprep.subr.mxu0 0.0
      %2437 = vmatpush1.msra.mxu0 %v2310
      %2438 = vmatprep.subr.mxu0 0.0
      %2439 = vmatpush1.msra.mxu0 %v2311
      %2440 = vmatprep.subr.mxu0 0.0
      %2441 = vmatpush1.msra.mxu0 %v2312
      %2442 = vmatprep.subr.mxu0 0.0
      %2443 = vmatpush1.msra.mxu0 %v2313
      %2444 = vmatprep.subr.mxu0 0.0
      %2445 = vmatpush1.msra.mxu0 %v2314
      %2446 = vmatprep.subr.mxu0 0.0
      %2447 = vmatpush1.msra.mxu0 0.0
      %2448 = vmatprep.subr.mxu0 0.0
      %2449 = vmatpush1.msra.mxu0 0.0
      %2450 = vmatprep.subr.mxu0 0.0
      %2451 = vmatpush1.msra.mxu0 0.0
      %2452 = vmatprep.subr.mxu0 0.0
      %2453 = vmatpush1.msra.mxu0 0.0
      %2454 = vmatprep.subr.mxu0 0.0
      %2455 = vmatpush1.msra.mxu0 0.0
      %2456 = vmatprep.subr.mxu0 0.0
      %2457 = vmatpush1.msra.mxu0 0.0
      %2458 = vmatprep.subr.mxu0 0.0
      %2459 = vmatpush1.msra.mxu0 0.0
      %2460 = vmatprep.subr.mxu0 0.0
      %2461 = vmatpush1.msra.mxu0 0.0
      %2462 = vmatprep.subr.mxu0 0.0
      %2463 = vmatpush1.msra.mxu0 0.0
      %2464 = vmatprep.subr.mxu0 0.0
      %2465 = vmatpush1.msra.mxu0 0.0
      %2466 = vmatprep.subr.mxu0 0.0
      %2467 = vmatpush1.msra.mxu0 0.0
      %2468 = vmatprep.subr.mxu0 0.0
      %2469 = vmatpush1.msra.mxu0 0.0
      %2470 = vmatprep.subr.mxu0 0.0
      %2471 = vmatpush1.msra.mxu0 0.0
      %2472 = vmatprep.subr.mxu0 0.0
      %2473 = vmatpush1.msra.mxu0 0.0
      %2474 = vmatprep.subr.mxu0 0.0
      %2475 = vmatpush1.msra.mxu0 0.0
      %2476 = vmatprep.subr.mxu0 0.0
      %2477 = vmatpush1.msra.mxu0 0.0
      %2478 = vmatprep.mubr.f32.mxu0 0.0
      %2479 = vmatmul.mubr.f32.gmra.mrb[0].mxu0 %v2297
      %v2480 = vpop.f32.mrb[0].mxu0
      %v2481 = vadd.f32 %v2320, %v2480
      %v2482 = vpop.f32.mrb[0].mxu0
      %2483 = vmatprep.mubr.f32.mxu0 0.0
      %2484 = vmatmul.mubr.f32.gmra.mrb[0].mxu0 %v2298
      %v2485 = vpop.f32.mrb[0].mxu0
      %v2486 = vadd.f32 %v2320, %v2485
      %v2487 = vpop.f32.mrb[0].mxu0
      %2488 = vdwg.mxu0
      %v2489 = vtanh.pop %v2481
      %v2490 = vtanh.pop %v2486
      %v2491 = vadd.f32 %v2489, %v2490
      %v2492 = vrot.slane %v2491, 4
      %v2493 = vadd.f32 %v2491, %v2492
      %v2494 = vrot.slane %v2493, 2
      %v2495 = vadd.f32 %v2493, %v2494
      %v2496 = vrot.slane %v2495, 1
      %v2497 = vadd.f32 %v2495, %v2496
      %v2498 = vmul.f32 %v2497, %v2406
      %v2499 = vmul.f32 %v2498, %v2408
      %v2500 = vsel %vm2410, %v2499, 0.0
      %2501 = vadd.xlane.f32.xlu0 %v2500
      %v2502 = vpop.xlane.xlu0 %2501
      %v2503 = vmax.f32 %v2413, %v2502
      %v2504 = vsub.f32 %v2413, %v2503
      %v2505 = vmul.f32 %v2504, 1.442695
      %v2506 = vpow.pop %v2505
      %v2507 = vsub.f32 %v2502, %v2503
      %v2508 = vmul.f32 %v2507, 1.442695
      %v2509 = vpow.pop %v2508
      %v2510 = vadd.f32 %v2506, %v2509
      %v2511 = vrcp.pop %v2510
      %v2512 = vmul.f32 %v2506, %v2511
      %v2513 = vlaneseq
      %v2514 = vshrl.u32 %v2513, 7
      %v2515 = vsub.s32 0, %v2514
      %v2516 = vrot.slane %v2512, %v2515
      %v2517 = vmul.f32 %v2516, %v1847
      %v2518 = vmul.f32 %v2516, %v1848
      %v2519 = vmul.f32 %v2509, %v2511
      %v2520 = vlaneseq
      %v2521 = vshrl.u32 %v2520, 7
      %v2522 = vsub.s32 0, %v2521
      %v2523 = vrot.slane %v2519, %v2522
      %v2524 = vmul.f32 %v2523, %v2297
      %v2525 = vmul.f32 %v2523, %v2298
      %v2526 = vadd.f32 %v2517, %v2524
      %v2527 = vadd.f32 %v2518, %v2525
      %v2528 = vld [vmem:[%s19] sm:$0xff]
      %v2529 = vld [vmem:[%s19 + $0x8] sm:$0xff]
      %v2530 = vld [vmem:[%s19 + $0x10] sm:$0xff]
      %v2531 = vld [vmem:[%s19 + $0x18] sm:$0xff]
      %v2532 = vld [vmem:[%s19 + $0x20] sm:$0xff]
      %v2533 = vld [vmem:[%s19 + $0x28] sm:$0xff]
      %v2534 = vld [vmem:[%s19 + $0x30] sm:$0xff]
      %v2535 = vld [vmem:[%s19 + $0x38] sm:$0xff]
      %v2536 = vld [vmem:[%s19 + $0x40] sm:$0xff]
      %v2537 = vld [vmem:[%s19 + $0x48] sm:$0xff]
      %v2538 = vld [vmem:[%s19 + $0x50] sm:$0xff]
      %v2539 = vld [vmem:[%s19 + $0x58] sm:$0xff]
      %v2540 = vld [vmem:[%s19 + $0x60] sm:$0xff]
      %v2541 = vld [vmem:[%s19 + $0x68] sm:$0xff]
      %v2542 = vld [vmem:[%s19 + $0x70] sm:$0xff]
      %v2543 = vld [vmem:[%s19 + $0x78] sm:$0xff]
      %v2544 = vld [vmem:[%s20] sm:$0x1]
      %v2546 = vlaneseq
      %v2547 = vshrl.u32 %v2546, 7
      %v2548 = vsub.s32 0, %v2547
      %v2549 = vrot.slane %v2544, %v2548
      %2551 = vmatprep.subr.mxu0 0.0
      %2552 = vmatpush1.msra.mxu0 %v2528
      %2553 = vmatprep.subr.mxu0 0.0
      %2554 = vmatpush1.msra.mxu0 %v2529
      %2555 = vmatprep.subr.mxu0 0.0
      %2556 = vmatpush1.msra.mxu0 %v2530
      %2557 = vmatprep.subr.mxu0 0.0
      %2558 = vmatpush1.msra.mxu0 %v2531
      %2559 = vmatprep.subr.mxu0 0.0
      %2560 = vmatpush1.msra.mxu0 %v2532
      %2561 = vmatprep.subr.mxu0 0.0
      %2562 = vmatpush1.msra.mxu0 %v2533
      %2563 = vmatprep.subr.mxu0 0.0
      %2564 = vmatpush1.msra.mxu0 %v2534
      %2565 = vmatprep.subr.mxu0 0.0
      %2566 = vmatpush1.msra.mxu0 %v2535
      %2567 = vmatprep.subr.mxu0 0.0
      %2568 = vmatpush1.msra.mxu0 %v2536
      %2569 = vmatprep.subr.mxu0 0.0
      %2570 = vmatpush1.msra.mxu0 %v2537
      %2571 = vmatprep.subr.mxu0 0.0
      %2572 = vmatpush1.msra.mxu0 %v2538
      %2573 = vmatprep.subr.mxu0 0.0
      %2574 = vmatpush1.msra.mxu0 %v2539
      %2575 = vmatprep.subr.mxu0 0.0
      %2576 = vmatpush1.msra.mxu0 %v2540
      %2577 = vmatprep.subr.mxu0 0.0
      %2578 = vmatpush1.msra.mxu0 %v2541
      %2579 = vmatprep.subr.mxu0 0.0
      %2580 = vmatpush1.msra.mxu0 %v2542
      %2581 = vmatprep.subr.mxu0 0.0
      %2582 = vmatpush1.msra.mxu0 %v2543
      %2583 = vmatprep.subr.mxu0 0.0
      %2584 = vmatpush1.msra.mxu0 0.0
      %2585 = vmatprep.subr.mxu0 0.0
      %2586 = vmatpush1.msra.mxu0 0.0
      %2587 = vmatprep.subr.mxu0 0.0
      %2588 = vmatpush1.msra.mxu0 0.0
      %2589 = vmatprep.subr.mxu0 0.0
      %2590 = vmatpush1.msra.mxu0 0.0
      %2591 = vmatprep.subr.mxu0 0.0
      %2592 = vmatpush1.msra.mxu0 0.0
      %2593 = vmatprep.subr.mxu0 0.0
      %2594 = vmatpush1.msra.mxu0 0.0
      %2595 = vmatprep.subr.mxu0 0.0
      %2596 = vmatpush1.msra.mxu0 0.0
      %2597 = vmatprep.subr.mxu0 0.0
      %2598 = vmatpush1.msra.mxu0 0.0
      %2599 = vmatprep.subr.mxu0 0.0
      %2600 = vmatpush1.msra.mxu0 0.0
      %2601 = vmatprep.subr.mxu0 0.0
      %2602 = vmatpush1.msra.mxu0 0.0
      %2603 = vmatprep.subr.mxu0 0.0
      %2604 = vmatpush1.msra.mxu0 0.0
      %2605 = vmatprep.subr.mxu0 0.0
      %2606 = vmatpush1.msra.mxu0 0.0
      %2607 = vmatprep.subr.mxu0 0.0
      %2608 = vmatpush1.msra.mxu0 0.0
      %2609 = vmatprep.subr.mxu0 0.0
      %2610 = vmatpush1.msra.mxu0 0.0
      %2611 = vmatprep.subr.mxu0 0.0
      %2612 = vmatpush1.msra.mxu0 0.0
      %2613 = vmatprep.subr.mxu0 0.0
      %2614 = vmatpush1.msra.mxu0 0.0
      %2615 = vmatprep.mubr.f32.mxu0 0.0
      %2616 = vmatmul.mubr.f32.gmra.mrb[0].mxu0 %v2526
      %v2617 = vpop.f32.mrb[0].mxu0
      %v2618 = vadd.f32 %v2549, %v2617
      %v2619 = vpop.f32.mrb[0].mxu0
      %2620 = vmatprep.mubr.f32.mxu0 0.0
      %2621 = vmatmul.mubr.f32.gmra.mrb[0].mxu0 %v2527
      %v2622 = vpop.f32.mrb[0].mxu0
      %v2623 = vadd.f32 %v2549, %v2622
      %v2624 = vpop.f32.mrb[0].mxu0
      %2625 = vdwg.mxu0
      %2626 = vst [vmem:[%s796] sm:$0xff] %v2618
      %2627 = vst [vmem:[%s796 + $0x8] sm:$0xff] %v2623
      %p2628 = scmp.lt.s32.totalorder %s32, 3
      %s2629 = scalar_select %p2628, %s32, 3
      %s2630 = smul.addr %s2629, 2
      %s2631 = smul.addr %s2630, 8
      %s2632 = scalar_lea.vmem %s21, %s2631
      // Predicated region
      $region105: #{han_forward.1} parent=103 // pred_check
        %p2633 = pneg %p531
      $region106: #{han_forward.1} parent=103 // pred_check_branch
        %2635 = sbr.rel (%p2633) target = $region108
      $region107: #{han_forward.1} parent=103 // pred_region
        _
      $region108: #{han_forward.1} parent=103 // pred_fallthru
        _
    $region104: #{han_forward.1} parent=5 // pred_fallthru
      _
    %p2636 = scmp.le.s32.totalorder 2, %s27
    // Predicated region
    $region109: #{han_forward.1} parent=5 // pred_check
      %p2637 = pneg %p2636
    $region110: #{han_forward.1} parent=5 // pred_check_branch
      %2639 = sbr.rel (%p2637) target = $region112
    $region111: #{han_forward.1} parent=5 // pred_region
      %s2640 = ssub.s32 %s27, 2
      // Predicated region
      $region113: #{han_forward.1} parent=111 // pred_check
        %p2641 = pneg %p537
      $region114: #{han_forward.1} parent=111 // pred_check_branch
        %2643 = sbr.rel (%p2641) target = $region116
      $region115: #{han_forward.1} parent=111 // pred_region
        %p2644 = scmp.lt.s32.totalorder %s33, 3
        %s2645 = scalar_select %p2644, %s33, 3
        %s2646 = smul.addr %s2645, 2
        %s2647 = smul.addr %s2646, 8
        %s2648 = scalar_lea.vmem %s21, %s2647
      $region116: #{han_forward.1} parent=111 // pred_fallthru
        _
    $region112: #{han_forward.1} parent=5 // pred_fallthru
      _
  $region6: #{han_forward.1} parent=0 // loop_footer
    %s31 = sadd.s32 1, %s27
  $region7: #{han_forward.1} parent=0 // loop_footer_branch
    %26 = sbr.rel target = $region3
  $region8: #{han_forward.1} parent=0 // loop_exit
    _

</llo_original>
